<compile_context>
chip_gen: v7x
topology: tpu7x:2x2x1
jax: 0.10.0
libtpu: 0.0.40
codegen_flags: <defaults>
</compile_context>

<pallas_src>
import functools
import math

import jax
import jax.numpy as jnp
from jax.experimental import pallas as pl
from jax.experimental.pallas import tpu as pltpu

NUM_GROUPS = 32          # normalize() hard-codes GroupNorm(num_groups=32)
EPS = 1e-6


# =============================== Pallas kernel ===============================

def _attn_block_kernel(x_full_ref, x_tile_ref, gamma_ref, beta_ref,
                       cg_ref, gc_ref, wqkv_ref, bqkv_ref, wproj_ref, bproj_ref,
                       o_ref, k_s, v_s, scale_s, shift_s, *, eps):
    """Fused AttnBlock, channel-major.

    x_full_ref : (1, C, HW) fp32 - whole batch element, resident across qi.
    x_tile_ref : (1, C, tq) fp32 - current query tile (BlockSpec-sliced).
    o_ref      : (1, C, tq) fp32 - output tile (lane-dense last dim).
    k_s / v_s  : (C, HW) bf16 VMEM scratch, written at qi == 0, reused after.
    scale_s / shift_s : (C, 1) fp32 fused GroupNorm affine (a*x + b form).
    """
    qi = pl.program_id(1)

    # ---- once per batch element: GroupNorm(32) stats + K/V projections ------
    @pl.when(qi == 0)
    def _():
        x = x_full_ref[0]                                      # (C, HW) fp32
        # Group stats via (G,C)/(C,G) selector pair; 1/(HW*gsize) folded in cg.
        csum = jnp.sum(x, axis=1, keepdims=True)               # (C, 1)
        mean = jnp.dot(gc_ref[...],
                       jnp.dot(cg_ref[...], csum,
                               preferred_element_type=jnp.float32),
                       preferred_element_type=jnp.float32)     # (C, 1)
        xc = x - mean
        csq = jnp.sum(xc * xc, axis=1, keepdims=True)          # (C, 1)
        var = jnp.dot(gc_ref[...],
                      jnp.dot(cg_ref[...], csq,
                              preferred_element_type=jnp.float32),
                      preferred_element_type=jnp.float32)      # (C, 1), >= 0
        inv = jax.lax.rsqrt(var + eps)
        a = inv * gamma_ref[...]                               # (C, 1)
        b = beta_ref[...] - mean * a                           # (C, 1)
        scale_s[...] = a
        shift_s[...] = b

        h = (x * a + b).astype(jnp.bfloat16)                   # (C, HW) bf16
        k_s[...] = (jnp.dot(wqkv_ref[1], h,
                            preferred_element_type=jnp.float32)
                    + bqkv_ref[1]).astype(jnp.bfloat16)
        v_s[...] = (jnp.dot(wqkv_ref[2], h,
                            preferred_element_type=jnp.float32)
                    + bqkv_ref[2]).astype(jnp.bfloat16)

    # ---- per query tile: Q projection, scores, softmax, PV, proj, residual --
    x_t = x_tile_ref[0]                                        # (C, tq) fp32
    h_t = (x_t * scale_s[...] + shift_s[...]).astype(jnp.bfloat16)
    # C^-0.5 is already folded into the q weights/bias on the host.
    q_t = (jnp.dot(wqkv_ref[0], h_t, preferred_element_type=jnp.float32)
           + bqkv_ref[0]).astype(jnp.bfloat16)                 # (C, tq)

    # s[m, n] = sum_c k[c, m] * q[c, n]  -> keys along rows, queries on lanes.
    s = jax.lax.dot_general(k_s[...], q_t, (((0,), (0,)), ((), ())),
                            preferred_element_type=jnp.float32)  # (HW, tq)
    m = jnp.max(s, axis=0, keepdims=True)                      # (1, tq)
    p = jnp.exp(s - m)                                         # fp32 exp (v5e)
    l = jnp.sum(p, axis=0, keepdims=True)                      # (1, tq)

    # Unnormalized PV, then normalize the (C, tq) result (cheaper than on p).
    o_u = jnp.dot(v_s[...], p.astype(jnp.bfloat16),
                  preferred_element_type=jnp.float32)          # (C, tq)
    o_n = o_u * pl.reciprocal(l, approx=True)

    y = jnp.dot(wproj_ref[...], o_n.astype(jnp.bfloat16),
                preferred_element_type=jnp.float32) + bproj_ref[...]
    o_ref[0] = x_t + y                                         # residual add


# ================================ wrapper ====================================

def attn_block_forward(params, x_nchw, *, tile_q=128):
    """AttnBlock forward. x_nchw: (B, C, H, W) fp32, C % 32 == 0."""
    B, C, H, W = x_nchw.shape
    assert C % NUM_GROUPS == 0
    HW = H * W
    x_cm = x_nchw.reshape(B, C, HW)     # free view - no NCHW<->NHWC transpose

    tq = tile_q if HW % tile_q == 0 else HW   # query tile (lane-dense output)
    nq = HW // tq

    scale = float(C) ** (-0.5)

    def w2d(p):
        return p['w'].reshape(C, C)     # conv1x1 (Cout,Cin,1,1) -> (Cout,Cin)

    # Stacked q/k/v weights; attention scale folded into the q slice.
    wqkv = jnp.stack([w2d(params['q']) * scale, w2d(params['k']),
                      w2d(params['v'])]).astype(jnp.bfloat16)      # (3, C, C)
    bqkv = jnp.stack([params['q']['b'] * scale, params['k']['b'],
                      params['v']['b']]).reshape(3, C, 1)          # (3, C, 1)
    wproj = w2d(params['proj']).astype(jnp.bfloat16)               # (C, C)
    bproj = params['proj']['b'].reshape(C, 1)
    gamma = params['norm']['gamma'].reshape(C, 1)
    beta = params['norm']['beta'].reshape(C, 1)

    # Group selector pair: cg (G, C) holds 1/(HW*gsize) inside each group row;
    # gc (C, G) broadcasts the per-group value back to channels.
    gsize = C // NUM_GROUPS
    gids = jnp.arange(C) // gsize
    cg = ((jnp.arange(NUM_GROUPS)[:, None] == gids[None, :])
          .astype(jnp.float32) / float(HW * gsize))                # (G, C)
    gc = (gids[:, None] == jnp.arange(NUM_GROUPS)[None, :]).astype(jnp.float32)

    kernel = functools.partial(_attn_block_kernel, eps=EPS)

    def const(shape):
        # Constant index map -> fetched once.  (Single-buffering these via
        # pipeline_mode=pl.Buffered(1) would save a little VMEM at large C.)
        return pl.BlockSpec(shape, lambda b, q, _s=shape: (0,) * len(_s))

    weight_bytes = (wqkv.size * 2 + wproj.size * 2
                    + (bqkv.size + bproj.size + gamma.size + beta.size
                       + cg.size + gc.size) * 4)
    est_vmem = (2 * C * HW * 4          # resident x block (double-buffered)
                + 4 * C * tq * 4        # x tile + out tile (double-buffered)
                + 2 * C * HW * 2        # k/v scratch (bf16)
                + 2 * weight_bytes      # weights (double-buffered)
                + 4 * HW * tq * 4       # score / softmax temporaries
                + 2 * C * HW * 6)       # GroupNorm temporaries at qi == 0
    vmem_limit = int(min(100 * 2 ** 20, max(32 * 2 ** 20, 2 * est_vmem)))

    cost = pl.CostEstimate(
        flops=int(B * (8 * C * C * HW + 4 * C * HW * HW)),
        transcendentals=int(B * HW * HW),
        bytes_accessed=int(3 * B * C * HW * 4 + weight_bytes))

    out_cm = pl.pallas_call(
        kernel,
        out_shape=jax.ShapeDtypeStruct((B, C, HW), jnp.float32),
        grid=(B, nq),
        in_specs=[
            pl.BlockSpec((1, C, HW), lambda b, q: (b, 0, 0)),   # x, full/resident
            pl.BlockSpec((1, C, tq), lambda b, q: (b, 0, q)),   # x, query tile
            const((C, 1)),             # gamma
            const((C, 1)),             # beta
            const((NUM_GROUPS, C)),    # cg
            const((C, NUM_GROUPS)),    # gc
            const((3, C, C)),          # stacked q/k/v weights (bf16)
            const((3, C, 1)),          # stacked q/k/v biases (f32)
            const((C, C)),             # proj weight (bf16)
            const((C, 1)),             # proj bias (f32)
        ],
        out_specs=pl.BlockSpec((1, C, tq), lambda b, q: (b, 0, q)),
        scratch_shapes=[pltpu.VMEM((C, HW), jnp.bfloat16),   # K
                        pltpu.VMEM((C, HW), jnp.bfloat16),   # V
                        pltpu.VMEM((C, 1), jnp.float32),     # GN scale
                        pltpu.VMEM((C, 1), jnp.float32)],    # GN shift
        compiler_params=pltpu.CompilerParams(
            # batch elements independent -> megacore; query tiles reuse the
            # per-batch K/V scratch so that axis must stay sequential.
            dimension_semantics=("parallel", "arbitrary"),
            vmem_limit_bytes=vmem_limit),
        cost_estimate=cost,
    )(x_cm, x_cm, gamma, beta, cg, gc, wqkv, bqkv, wproj, bproj)

    # TODO(synk): for HW so large that the (C, HW) bf16 K/V no longer fit VMEM,
    # add an online-softmax key-tiled path; not needed at diffusion-VAE sizes.
    return out_cm.reshape(B, C, H, W)


# =========================== params / reference ==============================

def init_attn_block_params(key, channels):
    keys = jax.random.split(key, 8)
    bound = 1.0 / math.sqrt(channels)

    def conv1x1_init(kw, kb):
        w = jax.random.uniform(kw, (channels, channels, 1, 1), jnp.float32,
                               -bound, bound)
        b = jax.random.uniform(kb, (channels,), jnp.float32, -bound, bound)
        return {'w': w, 'b': b}

    return {'norm': {'gamma': jnp.ones((channels,), jnp.float32),
                     'beta': jnp.zeros((channels,), jnp.float32)},
            'q': conv1x1_init(keys[0], keys[1]),
            'k': conv1x1_init(keys[2], keys[3]),
            'v': conv1x1_init(keys[4], keys[5]),
            'proj': conv1x1_init(keys[6], keys[7])}


def attn_block_reference(params, x_nchw):
    """Pure-JAX fp32 reference matching the PyTorch AttnBlock forward."""
    B, C, H, W = x_nchw.shape
    HW = H * W
    gs = C // NUM_GROUPS
    xr = x_nchw.reshape(B, NUM_GROUPS, gs, H, W)
    mean = jnp.mean(xr, axis=(2, 3, 4), keepdims=True)
    var = jnp.mean((xr - mean) ** 2, axis=(2, 3, 4), keepdims=True)
    h = ((xr - mean) / jnp.sqrt(var + EPS)).reshape(B, C, H, W)
    h = (h * params['norm']['gamma'][None, :, None, None]
         + params['norm']['beta'][None, :, None, None])

    def conv1x1(p, t):
        return (jnp.einsum('oc,bchw->bohw', p['w'].reshape(C, C), t)
                + p['b'][None, :, None, None])

    q = conv1x1(params['q'], h).reshape(B, C, HW).transpose(0, 2, 1)  # (B,HW,C)
    k = conv1x1(params['k'], h).reshape(B, C, HW)                     # (B,C,HW)
    v = conv1x1(params['v'], h).reshape(B, C, HW)                     # (B,C,HW)
    w_ = jnp.einsum('bnc,bcm->bnm', q, k) * (float(C) ** (-0.5))
    w_ = jax.nn.softmax(w_, axis=2)
    h_ = jnp.einsum('bcm,bnm->bcn', v, w_).reshape(B, C, H, W)
    h_ = conv1x1(params['proj'], h_)
    return x_nchw + h_


# ==================================== main ===================================

if __name__ == "__main__":
    key = jax.random.PRNGKey(0)
    kx, kp = jax.random.split(key)

    # GroupNorm(32) needs C % 32 == 0; C=128 keeps lanes dense and the MXU
    # contraction >=128 while staying small (16x16 spatial -> HW=256, 2 tiles).
    B, C, H, W = 2, 128, 16, 16
    x = jax.random.normal(kx, (B, C, H, W), jnp.float32)
    params = init_attn_block_params(kp, C)

    fwd = jax.jit(lambda xx: attn_block_forward(params, xx))
    out = fwd(x)
    jax.block_until_ready(out)

    assert out.shape == (B, C, H, W) and out.dtype == jnp.float32
    assert bool(jnp.all(jnp.isfinite(out)))

    ref = attn_block_reference(params, x)
    max_err = float(jnp.max(jnp.abs(out - ref)))
    # bf16 MXU operands with fp32 accumulation: loose tolerance.
    assert max_err < 5e-2, f"max abs err vs reference: {max_err}"

    print("KERNEL_OK")
</pallas_src>

<mosaic_0001>
module attributes {stable_mosaic.version = 11 : i64} {
  func.func @_attn_block_kernel(%arg0: i32, %arg1: i32, %arg2: memref<1x128x256xf32, #tpu.memory_space<vmem>>, %arg3: memref<1x128x128xf32, #tpu.memory_space<vmem>>, %arg4: memref<128x1xf32, #tpu.memory_space<vmem>>, %arg5: memref<128x1xf32, #tpu.memory_space<vmem>>, %arg6: memref<32x128xf32, #tpu.memory_space<vmem>>, %arg7: memref<128x32xf32, #tpu.memory_space<vmem>>, %arg8: memref<3x128x128xbf16, #tpu.memory_space<vmem>>, %arg9: memref<3x128x1xf32, #tpu.memory_space<vmem>>, %arg10: memref<128x128xbf16, #tpu.memory_space<vmem>>, %arg11: memref<128x1xf32, #tpu.memory_space<vmem>>, %arg12: memref<1x128x128xf32, #tpu.memory_space<vmem>>, %arg13: memref<128x256xbf16, #tpu.memory_space<vmem>>, %arg14: memref<128x256xbf16, #tpu.memory_space<vmem>>, %arg15: memref<128x1xf32, #tpu.memory_space<vmem>>, %arg16: memref<128x1xf32, #tpu.memory_space<vmem>>) attributes {dimension_semantics = [#tpu.dimension_semantics<parallel>, #tpu.dimension_semantics<arbitrary>], iteration_bounds = array<i64: 2, 2>, scalar_prefetch = 0 : i64, scratch_operands = 4 : i64, tpu.core_type = #tpu.core_type<tc>, window_params = [{transform_indices = @transform_0, window_bounds = array<i64: 1, 128, 256>}, {transform_indices = @transform_1, window_bounds = array<i64: 1, 128, 128>}, {pipeline_mode = #tpu.pipeline_mode<synchronous>, transform_indices = @transform_2, window_bounds = array<i64: 128, 1>}, {pipeline_mode = #tpu.pipeline_mode<synchronous>, transform_indices = @transform_3, window_bounds = array<i64: 128, 1>}, {pipeline_mode = #tpu.pipeline_mode<synchronous>, transform_indices = @transform_4, window_bounds = array<i64: 32, 128>}, {pipeline_mode = #tpu.pipeline_mode<synchronous>, transform_indices = @transform_5, window_bounds = array<i64: 128, 32>}, {pipeline_mode = #tpu.pipeline_mode<synchronous>, transform_indices = @transform_6, window_bounds = array<i64: 3, 128, 128>}, {pipeline_mode = #tpu.pipeline_mode<synchronous>, transform_indices = @transform_7, window_bounds = array<i64: 3, 128, 1>}, {pipeline_mode = #tpu.pipeline_mode<synchronous>, transform_indices = @transform_8, window_bounds = array<i64: 128, 128>}, {pipeline_mode = #tpu.pipeline_mode<synchronous>, transform_indices = @transform_9, window_bounds = array<i64: 128, 1>}, {transform_indices = @transform_10, window_bounds = array<i64: 1, 128, 128>}]} {
    %c0_i32 = arith.constant 0 : i32
    %0 = arith.cmpi eq, %arg1, %c0_i32 : i32
    %1 = arith.extui %0 : i1 to i32
    %c0_i32_0 = arith.constant 0 : i32
    %2 = arith.cmpi ne, %1, %c0_i32_0 : i32
    scf.if %2 {
      %c0_29 = arith.constant 0 : index
      %c0_30 = arith.constant 0 : index
      %c0_31 = arith.constant 0 : index
      %45 = vector.load %arg2[%c0_29, %c0_30, %c0_31] : memref<1x128x256xf32, #tpu.memory_space<vmem>>, vector<1x128x256xf32>
      %46 = vector.shape_cast %45 : vector<1x128x256xf32> to vector<128x256xf32>
      %cst_32 = arith.constant dense<0.000000e+00> : vector<128xf32>
      %47 = vector.multi_reduction <add>, %46, %cst_32 [1] : vector<128x256xf32> to vector<128xf32>
      %48 = vector.shape_cast %47 : vector<128xf32> to vector<128x1xf32>
      %c0_33 = arith.constant 0 : index
      %c0_34 = arith.constant 0 : index
      %49 = vector.load %arg7[%c0_33, %c0_34] : memref<128x32xf32, #tpu.memory_space<vmem>>, vector<128x32xf32>
      %c0_35 = arith.constant 0 : index
      %c0_36 = arith.constant 0 : index
      %50 = vector.load %arg6[%c0_35, %c0_36] : memref<32x128xf32, #tpu.memory_space<vmem>>, vector<32x128xf32>
      %cst_37 = arith.constant dense<0.000000e+00> : vector<32x1xf32>
      %51 = tpu.matmul %50, %48, %cst_37 {dimension_numbers = #tpu.dot_dimension_numbers<[1], [0], [0], [1], [0, 0, 1, 1], [], []>} : vector<32x128xf32>, vector<128x1xf32>, vector<32x1xf32> -> vector<32x1xf32>
      %cst_38 = arith.constant dense<0.000000e+00> : vector<128x1xf32>
      %52 = tpu.matmul %49, %51, %cst_38 {dimension_numbers = #tpu.dot_dimension_numbers<[1], [0], [0], [1], [0, 0, 1, 1], [], []>} : vector<128x32xf32>, vector<32x1xf32>, vector<128x1xf32> -> vector<128x1xf32>
      %53 = vector.broadcast %52 : vector<128x1xf32> to vector<128x256xf32>
      %54 = arith.subf %46, %53 : vector<128x256xf32>
      %55 = arith.mulf %54, %54 : vector<128x256xf32>
      %cst_39 = arith.constant dense<0.000000e+00> : vector<128xf32>
      %56 = vector.multi_reduction <add>, %55, %cst_39 [1] : vector<128x256xf32> to vector<128xf32>
      %57 = vector.shape_cast %56 : vector<128xf32> to vector<128x1xf32>
      %c0_40 = arith.constant 0 : index
      %c0_41 = arith.constant 0 : index
      %58 = vector.load %arg7[%c0_40, %c0_41] : memref<128x32xf32, #tpu.memory_space<vmem>>, vector<128x32xf32>
      %c0_42 = arith.constant 0 : index
      %c0_43 = arith.constant 0 : index
      %59 = vector.load %arg6[%c0_42, %c0_43] : memref<32x128xf32, #tpu.memory_space<vmem>>, vector<32x128xf32>
      %cst_44 = arith.constant dense<0.000000e+00> : vector<32x1xf32>
      %60 = tpu.matmul %59, %57, %cst_44 {dimension_numbers = #tpu.dot_dimension_numbers<[1], [0], [0], [1], [0, 0, 1, 1], [], []>} : vector<32x128xf32>, vector<128x1xf32>, vector<32x1xf32> -> vector<32x1xf32>
      %cst_45 = arith.constant dense<0.000000e+00> : vector<128x1xf32>
      %61 = tpu.matmul %58, %60, %cst_45 {dimension_numbers = #tpu.dot_dimension_numbers<[1], [0], [0], [1], [0, 0, 1, 1], [], []>} : vector<128x32xf32>, vector<32x1xf32>, vector<128x1xf32> -> vector<128x1xf32>
      %cst_46 = arith.constant 9.99999997E-7 : f32
      %62 = vector.broadcast %cst_46 : f32 to vector<128x1xf32>
      %63 = arith.addf %61, %62 : vector<128x1xf32>
      %64 = math.rsqrt %63 : vector<128x1xf32>
      %c0_47 = arith.constant 0 : index
      %c0_48 = arith.constant 0 : index
      %65 = vector.load %arg4[%c0_47, %c0_48] : memref<128x1xf32, #tpu.memory_space<vmem>>, vector<128x1xf32>
      %66 = arith.mulf %64, %65 : vector<128x1xf32>
      %c0_49 = arith.constant 0 : index
      %c0_50 = arith.constant 0 : index
      %67 = vector.load %arg5[%c0_49, %c0_50] : memref<128x1xf32, #tpu.memory_space<vmem>>, vector<128x1xf32>
      %68 = arith.mulf %52, %66 : vector<128x1xf32>
      %69 = arith.subf %67, %68 : vector<128x1xf32>
      %c0_51 = arith.constant 0 : index
      %c0_52 = arith.constant 0 : index
      %70 = vector.load %arg15[%c0_51, %c0_52] : memref<128x1xf32, #tpu.memory_space<vmem>>, vector<128x1xf32>
      tpu.vector_store %arg15[%c0_51, %c0_52], %66 {strides = array<i32>} : memref<128x1xf32, #tpu.memory_space<vmem>>, vector<128x1xf32>,
      %c0_53 = arith.constant 0 : index
      %c0_54 = arith.constant 0 : index
      %71 = vector.load %arg16[%c0_53, %c0_54] : memref<128x1xf32, #tpu.memory_space<vmem>>, vector<128x1xf32>
      tpu.vector_store %arg16[%c0_53, %c0_54], %69 {strides = array<i32>} : memref<128x1xf32, #tpu.memory_space<vmem>>, vector<128x1xf32>,
      %72 = vector.broadcast %66 : vector<128x1xf32> to vector<128x256xf32>
      %73 = arith.mulf %46, %72 : vector<128x256xf32>
      %74 = vector.broadcast %69 : vector<128x1xf32> to vector<128x256xf32>
      %75 = arith.addf %73, %74 : vector<128x256xf32>
      %76 = arith.truncf %75 : vector<128x256xf32> to vector<128x256xbf16>
      %c1 = arith.constant 1 : index
      %c0_55 = arith.constant 0 : index
      %c0_56 = arith.constant 0 : index
      %77 = vector.load %arg8[%c1, %c0_55, %c0_56] : memref<3x128x128xbf16, #tpu.memory_space<vmem>>, vector<1x128x128xbf16>
      %78 = vector.shape_cast %77 : vector<1x128x128xbf16> to vector<128x128xbf16>
      %cst_57 = arith.constant dense<0.000000e+00> : vector<128x256xf32>
      %79 = tpu.matmul %78, %76, %cst_57 {dimension_numbers = #tpu.dot_dimension_numbers<[1], [0], [0], [1], [0, 0, 1, 1], [], []>} : vector<128x128xbf16>, vector<128x256xbf16>, vector<128x256xf32> -> vector<128x256xf32>
      %c1_58 = arith.constant 1 : index
      %c0_59 = arith.constant 0 : index
      %c0_60 = arith.constant 0 : index
      %80 = vector.load %arg9[%c1_58, %c0_59, %c0_60] : memref<3x128x1xf32, #tpu.memory_space<vmem>>, vector<1x128x1xf32>
      %81 = vector.shape_cast %80 : vector<1x128x1xf32> to vector<128x1xf32>
      %82 = vector.broadcast %81 : vector<128x1xf32> to vector<128x256xf32>
      %83 = arith.addf %79, %82 : vector<128x256xf32>
      %84 = arith.truncf %83 : vector<128x256xf32> to vector<128x256xbf16>
      %c0_61 = arith.constant 0 : index
      %c0_62 = arith.constant 0 : index
      %85 = vector.load %arg13[%c0_61, %c0_62] : memref<128x256xbf16, #tpu.memory_space<vmem>>, vector<128x256xbf16>
      tpu.vector_store %arg13[%c0_61, %c0_62], %84 {strides = array<i32>} : memref<128x256xbf16, #tpu.memory_space<vmem>>, vector<128x256xbf16>,
      %c2 = arith.constant 2 : index
      %c0_63 = arith.constant 0 : index
      %c0_64 = arith.constant 0 : index
      %86 = vector.load %arg8[%c2, %c0_63, %c0_64] : memref<3x128x128xbf16, #tpu.memory_space<vmem>>, vector<1x128x128xbf16>
      %87 = vector.shape_cast %86 : vector<1x128x128xbf16> to vector<128x128xbf16>
      %cst_65 = arith.constant dense<0.000000e+00> : vector<128x256xf32>
      %88 = tpu.matmul %87, %76, %cst_65 {dimension_numbers = #tpu.dot_dimension_numbers<[1], [0], [0], [1], [0, 0, 1, 1], [], []>} : vector<128x128xbf16>, vector<128x256xbf16>, vector<128x256xf32> -> vector<128x256xf32>
      %c2_66 = arith.constant 2 : index
      %c0_67 = arith.constant 0 : index
      %c0_68 = arith.constant 0 : index
      %89 = vector.load %arg9[%c2_66, %c0_67, %c0_68] : memref<3x128x1xf32, #tpu.memory_space<vmem>>, vector<1x128x1xf32>
      %90 = vector.shape_cast %89 : vector<1x128x1xf32> to vector<128x1xf32>
      %91 = vector.broadcast %90 : vector<128x1xf32> to vector<128x256xf32>
      %92 = arith.addf %88, %91 : vector<128x256xf32>
      %93 = arith.truncf %92 : vector<128x256xf32> to vector<128x256xbf16>
      %c0_69 = arith.constant 0 : index
      %c0_70 = arith.constant 0 : index
      %94 = vector.load %arg14[%c0_69, %c0_70] : memref<128x256xbf16, #tpu.memory_space<vmem>>, vector<128x256xbf16>
      tpu.vector_store %arg14[%c0_69, %c0_70], %93 {strides = array<i32>} : memref<128x256xbf16, #tpu.memory_space<vmem>>, vector<128x256xbf16>,
    } else {
    }
    %c0 = arith.constant 0 : index
    %c0_1 = arith.constant 0 : index
    %c0_2 = arith.constant 0 : index
    %3 = vector.load %arg3[%c0, %c0_1, %c0_2] : memref<1x128x128xf32, #tpu.memory_space<vmem>>, vector<1x128x128xf32>
    %4 = vector.shape_cast %3 : vector<1x128x128xf32> to vector<128x128xf32>
    %c0_3 = arith.constant 0 : index
    %c0_4 = arith.constant 0 : index
    %5 = vector.load %arg15[%c0_3, %c0_4] : memref<128x1xf32, #tpu.memory_space<vmem>>, vector<128x1xf32>
    %6 = vector.broadcast %5 : vector<128x1xf32> to vector<128x128xf32>
    %7 = arith.mulf %4, %6 : vector<128x128xf32>
    %c0_5 = arith.constant 0 : index
    %c0_6 = arith.constant 0 : index
    %8 = vector.load %arg16[%c0_5, %c0_6] : memref<128x1xf32, #tpu.memory_space<vmem>>, vector<128x1xf32>
    %9 = vector.broadcast %8 : vector<128x1xf32> to vector<128x128xf32>
    %10 = arith.addf %7, %9 : vector<128x128xf32>
    %11 = arith.truncf %10 : vector<128x128xf32> to vector<128x128xbf16>
    %c0_7 = arith.constant 0 : index
    %c0_8 = arith.constant 0 : index
    %c0_9 = arith.constant 0 : index
    %12 = vector.load %arg8[%c0_7, %c0_8, %c0_9] : memref<3x128x128xbf16, #tpu.memory_space<vmem>>, vector<1x128x128xbf16>
    %13 = vector.shape_cast %12 : vector<1x128x128xbf16> to vector<128x128xbf16>
    %cst = arith.constant dense<0.000000e+00> : vector<128x128xf32>
    %14 = tpu.matmul %13, %11, %cst {dimension_numbers = #tpu.dot_dimension_numbers<[1], [0], [0], [1], [0, 0, 1, 1], [], []>} : vector<128x128xbf16>, vector<128x128xbf16>, vector<128x128xf32> -> vector<128x128xf32>
    %c0_10 = arith.constant 0 : index
    %c0_11 = arith.constant 0 : index
    %c0_12 = arith.constant 0 : index
    %15 = vector.load %arg9[%c0_10, %c0_11, %c0_12] : memref<3x128x1xf32, #tpu.memory_space<vmem>>, vector<1x128x1xf32>
    %16 = vector.shape_cast %15 : vector<1x128x1xf32> to vector<128x1xf32>
    %17 = vector.broadcast %16 : vector<128x1xf32> to vector<128x128xf32>
    %18 = arith.addf %14, %17 : vector<128x128xf32>
    %19 = arith.truncf %18 : vector<128x128xf32> to vector<128x128xbf16>
    %c0_13 = arith.constant 0 : index
    %c0_14 = arith.constant 0 : index
    %20 = vector.load %arg13[%c0_13, %c0_14] : memref<128x256xbf16, #tpu.memory_space<vmem>>, vector<128x256xbf16>
    %cst_15 = arith.constant dense<0.000000e+00> : vector<256x128xf32>
    %21 = tpu.matmul %20, %19, %cst_15 {dimension_numbers = #tpu.dot_dimension_numbers<[0], [0], [1], [1], [0, 1, 1, 1], [], []>} : vector<128x256xbf16>, vector<128x128xbf16>, vector<256x128xf32> -> vector<256x128xf32>
    %cst_16 = arith.constant dense<0xFF800000> : vector<128xf32>
    %22 = vector.multi_reduction <maximumf>, %21, %cst_16 [0] : vector<256x128xf32> to vector<128xf32>
    %23 = vector.shape_cast %22 : vector<128xf32> to vector<1x128xf32>
    %24 = vector.broadcast %23 : vector<1x128xf32> to vector<256x128xf32>
    %25 = arith.subf %21, %24 : vector<256x128xf32>
    %26 = math.exp %25 : vector<256x128xf32>
    %cst_17 = arith.constant dense<0.000000e+00> : vector<128xf32>
    %27 = vector.multi_reduction <add>, %26, %cst_17 [0] : vector<256x128xf32> to vector<128xf32>
    %28 = vector.shape_cast %27 : vector<128xf32> to vector<1x128xf32>
    %c0_18 = arith.constant 0 : index
    %c0_19 = arith.constant 0 : index
    %29 = vector.load %arg14[%c0_18, %c0_19] : memref<128x256xbf16, #tpu.memory_space<vmem>>, vector<128x256xbf16>
    %30 = arith.truncf %26 : vector<256x128xf32> to vector<256x128xbf16>
    %cst_20 = arith.constant dense<0.000000e+00> : vector<128x128xf32>
    %31 = tpu.matmul %29, %30, %cst_20 {dimension_numbers = #tpu.dot_dimension_numbers<[1], [0], [0], [1], [0, 0, 1, 1], [], []>} : vector<128x256xbf16>, vector<256x128xbf16>, vector<128x128xf32> -> vector<128x128xf32>
    %32 = tpu.reciprocal %28 {approx = true} : vector<1x128xf32> -> vector<1x128xf32>
    %33 = vector.broadcast %32 : vector<1x128xf32> to vector<128x128xf32>
    %34 = arith.mulf %31, %33 : vector<128x128xf32>
    %c0_21 = arith.constant 0 : index
    %c0_22 = arith.constant 0 : index
    %35 = vector.load %arg10[%c0_21, %c0_22] : memref<128x128xbf16, #tpu.memory_space<vmem>>, vector<128x128xbf16>
    %36 = arith.truncf %34 : vector<128x128xf32> to vector<128x128xbf16>
    %cst_23 = arith.constant dense<0.000000e+00> : vector<128x128xf32>
    %37 = tpu.matmul %35, %36, %cst_23 {dimension_numbers = #tpu.dot_dimension_numbers<[1], [0], [0], [1], [0, 0, 1, 1], [], []>} : vector<128x128xbf16>, vector<128x128xbf16>, vector<128x128xf32> -> vector<128x128xf32>
    %c0_24 = arith.constant 0 : index
    %c0_25 = arith.constant 0 : index
    %38 = vector.load %arg11[%c0_24, %c0_25] : memref<128x1xf32, #tpu.memory_space<vmem>>, vector<128x1xf32>
    %39 = vector.broadcast %38 : vector<128x1xf32> to vector<128x128xf32>
    %40 = arith.addf %37, %39 : vector<128x128xf32>
    %41 = arith.addf %4, %40 : vector<128x128xf32>
    %c0_26 = arith.constant 0 : index
    %c0_27 = arith.constant 0 : index
    %c0_28 = arith.constant 0 : index
    %42 = vector.load %arg12[%c0_26, %c0_27, %c0_28] : memref<1x128x128xf32, #tpu.memory_space<vmem>>, vector<1x128x128xf32>
    %43 = vector.shape_cast %42 : vector<1x128x128xf32> to vector<128x128xf32>
    %44 = vector.shape_cast %41 : vector<128x128xf32> to vector<1x128x128xf32>
    tpu.vector_store %arg12[%c0_26, %c0_27, %c0_28], %44 {strides = array<i32>} : memref<1x128x128xf32, #tpu.memory_space<vmem>>, vector<1x128x128xf32>,
    return
  }
  func.func @transform_0(%arg0: i32, %arg1: i32) -> (i32, i32, i32) {
    %c0_i32 = arith.constant 0 : i32
    %c0_i32_0 = arith.constant 0 : i32
    %c0_i32_1 = arith.constant 0 : i32
    return %arg0, %c0_i32, %c0_i32_0 : i32, i32, i32
  }
  func.func @transform_1(%arg0: i32, %arg1: i32) -> (i32, i32, i32) {
    %c0_i32 = arith.constant 0 : i32
    %c0_i32_0 = arith.constant 0 : i32
    return %arg0, %c0_i32, %arg1 : i32, i32, i32
  }
  func.func @transform_2(%arg0: i32, %arg1: i32) -> (i32, i32) {
    %c0_i32 = arith.constant 0 : i32
    %c0_i32_0 = arith.constant 0 : i32
    %c0_i32_1 = arith.constant 0 : i32
    return %c0_i32, %c0_i32_0 : i32, i32
  }
  func.func @transform_3(%arg0: i32, %arg1: i32) -> (i32, i32) {
    %c0_i32 = arith.constant 0 : i32
    %c0_i32_0 = arith.constant 0 : i32
    %c0_i32_1 = arith.constant 0 : i32
    return %c0_i32, %c0_i32_0 : i32, i32
  }
  func.func @transform_4(%arg0: i32, %arg1: i32) -> (i32, i32) {
    %c0_i32 = arith.constant 0 : i32
    %c0_i32_0 = arith.constant 0 : i32
    %c0_i32_1 = arith.constant 0 : i32
    return %c0_i32, %c0_i32_0 : i32, i32
  }
  func.func @transform_5(%arg0: i32, %arg1: i32) -> (i32, i32) {
    %c0_i32 = arith.constant 0 : i32
    %c0_i32_0 = arith.constant 0 : i32
    %c0_i32_1 = arith.constant 0 : i32
    return %c0_i32, %c0_i32_0 : i32, i32
  }
  func.func @transform_6(%arg0: i32, %arg1: i32) -> (i32, i32, i32) {
    %c0_i32 = arith.constant 0 : i32
    %c0_i32_0 = arith.constant 0 : i32
    %c0_i32_1 = arith.constant 0 : i32
    %c0_i32_2 = arith.constant 0 : i32
    return %c0_i32, %c0_i32_0, %c0_i32_1 : i32, i32, i32
  }
  func.func @transform_7(%arg0: i32, %arg1: i32) -> (i32, i32, i32) {
    %c0_i32 = arith.constant 0 : i32
    %c0_i32_0 = arith.constant 0 : i32
    %c0_i32_1 = arith.constant 0 : i32
    %c0_i32_2 = arith.constant 0 : i32
    return %c0_i32, %c0_i32_0, %c0_i32_1 : i32, i32, i32
  }
  func.func @transform_8(%arg0: i32, %arg1: i32) -> (i32, i32) {
    %c0_i32 = arith.constant 0 : i32
    %c0_i32_0 = arith.constant 0 : i32
    %c0_i32_1 = arith.constant 0 : i32
    return %c0_i32, %c0_i32_0 : i32, i32
  }
  func.func @transform_9(%arg0: i32, %arg1: i32) -> (i32, i32) {
    %c0_i32 = arith.constant 0 : i32
    %c0_i32_0 = arith.constant 0 : i32
    %c0_i32_1 = arith.constant 0 : i32
    return %c0_i32, %c0_i32_0 : i32, i32
  }
  func.func @transform_10(%arg0: i32, %arg1: i32) -> (i32, i32, i32) {
    %c0_i32 = arith.constant 0 : i32
    %c0_i32_0 = arith.constant 0 : i32
    return %arg0, %c0_i32, %arg1 : i32, i32, i32
  }
}

</mosaic_0001>

<llo_original>
// kernel: _lambda_.1
$region0: #{_lambda_.1}
  #allocation0 [shape = 'u32[]', space=smem, size = 0x4, offset = 0x4, fixed_abs, tag = 'smem constant byte address 0x4 - core index']
  #allocation1 [shape = 'u32[144,128]{1,0:T(1,128)}', space=vmem, size = 0x12000, scoped, tag = 'internal scratch']
  #allocation2 [shape = 'bf16[128,256]{1,0:T(16,128)(2,1)}', space=vmem, size = 0x10000, scoped, tag = 'scratch operand']
  #allocation3 [shape = 'bf16[128,256]{1,0:T(16,128)(2,1)}', space=vmem, size = 0x10000, scoped, tag = 'scratch operand']
  #allocation4 [shape = 'f32[128,1]{1,0:T(8,128)}', space=vmem, size = 0x10000, scoped, tag = 'scratch operand']
  #allocation5 [shape = 'f32[128,1]{1,0:T(8,128)}', space=vmem, size = 0x10000, scoped, tag = 'scratch operand']
  %s0 = inlined_call_operand.vmem [shape: f32[2,128,256], index: 0, kind: input, shape index: {}, may-alias: {0,1}]
  %s1 = inlined_call_operand.vmem [shape: f32[2,128,256], index: 1, kind: input, shape index: {}, may-alias: {0,1}]
  %s2 = inlined_call_operand.vmem [shape: f32[128,1], index: 2, kind: input, shape index: {}]
  %s3 = inlined_call_operand.vmem [shape: f32[128,1], index: 3, kind: input, shape index: {}]
  %s4 = inlined_call_operand.vmem [shape: f32[32,128], index: 4, kind: input, shape index: {}]
  %s5 = inlined_call_operand.vmem [shape: f32[128,32], index: 5, kind: input, shape index: {}]
  %s6 = inlined_call_operand.vmem [shape: bf16[3,128,128], index: 6, kind: input, shape index: {}]
  %s7 = inlined_call_operand.vmem [shape: f32[3,128,1], index: 7, kind: input, shape index: {}]
  %s8 = inlined_call_operand.vmem [shape: bf16[128,128], index: 8, kind: input, shape index: {}]
  %s9 = inlined_call_operand.vmem [shape: f32[128,1], index: 9, kind: input, shape index: {}]
  %s10 = inlined_call_operand.vmem [shape: f32[2,128,256], index: 10, kind: output, shape index: {}]
  %s11 = sld [smem:[#allocation0]]
  $region149: #{_lambda_.1} parent=0
    _
  %s13 = ssub.s32 1, %s11
  %s14 = scalar_select 0, %s13, %s11
  $region1: #{_lambda_.1} parent=0
    #allocation6 [shape = 'u8[131072]{0}', space=vmem, size = 0x20000, scoped, tag = 'input window, operand 1']
    #allocation7 [shape = 'u8[131072]{0}', space=vmem, size = 0x20000, scoped, tag = 'output window, operand 0']
    loop: start=0, step=1, limit=6
    $region2: #{_lambda_.1} parent=1 // loop_pre_header
      _
    $region3: #{_lambda_.1} parent=1 // loop_header
      %s16 = sphi 0, %s20
      %p17 = scmp.ge.s32.totalorder %s16, 6
      %s23 = sphi 0, %s35
      %s24 = sphi 0, %s31
      %s25 = sphi 0, %s23
      %s26 = sphi 0, %s24
      %s27 = sphi 0, %s25
      %s28 = sphi 0, %s26
      %s38 = sphi 0, %s40
      %s41 = sphi 0, %s38
      %s42 = sphi 0, %s41
      %s58 = sphi 0, %s42
      %s66 = sphi 0, %s68
      %s69 = sphi 0, %s66
      %s70 = sphi 0, %s69
      %s86 = sphi 0, %s70
      %s90 = sphi 0, %s90
      %s92 = sphi 0, %s90
      %s93 = sphi 0, %s92
      %s107 = sphi 0, %s93
      %s111 = sphi 0, %s111
      %s113 = sphi 0, %s111
      %s114 = sphi 0, %s113
      %s128 = sphi 0, %s114
      %s132 = sphi 0, %s132
      %s134 = sphi 0, %s132
      %s135 = sphi 0, %s134
      %s149 = sphi 0, %s135
      %s153 = sphi 0, %s153
      %s155 = sphi 0, %s153
      %s156 = sphi 0, %s155
      %s170 = sphi 0, %s156
      %s174 = sphi 0, %s174
      %s176 = sphi 0, %s174
      %s177 = sphi 0, %s176
      %s191 = sphi 0, %s177
      %s195 = sphi 0, %s195
      %s197 = sphi 0, %s195
      %s198 = sphi 0, %s197
      %s212 = sphi 0, %s198
      %s216 = sphi 0, %s216
      %s218 = sphi 0, %s216
      %s219 = sphi 0, %s218
      %s233 = sphi 0, %s219
      %s237 = sphi 0, %s237
      %s239 = sphi 0, %s237
      %s240 = sphi 0, %s239
      %s254 = sphi 0, %s240
      %s262 = sphi 0, %s264
      %s265 = sphi 0, %s262
      %s266 = sphi 0, %s265
      %s282 = sphi 0, %s266
    $region4: #{_lambda_.1} parent=1 // loop_header_branch
      %19 = sbr.rel (%p17) target = $region8
    $region5: #{_lambda_.1} parent=1 // loop_body
      %s21 = ssub.s32 %s16, 1
      %s22 = ssub.s32 %s16, 2
      %s29 = sadd.s32 1, %s24
      %p30 = scmp.ge.s32.totalorder %s29, 2
      %s31 = scalar_select %p30, 0, %s29
      %s32 = sadd.s32 1, %s23
      %s33 = scalar_select %p30, %s32, %s23
      %p34 = scmp.ge.s32.totalorder %s33, 2
      %s35 = scalar_select %p34, 0, %s33
      %s36 = ssub.s32 %s23, %s35
      %p37 = scmp.eq.s32.totalorder %s36, 0
      %s39 = sadd.s32 %s38, 1
      %s40 = scalar_select %p37, %s38, %s39
      %p43 = pneg %p37
      %p44 = scmp.eq.s32.totalorder %s16, 3
      %p45 = por %p43, %p44
      %p46 = scmp.ne.s32.totalorder %s38, %s41
      %p47 = scmp.eq.s32.totalorder %s16, 0
      %p48 = por %p46, %p47
      %p49 = scmp.ne.s32.totalorder %s38, %s41
      %p50 = scmp.eq.s32.totalorder %s21, 3
      %p51 = por %p49, %p50
      %p52 = scmp.ne.s32.totalorder %s41, %s42
      %p53 = scmp.eq.s32.totalorder %s21, 0
      %p54 = por %p52, %p53
      %p55 = scmp.ne.s32.totalorder %s41, %s42
      %p56 = scmp.eq.s32.totalorder %s22, 3
      %p57 = por %p55, %p56
      %p59 = scmp.ne.s32.totalorder %s42, %s58
      %p60 = scmp.eq.s32.totalorder %s22, 0
      %p61 = por %p59, %p60
      %s62 = ssub.s32 %s23, %s35
      %s63 = ssub.s32 %s24, %s31
      %s64 = sor.u32 %s62, %s63
      %p65 = scmp.eq.s32.totalorder %s64, 0
      %s67 = sadd.s32 %s66, 1
      %s68 = scalar_select %p65, %s66, %s67
      %p71 = pneg %p65
      %p72 = scmp.eq.s32.totalorder %s16, 3
      %p73 = por %p71, %p72
      %p74 = scmp.ne.s32.totalorder %s66, %s69
      %p75 = scmp.eq.s32.totalorder %s16, 0
      %p76 = por %p74, %p75
      %p77 = scmp.ne.s32.totalorder %s66, %s69
      %p78 = scmp.eq.s32.totalorder %s21, 3
      %p79 = por %p77, %p78
      %p80 = scmp.ne.s32.totalorder %s69, %s70
      %p81 = scmp.eq.s32.totalorder %s21, 0
      %p82 = por %p80, %p81
      %p83 = scmp.ne.s32.totalorder %s69, %s70
      %p84 = scmp.eq.s32.totalorder %s22, 3
      %p85 = por %p83, %p84
      %p87 = scmp.ne.s32.totalorder %s70, %s86
      %p88 = scmp.eq.s32.totalorder %s22, 0
      %p89 = por %p87, %p88
      %s91 = sadd.s32 %s90, 1
      %p94 = scmp.eq.s32.totalorder %s16, 3
      %p95 = scmp.ne.s32.totalorder %s90, %s92
      %p96 = scmp.eq.s32.totalorder %s16, 0
      %p97 = por %p95, %p96
      %p98 = scmp.ne.s32.totalorder %s90, %s92
      %p99 = scmp.eq.s32.totalorder %s21, 3
      %p100 = por %p98, %p99
      %p101 = scmp.ne.s32.totalorder %s92, %s93
      %p102 = scmp.eq.s32.totalorder %s21, 0
      %p103 = por %p101, %p102
      %p104 = scmp.ne.s32.totalorder %s92, %s93
      %p105 = scmp.eq.s32.totalorder %s22, 3
      %p106 = por %p104, %p105
      %p108 = scmp.ne.s32.totalorder %s93, %s107
      %p109 = scmp.eq.s32.totalorder %s22, 0
      %p110 = por %p108, %p109
      %s112 = sadd.s32 %s111, 1
      %p115 = scmp.eq.s32.totalorder %s16, 3
      %p116 = scmp.ne.s32.totalorder %s111, %s113
      %p117 = scmp.eq.s32.totalorder %s16, 0
      %p118 = por %p116, %p117
      %p119 = scmp.ne.s32.totalorder %s111, %s113
      %p120 = scmp.eq.s32.totalorder %s21, 3
      %p121 = por %p119, %p120
      %p122 = scmp.ne.s32.totalorder %s113, %s114
      %p123 = scmp.eq.s32.totalorder %s21, 0
      %p124 = por %p122, %p123
      %p125 = scmp.ne.s32.totalorder %s113, %s114
      %p126 = scmp.eq.s32.totalorder %s22, 3
      %p127 = por %p125, %p126
      %p129 = scmp.ne.s32.totalorder %s114, %s128
      %p130 = scmp.eq.s32.totalorder %s22, 0
      %p131 = por %p129, %p130
      %s133 = sadd.s32 %s132, 1
      %p136 = scmp.eq.s32.totalorder %s16, 3
      %p137 = scmp.ne.s32.totalorder %s132, %s134
      %p138 = scmp.eq.s32.totalorder %s16, 0
      %p139 = por %p137, %p138
      %p140 = scmp.ne.s32.totalorder %s132, %s134
      %p141 = scmp.eq.s32.totalorder %s21, 3
      %p142 = por %p140, %p141
      %p143 = scmp.ne.s32.totalorder %s134, %s135
      %p144 = scmp.eq.s32.totalorder %s21, 0
      %p145 = por %p143, %p144
      %p146 = scmp.ne.s32.totalorder %s134, %s135
      %p147 = scmp.eq.s32.totalorder %s22, 3
      %p148 = por %p146, %p147
      %p150 = scmp.ne.s32.totalorder %s135, %s149
      %p151 = scmp.eq.s32.totalorder %s22, 0
      %p152 = por %p150, %p151
      %s154 = sadd.s32 %s153, 1
      %p157 = scmp.eq.s32.totalorder %s16, 3
      %p158 = scmp.ne.s32.totalorder %s153, %s155
      %p159 = scmp.eq.s32.totalorder %s16, 0
      %p160 = por %p158, %p159
      %p161 = scmp.ne.s32.totalorder %s153, %s155
      %p162 = scmp.eq.s32.totalorder %s21, 3
      %p163 = por %p161, %p162
      %p164 = scmp.ne.s32.totalorder %s155, %s156
      %p165 = scmp.eq.s32.totalorder %s21, 0
      %p166 = por %p164, %p165
      %p167 = scmp.ne.s32.totalorder %s155, %s156
      %p168 = scmp.eq.s32.totalorder %s22, 3
      %p169 = por %p167, %p168
      %p171 = scmp.ne.s32.totalorder %s156, %s170
      %p172 = scmp.eq.s32.totalorder %s22, 0
      %p173 = por %p171, %p172
      %s175 = sadd.s32 %s174, 1
      %p178 = scmp.eq.s32.totalorder %s16, 3
      %p179 = scmp.ne.s32.totalorder %s174, %s176
      %p180 = scmp.eq.s32.totalorder %s16, 0
      %p181 = por %p179, %p180
      %p182 = scmp.ne.s32.totalorder %s174, %s176
      %p183 = scmp.eq.s32.totalorder %s21, 3
      %p184 = por %p182, %p183
      %p185 = scmp.ne.s32.totalorder %s176, %s177
      %p186 = scmp.eq.s32.totalorder %s21, 0
      %p187 = por %p185, %p186
      %p188 = scmp.ne.s32.totalorder %s176, %s177
      %p189 = scmp.eq.s32.totalorder %s22, 3
      %p190 = por %p188, %p189
      %p192 = scmp.ne.s32.totalorder %s177, %s191
      %p193 = scmp.eq.s32.totalorder %s22, 0
      %p194 = por %p192, %p193
      %s196 = sadd.s32 %s195, 1
      %p199 = scmp.eq.s32.totalorder %s16, 3
      %p200 = scmp.ne.s32.totalorder %s195, %s197
      %p201 = scmp.eq.s32.totalorder %s16, 0
      %p202 = por %p200, %p201
      %p203 = scmp.ne.s32.totalorder %s195, %s197
      %p204 = scmp.eq.s32.totalorder %s21, 3
      %p205 = por %p203, %p204
      %p206 = scmp.ne.s32.totalorder %s197, %s198
      %p207 = scmp.eq.s32.totalorder %s21, 0
      %p208 = por %p206, %p207
      %p209 = scmp.ne.s32.totalorder %s197, %s198
      %p210 = scmp.eq.s32.totalorder %s22, 3
      %p211 = por %p209, %p210
      %p213 = scmp.ne.s32.totalorder %s198, %s212
      %p214 = scmp.eq.s32.totalorder %s22, 0
      %p215 = por %p213, %p214
      %s217 = sadd.s32 %s216, 1
      %p220 = scmp.eq.s32.totalorder %s16, 3
      %p221 = scmp.ne.s32.totalorder %s216, %s218
      %p222 = scmp.eq.s32.totalorder %s16, 0
      %p223 = por %p221, %p222
      %p224 = scmp.ne.s32.totalorder %s216, %s218
      %p225 = scmp.eq.s32.totalorder %s21, 3
      %p226 = por %p224, %p225
      %p227 = scmp.ne.s32.totalorder %s218, %s219
      %p228 = scmp.eq.s32.totalorder %s21, 0
      %p229 = por %p227, %p228
      %p230 = scmp.ne.s32.totalorder %s218, %s219
      %p231 = scmp.eq.s32.totalorder %s22, 3
      %p232 = por %p230, %p231
      %p234 = scmp.ne.s32.totalorder %s219, %s233
      %p235 = scmp.eq.s32.totalorder %s22, 0
      %p236 = por %p234, %p235
      %s238 = sadd.s32 %s237, 1
      %p241 = scmp.eq.s32.totalorder %s16, 3
      %p242 = scmp.ne.s32.totalorder %s237, %s239
      %p243 = scmp.eq.s32.totalorder %s16, 0
      %p244 = por %p242, %p243
      %p245 = scmp.ne.s32.totalorder %s237, %s239
      %p246 = scmp.eq.s32.totalorder %s21, 3
      %p247 = por %p245, %p246
      %p248 = scmp.ne.s32.totalorder %s239, %s240
      %p249 = scmp.eq.s32.totalorder %s21, 0
      %p250 = por %p248, %p249
      %p251 = scmp.ne.s32.totalorder %s239, %s240
      %p252 = scmp.eq.s32.totalorder %s22, 3
      %p253 = por %p251, %p252
      %p255 = scmp.ne.s32.totalorder %s240, %s254
      %p256 = scmp.eq.s32.totalorder %s22, 0
      %p257 = por %p255, %p256
      %s258 = ssub.s32 %s23, %s35
      %s259 = ssub.s32 %s24, %s31
      %s260 = sor.u32 %s258, %s259
      %p261 = scmp.eq.s32.totalorder %s260, 0
      %s263 = sadd.s32 %s262, 1
      %s264 = scalar_select %p261, %s262, %s263
      %p267 = pneg %p261
      %p268 = scmp.eq.s32.totalorder %s16, 3
      %p269 = por %p267, %p268
      %p270 = scmp.ne.s32.totalorder %s262, %s265
      %p271 = scmp.eq.s32.totalorder %s16, 0
      %p272 = por %p270, %p271
      %p273 = scmp.ne.s32.totalorder %s262, %s265
      %p274 = scmp.eq.s32.totalorder %s21, 3
      %p275 = por %p273, %p274
      %p276 = scmp.ne.s32.totalorder %s265, %s266
      %p277 = scmp.eq.s32.totalorder %s21, 0
      %p278 = por %p276, %p277
      %p279 = scmp.ne.s32.totalorder %s265, %s266
      %p280 = scmp.eq.s32.totalorder %s22, 3
      %p281 = por %p279, %p280
      %p283 = scmp.ne.s32.totalorder %s266, %s282
      %p284 = scmp.eq.s32.totalorder %s22, 0
      %p285 = por %p283, %p284
      %p286 = scmp.le.s32.totalorder 1, %s16
      %p287 = scmp.lt.s32.totalorder %s16, 5
      %p288 = pnand %p286, %p287
      %p289 = pneg %p288
      // Predicated region
      $region9: #{_lambda_.1} parent=5 // pred_check
        _
      $region10: #{_lambda_.1} parent=5 // pred_check_branch
        %291 = sbr.rel (%p288) target = $region12
      $region11: #{_lambda_.1} parent=5 // pred_region
        %s292 = ssub.s32 %s16, 1
        // Predicated region
        $region13: #{_lambda_.1} parent=11 // pred_check
          %p293 = pneg %p103
        $region14: #{_lambda_.1} parent=11 // pred_check_branch
          %295 = sbr.rel (%p293) target = $region16
        $region15: #{_lambda_.1} parent=11 // pred_region
          _
        $region16: #{_lambda_.1} parent=11 // pred_fallthru
          _
        // Predicated region
        $region17: #{_lambda_.1} parent=11 // pred_check
          %p296 = pneg %p124
        $region18: #{_lambda_.1} parent=11 // pred_check_branch
          %298 = sbr.rel (%p296) target = $region20
        $region19: #{_lambda_.1} parent=11 // pred_region
          _
        $region20: #{_lambda_.1} parent=11 // pred_fallthru
          _
        // Predicated region
        $region21: #{_lambda_.1} parent=11 // pred_check
          %p299 = pneg %p145
        $region22: #{_lambda_.1} parent=11 // pred_check_branch
          %301 = sbr.rel (%p299) target = $region24
        $region23: #{_lambda_.1} parent=11 // pred_region
          _
        $region24: #{_lambda_.1} parent=11 // pred_fallthru
          _
        // Predicated region
        $region25: #{_lambda_.1} parent=11 // pred_check
          %p302 = pneg %p166
        $region26: #{_lambda_.1} parent=11 // pred_check_branch
          %304 = sbr.rel (%p302) target = $region28
        $region27: #{_lambda_.1} parent=11 // pred_region
          _
        $region28: #{_lambda_.1} parent=11 // pred_fallthru
          _
        // Predicated region
        $region29: #{_lambda_.1} parent=11 // pred_check
          %p305 = pneg %p187
        $region30: #{_lambda_.1} parent=11 // pred_check_branch
          %307 = sbr.rel (%p305) target = $region32
        $region31: #{_lambda_.1} parent=11 // pred_region
          _
        $region32: #{_lambda_.1} parent=11 // pred_fallthru
          _
        // Predicated region
        $region33: #{_lambda_.1} parent=11 // pred_check
          %p308 = pneg %p208
        $region34: #{_lambda_.1} parent=11 // pred_check_branch
          %310 = sbr.rel (%p308) target = $region36
        $region35: #{_lambda_.1} parent=11 // pred_region
          _
        $region36: #{_lambda_.1} parent=11 // pred_fallthru
          _
        // Predicated region
        $region37: #{_lambda_.1} parent=11 // pred_check
          %p311 = pneg %p229
        $region38: #{_lambda_.1} parent=11 // pred_check_branch
          %313 = sbr.rel (%p311) target = $region40
        $region39: #{_lambda_.1} parent=11 // pred_region
          _
        $region40: #{_lambda_.1} parent=11 // pred_fallthru
          _
        // Predicated region
        $region41: #{_lambda_.1} parent=11 // pred_check
          %p314 = pneg %p250
        $region42: #{_lambda_.1} parent=11 // pred_check_branch
          %316 = sbr.rel (%p314) target = $region44
        $region43: #{_lambda_.1} parent=11 // pred_region
          _
        $region44: #{_lambda_.1} parent=11 // pred_fallthru
          _
      $region12: #{_lambda_.1} parent=5 // pred_fallthru
        _
      %p317 = scmp.lt.s32.totalorder %s16, 4
      // Predicated region
      $region45: #{_lambda_.1} parent=5 // pred_check
        %p318 = pneg %p317
      $region46: #{_lambda_.1} parent=5 // pred_check_branch
        %320 = sbr.rel (%p318) target = $region48
      $region47: #{_lambda_.1} parent=5 // pred_region
        // Predicated region
        $region49: #{_lambda_.1} parent=47 // pred_check
          %p321 = pneg %p48
        $region50: #{_lambda_.1} parent=47 // pred_check_branch
          %323 = sbr.rel (%p321) target = $region52
        $region51: #{_lambda_.1} parent=47 // pred_region
          %p324 = scmp.lt.s32.totalorder %s23, 1
          %s325 = scalar_select %p324, %s23, 1
          %s326 = smul.addr %s325, 32
          %s327 = smul.addr %s326, 8
          %s328 = scalar_lea.vmem %s0, %s327
        $region52: #{_lambda_.1} parent=47 // pred_fallthru
          _
        // Predicated region
        $region53: #{_lambda_.1} parent=47 // pred_check
          %p329 = pneg %p76
        $region54: #{_lambda_.1} parent=47 // pred_check_branch
          %331 = sbr.rel (%p329) target = $region56
        $region55: #{_lambda_.1} parent=47 // pred_region
          %s332 = sand.u32 %s66, 1
          %s333 = sand.u32 %s66, 1
          %s334 = smul.addr %s333, 128
          %s335 = scalar_lea.vmem [#allocation6], %s334
          %s336 = smul.addr %s23, 32
          %s337 = sadd.s32 %s24, %s336
          %s338 = smul.addr %s337, 8
          %s339 = scalar_lea.vmem %s1, %s338
          // Predicated region
          $region57: #{_lambda_.1} parent=55 // pred_check
            _
          $region58: #{_lambda_.1} parent=55 // pred_check_branch
            %341 = sbr.rel (0) target = $region60
          $region59: #{_lambda_.1} parent=55 // pred_region
            // Predicated region
            $region61: #{_lambda_.1} parent=59 // pred_check
              _
            $region62: #{_lambda_.1} parent=59 // pred_check_branch
              %343 = sbr.rel (0) target = $region64
            $region63: #{_lambda_.1} parent=59 // pred_region
              // Predicated region
              $region76: #{_lambda_.1} parent=63 // pred_check
                _
              $region77: #{_lambda_.1} parent=63 // pred_check_branch
                %388 = sbr.rel (0) target = $region79
              $region78: #{_lambda_.1} parent=63 // pred_region
                loop: start=0, step=1, limit=1
                $region80: #{_lambda_.1} parent=78 // loop_pre_header
                  _
                $region81: #{_lambda_.1} parent=78 // loop_header
                  %s390 = sphi 0, %s394
                  %p391 = scmp.ge.s32.totalorder %s390, 1
                  %s395 = sphi %s339, %s339
                  %s396 = sphi %s335, %s335
                $region82: #{_lambda_.1} parent=78 // loop_header_branch
                  %393 = sbr.rel (%p391) target = $region86
                $region83: #{_lambda_.1} parent=78 // loop_body
                  %v397 = vld [vmem:[%s395] sm:$0xff]
                  %398 = vst [vmem:[%s396] sm:$0xff] %v397
                  %v399 = vld [vmem:[%s395 + $0x10] sm:$0xff]
                  %400 = vst [vmem:[%s396 + $0x8] sm:$0xff] %v399
                  %v401 = vld [vmem:[%s395 + $0x20] sm:$0xff]
                  %402 = vst [vmem:[%s396 + $0x10] sm:$0xff] %v401
                  %v403 = vld [vmem:[%s395 + $0x30] sm:$0xff]
                  %404 = vst [vmem:[%s396 + $0x18] sm:$0xff] %v403
                  %v405 = vld [vmem:[%s395 + $0x40] sm:$0xff]
                  %406 = vst [vmem:[%s396 + $0x20] sm:$0xff] %v405
                  %v407 = vld [vmem:[%s395 + $0x50] sm:$0xff]
                  %408 = vst [vmem:[%s396 + $0x28] sm:$0xff] %v407
                  %v409 = vld [vmem:[%s395 + $0x60] sm:$0xff]
                  %410 = vst [vmem:[%s396 + $0x30] sm:$0xff] %v409
                  %v411 = vld [vmem:[%s395 + $0x70] sm:$0xff]
                  %412 = vst [vmem:[%s396 + $0x38] sm:$0xff] %v411
                  %v413 = vld [vmem:[%s395 + $0x80] sm:$0xff]
                  %414 = vst [vmem:[%s396 + $0x40] sm:$0xff] %v413
                  %v415 = vld [vmem:[%s395 + $0x90] sm:$0xff]
                  %416 = vst [vmem:[%s396 + $0x48] sm:$0xff] %v415
                  %v417 = vld [vmem:[%s395 + $0xa0] sm:$0xff]
                  %418 = vst [vmem:[%s396 + $0x50] sm:$0xff] %v417
                  %v419 = vld [vmem:[%s395 + $0xb0] sm:$0xff]
                  %420 = vst [vmem:[%s396 + $0x58] sm:$0xff] %v419
                  %v421 = vld [vmem:[%s395 + $0xc0] sm:$0xff]
                  %422 = vst [vmem:[%s396 + $0x60] sm:$0xff] %v421
                  %v423 = vld [vmem:[%s395 + $0xd0] sm:$0xff]
                  %424 = vst [vmem:[%s396 + $0x68] sm:$0xff] %v423
                  %v425 = vld [vmem:[%s395 + $0xe0] sm:$0xff]
                  %426 = vst [vmem:[%s396 + $0x70] sm:$0xff] %v425
                  %v427 = vld [vmem:[%s395 + $0xf0] sm:$0xff]
                  %428 = vst [vmem:[%s396 + $0x78] sm:$0xff] %v427
                $region84: #{_lambda_.1} parent=78 // loop_footer
                  %s394 = sadd.s32 1, %s390
                $region85: #{_lambda_.1} parent=78 // loop_footer_branch
                  %389 = sbr.rel target = $region81
                $region86: #{_lambda_.1} parent=78 // loop_exit
                  _
              $region79: #{_lambda_.1} parent=63 // pred_fallthru
                _
              // Predicated region
              $region87: #{_lambda_.1} parent=63 // pred_check
                _
              $region88: #{_lambda_.1} parent=63 // pred_check_branch
                %430 = sbr.rel target = $region90
              $region89: #{_lambda_.1} parent=63 // pred_region
                _
              $region90: #{_lambda_.1} parent=63 // pred_fallthru
                _
            $region64: #{_lambda_.1} parent=59 // pred_fallthru
              _
            // Predicated region
            $region65: #{_lambda_.1} parent=59 // pred_check
              _
            $region66: #{_lambda_.1} parent=59 // pred_check_branch
              %345 = sbr.rel target = $region68
            $region67: #{_lambda_.1} parent=59 // pred_region
              loop: start=0, step=1, limit=1
              $region69: #{_lambda_.1} parent=67 // loop_pre_header
                _
              $region70: #{_lambda_.1} parent=67 // loop_header
                %s348 = sphi 0, %s352
                %p349 = scmp.ge.s32.totalorder %s348, 1
                %s353 = sphi %s339, %s339
                %s354 = sphi %s335, %s335
              $region71: #{_lambda_.1} parent=67 // loop_header_branch
                %351 = sbr.rel (%p349) target = $region75
              $region72: #{_lambda_.1} parent=67 // loop_body
                %v355 = vld [vmem:[%s353] sm:$0xff]
                %356 = vst [vmem:[%s354] sm:$0xff] %v355
                %v357 = vld [vmem:[%s353 + $0x10] sm:$0xff]
                %358 = vst [vmem:[%s354 + $0x8] sm:$0xff] %v357
                %v359 = vld [vmem:[%s353 + $0x20] sm:$0xff]
                %360 = vst [vmem:[%s354 + $0x10] sm:$0xff] %v359
                %v361 = vld [vmem:[%s353 + $0x30] sm:$0xff]
                %362 = vst [vmem:[%s354 + $0x18] sm:$0xff] %v361
                %v363 = vld [vmem:[%s353 + $0x40] sm:$0xff]
                %364 = vst [vmem:[%s354 + $0x20] sm:$0xff] %v363
                %v365 = vld [vmem:[%s353 + $0x50] sm:$0xff]
                %366 = vst [vmem:[%s354 + $0x28] sm:$0xff] %v365
                %v367 = vld [vmem:[%s353 + $0x60] sm:$0xff]
                %368 = vst [vmem:[%s354 + $0x30] sm:$0xff] %v367
                %v369 = vld [vmem:[%s353 + $0x70] sm:$0xff]
                %370 = vst [vmem:[%s354 + $0x38] sm:$0xff] %v369
                %v371 = vld [vmem:[%s353 + $0x80] sm:$0xff]
                %372 = vst [vmem:[%s354 + $0x40] sm:$0xff] %v371
                %v373 = vld [vmem:[%s353 + $0x90] sm:$0xff]
                %374 = vst [vmem:[%s354 + $0x48] sm:$0xff] %v373
                %v375 = vld [vmem:[%s353 + $0xa0] sm:$0xff]
                %376 = vst [vmem:[%s354 + $0x50] sm:$0xff] %v375
                %v377 = vld [vmem:[%s353 + $0xb0] sm:$0xff]
                %378 = vst [vmem:[%s354 + $0x58] sm:$0xff] %v377
                %v379 = vld [vmem:[%s353 + $0xc0] sm:$0xff]
                %380 = vst [vmem:[%s354 + $0x60] sm:$0xff] %v379
                %v381 = vld [vmem:[%s353 + $0xd0] sm:$0xff]
                %382 = vst [vmem:[%s354 + $0x68] sm:$0xff] %v381
                %v383 = vld [vmem:[%s353 + $0xe0] sm:$0xff]
                %384 = vst [vmem:[%s354 + $0x70] sm:$0xff] %v383
                %v385 = vld [vmem:[%s353 + $0xf0] sm:$0xff]
                %386 = vst [vmem:[%s354 + $0x78] sm:$0xff] %v385
              $region73: #{_lambda_.1} parent=67 // loop_footer
                %s352 = sadd.s32 1, %s348
              $region74: #{_lambda_.1} parent=67 // loop_footer_branch
                %347 = sbr.rel target = $region70
              $region75: #{_lambda_.1} parent=67 // loop_exit
                _
            $region68: #{_lambda_.1} parent=59 // pred_fallthru
              _
          $region60: #{_lambda_.1} parent=55 // pred_fallthru
            _
          %431 = vnop
        $region56: #{_lambda_.1} parent=47 // pred_fallthru
          _
      $region48: #{_lambda_.1} parent=5 // pred_fallthru
        _
      %p432 = scmp.le.s32.totalorder 1, %s16
      %p433 = scmp.lt.s32.totalorder %s16, 5
      %p434 = pnand %p432, %p433
      %p435 = pneg %p434
      // Predicated region
      $region91: #{_lambda_.1} parent=5 // pred_check
        _
      $region92: #{_lambda_.1} parent=5 // pred_check_branch
        %437 = sbr.rel (%p434) target = $region94
      $region93: #{_lambda_.1} parent=5 // pred_region
        %s438 = ssub.s32 %s16, 1
        %s439 = sand.u32 %s69, 1
        %s440 = sand.u32 %s69, 1
        %s441 = smul.addr %s440, 128
        %s442 = scalar_lea.vmem [#allocation6], %s441
        // Predicated region
        $region95: #{_lambda_.1} parent=93 // pred_check
          %p443 = pneg %p82
        $region96: #{_lambda_.1} parent=93 // pred_check_branch
          %445 = sbr.rel (%p443) target = $region98
        $region97: #{_lambda_.1} parent=93 // pred_region
          _
        $region98: #{_lambda_.1} parent=93 // pred_fallthru
          _
        %p446 = scmp.lt.s32.totalorder %s25, 1
        %s447 = scalar_select %p446, %s25, 1
        %s448 = smul.addr %s447, 32
        %s449 = smul.addr %s448, 8
        %s450 = scalar_lea.vmem %s0, %s449
        %p451 = pneg %p54
        %p452 = pneg %p51
        %s453 = sand.u32 %s69, 1
        %s454 = sand.u32 %s69, 1
        %s455 = smul.addr %s454, 128
        %s456 = scalar_lea.vmem [#allocation6], %s455
        %p457 = pneg %p82
        %p458 = pneg %p79
        %p459 = pneg %p103
        %p460 = pneg %p100
        %p461 = pneg %p124
        %p462 = pneg %p121
        %p463 = pneg %p145
        %p464 = pneg %p142
        %p465 = pneg %p166
        %p466 = pneg %p163
        %p467 = pneg %p187
        %p468 = pneg %p184
        %p469 = pneg %p208
        %p470 = pneg %p205
        %p471 = pneg %p229
        %p472 = pneg %p226
        %p473 = pneg %p250
        %p474 = pneg %p247
        %p475 = pneg %p278
        %p476 = pneg %p275
        %s477 = sand.u32 %s265, 1
        %s478 = sand.u32 %s265, 1
        %s479 = smul.addr %s478, 128
        %s480 = scalar_lea.vmem [#allocation7], %s479
        %p481 = scmp.lt.s32.totalorder %s25, 1
        %s482 = scalar_select %p481, %s25, 1
        %s483 = smul.addr %s482, 32
        %s484 = smul.addr %s483, 8
        %s485 = scalar_lea.vmem %s0, %s484
        %p487 = scmp.eq.s32.totalorder %s26, 0
        // Predicated region
        $region99: #{_lambda_.1} parent=93 // pred_check
          %p488 = pneg %p487
        $region100: #{_lambda_.1} parent=93 // pred_check_branch
          %490 = sbr.rel (%p488) target = $region102
        $region101: #{_lambda_.1} parent=93 // pred_region
          %v491 = vld [vmem:[%s485] sm:$0xff]
          %v492 = vld [vmem:[%s485 + $0x8] sm:$0xff]
          %v493 = vld [vmem:[%s485 + $0x10] sm:$0xff]
          %v494 = vld [vmem:[%s485 + $0x18] sm:$0xff]
          %v495 = vld [vmem:[%s485 + $0x20] sm:$0xff]
          %v496 = vld [vmem:[%s485 + $0x28] sm:$0xff]
          %v497 = vld [vmem:[%s485 + $0x30] sm:$0xff]
          %v498 = vld [vmem:[%s485 + $0x38] sm:$0xff]
          %v499 = vld [vmem:[%s485 + $0x40] sm:$0xff]
          %v500 = vld [vmem:[%s485 + $0x48] sm:$0xff]
          %v501 = vld [vmem:[%s485 + $0x50] sm:$0xff]
          %v502 = vld [vmem:[%s485 + $0x58] sm:$0xff]
          %v503 = vld [vmem:[%s485 + $0x60] sm:$0xff]
          %v504 = vld [vmem:[%s485 + $0x68] sm:$0xff]
          %v505 = vld [vmem:[%s485 + $0x70] sm:$0xff]
          %v506 = vld [vmem:[%s485 + $0x78] sm:$0xff]
          %v507 = vld [vmem:[%s485 + $0x80] sm:$0xff]
          %v508 = vld [vmem:[%s485 + $0x88] sm:$0xff]
          %v509 = vld [vmem:[%s485 + $0x90] sm:$0xff]
          %v510 = vld [vmem:[%s485 + $0x98] sm:$0xff]
          %v511 = vld [vmem:[%s485 + $0xa0] sm:$0xff]
          %v512 = vld [vmem:[%s485 + $0xa8] sm:$0xff]
          %v513 = vld [vmem:[%s485 + $0xb0] sm:$0xff]
          %v514 = vld [vmem:[%s485 + $0xb8] sm:$0xff]
          %v515 = vld [vmem:[%s485 + $0xc0] sm:$0xff]
          %v516 = vld [vmem:[%s485 + $0xc8] sm:$0xff]
          %v517 = vld [vmem:[%s485 + $0xd0] sm:$0xff]
          %v518 = vld [vmem:[%s485 + $0xd8] sm:$0xff]
          %v519 = vld [vmem:[%s485 + $0xe0] sm:$0xff]
          %v520 = vld [vmem:[%s485 + $0xe8] sm:$0xff]
          %v521 = vld [vmem:[%s485 + $0xf0] sm:$0xff]
          %v522 = vld [vmem:[%s485 + $0xf8] sm:$0xff]
          %v523 = vadd.f32 %v491, %v492
          %524 = vadd.xlane.f32.xlu0 %v523
          %v525 = vpop.xlane.xlu0 %524
          %v526 = vadd.f32 %v493, %v494
          %527 = vadd.xlane.f32.xlu0 %v526
          %v528 = vpop.xlane.xlu0 %527
          %v529 = vadd.f32 %v495, %v496
          %530 = vadd.xlane.f32.xlu0 %v529
          %v531 = vpop.xlane.xlu0 %530
          %v532 = vadd.f32 %v497, %v498
          %533 = vadd.xlane.f32.xlu0 %v532
          %v534 = vpop.xlane.xlu0 %533
          %v535 = vadd.f32 %v499, %v500
          %536 = vadd.xlane.f32.xlu0 %v535
          %v537 = vpop.xlane.xlu0 %536
          %v538 = vadd.f32 %v501, %v502
          %539 = vadd.xlane.f32.xlu0 %v538
          %v540 = vpop.xlane.xlu0 %539
          %v541 = vadd.f32 %v503, %v504
          %542 = vadd.xlane.f32.xlu0 %v541
          %v543 = vpop.xlane.xlu0 %542
          %v544 = vadd.f32 %v505, %v506
          %545 = vadd.xlane.f32.xlu0 %v544
          %v546 = vpop.xlane.xlu0 %545
          %v547 = vadd.f32 %v507, %v508
          %548 = vadd.xlane.f32.xlu0 %v547
          %v549 = vpop.xlane.xlu0 %548
          %v550 = vadd.f32 %v509, %v510
          %551 = vadd.xlane.f32.xlu0 %v550
          %v552 = vpop.xlane.xlu0 %551
          %v553 = vadd.f32 %v511, %v512
          %554 = vadd.xlane.f32.xlu0 %v553
          %v555 = vpop.xlane.xlu0 %554
          %v556 = vadd.f32 %v513, %v514
          %557 = vadd.xlane.f32.xlu0 %v556
          %v558 = vpop.xlane.xlu0 %557
          %v559 = vadd.f32 %v515, %v516
          %560 = vadd.xlane.f32.xlu0 %v559
          %v561 = vpop.xlane.xlu0 %560
          %v562 = vadd.f32 %v517, %v518
          %563 = vadd.xlane.f32.xlu0 %v562
          %v564 = vpop.xlane.xlu0 %563
          %v565 = vadd.f32 %v519, %v520
          %566 = vadd.xlane.f32.xlu0 %v565
          %v567 = vpop.xlane.xlu0 %566
          %v568 = vadd.f32 %v521, %v522
          %569 = vadd.xlane.f32.xlu0 %v568
          %v570 = vpop.xlane.xlu0 %569
          %v571 = vld [vmem:[%s5] sm:$0xff]
          %v572 = vld [vmem:[%s5 + $0x8] sm:$0xff]
          %v573 = vld [vmem:[%s5 + $0x10] sm:$0xff]
          %v574 = vld [vmem:[%s5 + $0x18] sm:$0xff]
          %v575 = vld [vmem:[%s5 + $0x20] sm:$0xff]
          %v576 = vld [vmem:[%s5 + $0x28] sm:$0xff]
          %v577 = vld [vmem:[%s5 + $0x30] sm:$0xff]
          %v578 = vld [vmem:[%s5 + $0x38] sm:$0xff]
          %v579 = vld [vmem:[%s5 + $0x40] sm:$0xff]
          %v580 = vld [vmem:[%s5 + $0x48] sm:$0xff]
          %v581 = vld [vmem:[%s5 + $0x50] sm:$0xff]
          %v582 = vld [vmem:[%s5 + $0x58] sm:$0xff]
          %v583 = vld [vmem:[%s5 + $0x60] sm:$0xff]
          %v584 = vld [vmem:[%s5 + $0x68] sm:$0xff]
          %v585 = vld [vmem:[%s5 + $0x70] sm:$0xff]
          %v586 = vld [vmem:[%s5 + $0x78] sm:$0xff]
          %v587 = vld [vmem:[%s4] sm:$0xff]
          %v588 = vld [vmem:[%s4 + $0x8] sm:$0xff]
          %v589 = vld [vmem:[%s4 + $0x10] sm:$0xff]
          %v590 = vld [vmem:[%s4 + $0x18] sm:$0xff]
          %591 = vmatprep.subr.mxu0 0.0
          %592 = vmatpush1.msra.mxu0 %v525
          %593 = vmatprep.subr.mxu0 0.0
          %594 = vmatpush1.msra.mxu0 %v528
          %595 = vmatprep.subr.mxu0 0.0
          %596 = vmatpush1.msra.mxu0 %v531
          %597 = vmatprep.subr.mxu0 0.0
          %598 = vmatpush1.msra.mxu0 %v534
          %599 = vmatprep.subr.mxu0 0.0
          %600 = vmatpush1.msra.mxu0 %v537
          %601 = vmatprep.subr.mxu0 0.0
          %602 = vmatpush1.msra.mxu0 %v540
          %603 = vmatprep.subr.mxu0 0.0
          %604 = vmatpush1.msra.mxu0 %v543
          %605 = vmatprep.subr.mxu0 0.0
          %606 = vmatpush1.msra.mxu0 %v546
          %607 = vmatprep.subr.mxu0 0.0
          %608 = vmatpush1.msra.mxu0 %v549
          %609 = vmatprep.subr.mxu0 0.0
          %610 = vmatpush1.msra.mxu0 %v552
          %611 = vmatprep.subr.mxu0 0.0
          %612 = vmatpush1.msra.mxu0 %v555
          %613 = vmatprep.subr.mxu0 0.0
          %614 = vmatpush1.msra.mxu0 %v558
          %615 = vmatprep.subr.mxu0 0.0
          %616 = vmatpush1.msra.mxu0 %v561
          %617 = vmatprep.subr.mxu0 0.0
          %618 = vmatpush1.msra.mxu0 %v564
          %619 = vmatprep.subr.mxu0 0.0
          %620 = vmatpush1.msra.mxu0 %v567
          %621 = vmatprep.subr.mxu0 0.0
          %622 = vmatpush1.msra.mxu0 %v570
          %623 = vmatprep.subr.mxu0 0.0
          %624 = vmatpush1.msra.mxu0 0.0
          %625 = vmatprep.subr.mxu0 0.0
          %626 = vmatpush1.msra.mxu0 0.0
          %627 = vmatprep.subr.mxu0 0.0
          %628 = vmatpush1.msra.mxu0 0.0
          %629 = vmatprep.subr.mxu0 0.0
          %630 = vmatpush1.msra.mxu0 0.0
          %631 = vmatprep.subr.mxu0 0.0
          %632 = vmatpush1.msra.mxu0 0.0
          %633 = vmatprep.subr.mxu0 0.0
          %634 = vmatpush1.msra.mxu0 0.0
          %635 = vmatprep.subr.mxu0 0.0
          %636 = vmatpush1.msra.mxu0 0.0
          %637 = vmatprep.subr.mxu0 0.0
          %638 = vmatpush1.msra.mxu0 0.0
          %639 = vmatprep.subr.mxu0 0.0
          %640 = vmatpush1.msra.mxu0 0.0
          %641 = vmatprep.subr.mxu0 0.0
          %642 = vmatpush1.msra.mxu0 0.0
          %643 = vmatprep.subr.mxu0 0.0
          %644 = vmatpush1.msra.mxu0 0.0
          %645 = vmatprep.subr.mxu0 0.0
          %646 = vmatpush1.msra.mxu0 0.0
          %647 = vmatprep.subr.mxu0 0.0
          %648 = vmatpush1.msra.mxu0 0.0
          %649 = vmatprep.subr.mxu0 0.0
          %650 = vmatpush1.msra.mxu0 0.0
          %651 = vmatprep.subr.mxu0 0.0
          %652 = vmatpush1.msra.mxu0 0.0
          %653 = vmatprep.subr.mxu0 0.0
          %654 = vmatpush1.msra.mxu0 0.0
          %655 = vmatprep.mubr.f32.mxu0 0.0
          %656 = vmatmul.mubr.f32.gmra.mrb[0].mxu0 %v587
          %v657 = vpop.f32.mrb[0].mxu0
          %v658 = vadd.f32 0.0, %v657
          %v659 = vpop.f32.mrb[0].mxu0
          %660 = vmatprep.mubr.f32.mxu0 0.0
          %661 = vmatmul.mubr.f32.gmra.mrb[0].mxu0 %v588
          %v662 = vpop.f32.mrb[0].mxu0
          %v663 = vadd.f32 0.0, %v662
          %v664 = vpop.f32.mrb[0].mxu0
          %665 = vmatprep.mubr.f32.mxu0 0.0
          %666 = vmatmul.mubr.f32.gmra.mrb[0].mxu0 %v589
          %v667 = vpop.f32.mrb[0].mxu0
          %v668 = vadd.f32 0.0, %v667
          %v669 = vpop.f32.mrb[0].mxu0
          %670 = vmatprep.mubr.f32.mxu0 0.0
          %671 = vmatmul.mubr.f32.gmra.mrb[0].mxu0 %v590
          %v672 = vpop.f32.mrb[0].mxu0
          %v673 = vadd.f32 0.0, %v672
          %v674 = vpop.f32.mrb[0].mxu0
          %675 = vdwg.mxu0
          %vm676 = vcmask 261120
          %v678 = vsel %vm676, %v571, 0
          %v681 = vsel %vm676, %v572, 0
          %v684 = vsel %vm676, %v573, 0
          %v687 = vsel %vm676, %v574, 0
          %v690 = vsel %vm676, %v575, 0
          %v693 = vsel %vm676, %v576, 0
          %v696 = vsel %vm676, %v577, 0
          %v699 = vsel %vm676, %v578, 0
          %v702 = vsel %vm676, %v579, 0
          %v705 = vsel %vm676, %v580, 0
          %v708 = vsel %vm676, %v581, 0
          %v711 = vsel %vm676, %v582, 0
          %v714 = vsel %vm676, %v583, 0
          %v717 = vsel %vm676, %v584, 0
          %v720 = vsel %vm676, %v585, 0
          %v723 = vsel %vm676, %v586, 0
          %725 = vmatprep.subr.mxu0 0.0
          %726 = vmatpush1.msra.mxu0 %v658
          %727 = vmatprep.subr.mxu0 0.0
          %728 = vmatpush1.msra.mxu0 %v663
          %729 = vmatprep.subr.mxu0 0.0
          %730 = vmatpush1.msra.mxu0 %v668
          %731 = vmatprep.subr.mxu0 0.0
          %732 = vmatpush1.msra.mxu0 %v673
          %733 = vmatprep.subr.mxu0 0.0
          %734 = vmatpush1.msra.mxu0 0.0
          %735 = vmatprep.subr.mxu0 0.0
          %736 = vmatpush1.msra.mxu0 0.0
          %737 = vmatprep.subr.mxu0 0.0
          %738 = vmatpush1.msra.mxu0 0.0
          %739 = vmatprep.subr.mxu0 0.0
          %740 = vmatpush1.msra.mxu0 0.0
          %741 = vmatprep.subr.mxu0 0.0
          %742 = vmatpush1.msra.mxu0 0.0
          %743 = vmatprep.subr.mxu0 0.0
          %744 = vmatpush1.msra.mxu0 0.0
          %745 = vmatprep.subr.mxu0 0.0
          %746 = vmatpush1.msra.mxu0 0.0
          %747 = vmatprep.subr.mxu0 0.0
          %748 = vmatpush1.msra.mxu0 0.0
          %749 = vmatprep.subr.mxu0 0.0
          %750 = vmatpush1.msra.mxu0 0.0
          %751 = vmatprep.subr.mxu0 0.0
          %752 = vmatpush1.msra.mxu0 0.0
          %753 = vmatprep.subr.mxu0 0.0
          %754 = vmatpush1.msra.mxu0 0.0
          %755 = vmatprep.subr.mxu0 0.0
          %756 = vmatpush1.msra.mxu0 0.0
          %757 = vmatprep.subr.mxu0 0.0
          %758 = vmatpush1.msra.mxu0 0.0
          %759 = vmatprep.subr.mxu0 0.0
          %760 = vmatpush1.msra.mxu0 0.0
          %761 = vmatprep.subr.mxu0 0.0
          %762 = vmatpush1.msra.mxu0 0.0
          %763 = vmatprep.subr.mxu0 0.0
          %764 = vmatpush1.msra.mxu0 0.0
          %765 = vmatprep.subr.mxu0 0.0
          %766 = vmatpush1.msra.mxu0 0.0
          %767 = vmatprep.subr.mxu0 0.0
          %768 = vmatpush1.msra.mxu0 0.0
          %769 = vmatprep.subr.mxu0 0.0
          %770 = vmatpush1.msra.mxu0 0.0
          %771 = vmatprep.subr.mxu0 0.0
          %772 = vmatpush1.msra.mxu0 0.0
          %773 = vmatprep.subr.mxu0 0.0
          %774 = vmatpush1.msra.mxu0 0.0
          %775 = vmatprep.subr.mxu0 0.0
          %776 = vmatpush1.msra.mxu0 0.0
          %777 = vmatprep.subr.mxu0 0.0
          %778 = vmatpush1.msra.mxu0 0.0
          %779 = vmatprep.subr.mxu0 0.0
          %780 = vmatpush1.msra.mxu0 0.0
          %781 = vmatprep.subr.mxu0 0.0
          %782 = vmatpush1.msra.mxu0 0.0
          %783 = vmatprep.subr.mxu0 0.0
          %784 = vmatpush1.msra.mxu0 0.0
          %785 = vmatprep.subr.mxu0 0.0
          %786 = vmatpush1.msra.mxu0 0.0
          %787 = vmatprep.subr.mxu0 0.0
          %788 = vmatpush1.msra.mxu0 0.0
          %789 = vmatprep.mubr.f32.mxu0 0.0
          %790 = vmatmul.mubr.f32.gmra.mrb[0].mxu0 %v678
          %v791 = vpop.f32.mrb[0].mxu0
          %v792 = vadd.f32 0.0, %v791
          %v793 = vpop.f32.mrb[0].mxu0
          %794 = vmatprep.mubr.f32.mxu0 0.0
          %795 = vmatmul.mubr.f32.gmra.mrb[0].mxu0 %v681
          %v796 = vpop.f32.mrb[0].mxu0
          %v797 = vadd.f32 0.0, %v796
          %v798 = vpop.f32.mrb[0].mxu0
          %799 = vmatprep.mubr.f32.mxu0 0.0
          %800 = vmatmul.mubr.f32.gmra.mrb[0].mxu0 %v684
          %v801 = vpop.f32.mrb[0].mxu0
          %v802 = vadd.f32 0.0, %v801
          %v803 = vpop.f32.mrb[0].mxu0
          %804 = vmatprep.mubr.f32.mxu0 0.0
          %805 = vmatmul.mubr.f32.gmra.mrb[0].mxu0 %v687
          %v806 = vpop.f32.mrb[0].mxu0
          %v807 = vadd.f32 0.0, %v806
          %v808 = vpop.f32.mrb[0].mxu0
          %809 = vmatprep.mubr.f32.mxu0 0.0
          %810 = vmatmul.mubr.f32.gmra.mrb[0].mxu0 %v690
          %v811 = vpop.f32.mrb[0].mxu0
          %v812 = vadd.f32 0.0, %v811
          %v813 = vpop.f32.mrb[0].mxu0
          %814 = vmatprep.mubr.f32.mxu0 0.0
          %815 = vmatmul.mubr.f32.gmra.mrb[0].mxu0 %v693
          %v816 = vpop.f32.mrb[0].mxu0
          %v817 = vadd.f32 0.0, %v816
          %v818 = vpop.f32.mrb[0].mxu0
          %819 = vmatprep.mubr.f32.mxu0 0.0
          %820 = vmatmul.mubr.f32.gmra.mrb[0].mxu0 %v696
          %v821 = vpop.f32.mrb[0].mxu0
          %v822 = vadd.f32 0.0, %v821
          %v823 = vpop.f32.mrb[0].mxu0
          %824 = vmatprep.mubr.f32.mxu0 0.0
          %825 = vmatmul.mubr.f32.gmra.mrb[0].mxu0 %v699
          %v826 = vpop.f32.mrb[0].mxu0
          %v827 = vadd.f32 0.0, %v826
          %v828 = vpop.f32.mrb[0].mxu0
          %829 = vmatprep.mubr.f32.mxu0 0.0
          %830 = vmatmul.mubr.f32.gmra.mrb[0].mxu0 %v702
          %v831 = vpop.f32.mrb[0].mxu0
          %v832 = vadd.f32 0.0, %v831
          %v833 = vpop.f32.mrb[0].mxu0
          %834 = vmatprep.mubr.f32.mxu0 0.0
          %835 = vmatmul.mubr.f32.gmra.mrb[0].mxu0 %v705
          %v836 = vpop.f32.mrb[0].mxu0
          %v837 = vadd.f32 0.0, %v836
          %v838 = vpop.f32.mrb[0].mxu0
          %839 = vmatprep.mubr.f32.mxu0 0.0
          %840 = vmatmul.mubr.f32.gmra.mrb[0].mxu0 %v708
          %v841 = vpop.f32.mrb[0].mxu0
          %v842 = vadd.f32 0.0, %v841
          %v843 = vpop.f32.mrb[0].mxu0
          %844 = vmatprep.mubr.f32.mxu0 0.0
          %845 = vmatmul.mubr.f32.gmra.mrb[0].mxu0 %v711
          %v846 = vpop.f32.mrb[0].mxu0
          %v847 = vadd.f32 0.0, %v846
          %v848 = vpop.f32.mrb[0].mxu0
          %849 = vmatprep.mubr.f32.mxu0 0.0
          %850 = vmatmul.mubr.f32.gmra.mrb[0].mxu0 %v714
          %v851 = vpop.f32.mrb[0].mxu0
          %v852 = vadd.f32 0.0, %v851
          %v853 = vpop.f32.mrb[0].mxu0
          %854 = vmatprep.mubr.f32.mxu0 0.0
          %855 = vmatmul.mubr.f32.gmra.mrb[0].mxu0 %v717
          %v856 = vpop.f32.mrb[0].mxu0
          %v857 = vadd.f32 0.0, %v856
          %v858 = vpop.f32.mrb[0].mxu0
          %859 = vmatprep.mubr.f32.mxu0 0.0
          %860 = vmatmul.mubr.f32.gmra.mrb[0].mxu0 %v720
          %v861 = vpop.f32.mrb[0].mxu0
          %v862 = vadd.f32 0.0, %v861
          %v863 = vpop.f32.mrb[0].mxu0
          %864 = vmatprep.mubr.f32.mxu0 0.0
          %865 = vmatmul.mubr.f32.gmra.mrb[0].mxu0 %v723
          %v866 = vpop.f32.mrb[0].mxu0
          %v867 = vadd.f32 0.0, %v866
          %v868 = vpop.f32.mrb[0].mxu0
          %869 = vdwg.mxu0
          %871 = vset.pattern.permute.xlu0 0
          %872 = vperm.xlu0 %871, %v792
          %v873 = vpop.permute.xlu0 %872
          %876 = vset.pattern.permute.xlu0 0
          %877 = vperm.xlu0 %876, %v797
          %v878 = vpop.permute.xlu0 %877
          %881 = vset.pattern.permute.xlu0 0
          %882 = vperm.xlu0 %881, %v802
          %v883 = vpop.permute.xlu0 %882
          %886 = vset.pattern.permute.xlu0 0
          %887 = vperm.xlu0 %886, %v807
          %v888 = vpop.permute.xlu0 %887
          %891 = vset.pattern.permute.xlu0 0
          %892 = vperm.xlu0 %891, %v812
          %v893 = vpop.permute.xlu0 %892
          %896 = vset.pattern.permute.xlu0 0
          %897 = vperm.xlu0 %896, %v817
          %v898 = vpop.permute.xlu0 %897
          %901 = vset.pattern.permute.xlu0 0
          %902 = vperm.xlu0 %901, %v822
          %v903 = vpop.permute.xlu0 %902
          %906 = vset.pattern.permute.xlu0 0
          %907 = vperm.xlu0 %906, %v827
          %v908 = vpop.permute.xlu0 %907
          %911 = vset.pattern.permute.xlu0 0
          %912 = vperm.xlu0 %911, %v832
          %v913 = vpop.permute.xlu0 %912
          %916 = vset.pattern.permute.xlu0 0
          %917 = vperm.xlu0 %916, %v837
          %v918 = vpop.permute.xlu0 %917
          %921 = vset.pattern.permute.xlu0 0
          %922 = vperm.xlu0 %921, %v842
          %v923 = vpop.permute.xlu0 %922
          %926 = vset.pattern.permute.xlu0 0
          %927 = vperm.xlu0 %926, %v847
          %v928 = vpop.permute.xlu0 %927
          %931 = vset.pattern.permute.xlu0 0
          %932 = vperm.xlu0 %931, %v852
          %v933 = vpop.permute.xlu0 %932
          %936 = vset.pattern.permute.xlu0 0
          %937 = vperm.xlu0 %936, %v857
          %v938 = vpop.permute.xlu0 %937
          %941 = vset.pattern.permute.xlu0 0
          %942 = vperm.xlu0 %941, %v862
          %v943 = vpop.permute.xlu0 %942
          %946 = vset.pattern.permute.xlu0 0
          %947 = vperm.xlu0 %946, %v867
          %v948 = vpop.permute.xlu0 %947
          %v950 = vsub.f32 %v491, %v873
          %v951 = vsub.f32 %v492, %v873
          %v952 = vsub.f32 %v493, %v878
          %v953 = vsub.f32 %v494, %v878
          %v954 = vsub.f32 %v495, %v883
          %v955 = vsub.f32 %v496, %v883
          %v956 = vsub.f32 %v497, %v888
          %v957 = vsub.f32 %v498, %v888
          %v958 = vsub.f32 %v499, %v893
          %v959 = vsub.f32 %v500, %v893
          %v960 = vsub.f32 %v501, %v898
          %v961 = vsub.f32 %v502, %v898
          %v962 = vsub.f32 %v503, %v903
          %v963 = vsub.f32 %v504, %v903
          %v964 = vsub.f32 %v505, %v908
          %v965 = vsub.f32 %v506, %v908
          %v966 = vsub.f32 %v507, %v913
          %v967 = vsub.f32 %v508, %v913
          %v968 = vsub.f32 %v509, %v918
          %v969 = vsub.f32 %v510, %v918
          %v970 = vsub.f32 %v511, %v923
          %v971 = vsub.f32 %v512, %v923
          %v972 = vsub.f32 %v513, %v928
          %v973 = vsub.f32 %v514, %v928
          %v974 = vsub.f32 %v515, %v933
          %v975 = vsub.f32 %v516, %v933
          %v976 = vsub.f32 %v517, %v938
          %v977 = vsub.f32 %v518, %v938
          %v978 = vsub.f32 %v519, %v943
          %v979 = vsub.f32 %v520, %v943
          %v980 = vsub.f32 %v521, %v948
          %v981 = vsub.f32 %v522, %v948
          %v982 = vmul.f32 %v950, %v950
          %v983 = vmul.f32 %v951, %v951
          %v984 = vmul.f32 %v952, %v952
          %v985 = vmul.f32 %v953, %v953
          %v986 = vmul.f32 %v954, %v954
          %v987 = vmul.f32 %v955, %v955
          %v988 = vmul.f32 %v956, %v956
          %v989 = vmul.f32 %v957, %v957
          %v990 = vmul.f32 %v958, %v958
          %v991 = vmul.f32 %v959, %v959
          %v992 = vmul.f32 %v960, %v960
          %v993 = vmul.f32 %v961, %v961
          %v994 = vmul.f32 %v962, %v962
          %v995 = vmul.f32 %v963, %v963
          %v996 = vmul.f32 %v964, %v964
          %v997 = vmul.f32 %v965, %v965
          %v998 = vmul.f32 %v966, %v966
          %v999 = vmul.f32 %v967, %v967
          %v1000 = vmul.f32 %v968, %v968
          %v1001 = vmul.f32 %v969, %v969
          %v1002 = vmul.f32 %v970, %v970
          %v1003 = vmul.f32 %v971, %v971
          %v1004 = vmul.f32 %v972, %v972
          %v1005 = vmul.f32 %v973, %v973
          %v1006 = vmul.f32 %v974, %v974
          %v1007 = vmul.f32 %v975, %v975
          %v1008 = vmul.f32 %v976, %v976
          %v1009 = vmul.f32 %v977, %v977
          %v1010 = vmul.f32 %v978, %v978
          %v1011 = vmul.f32 %v979, %v979
          %v1012 = vmul.f32 %v980, %v980
          %v1013 = vmul.f32 %v981, %v981
          %v1014 = vadd.f32 %v982, %v983
          %1015 = vadd.xlane.f32.xlu0 %v1014
          %v1016 = vpop.xlane.xlu0 %1015
          %v1017 = vadd.f32 %v984, %v985
          %1018 = vadd.xlane.f32.xlu0 %v1017
          %v1019 = vpop.xlane.xlu0 %1018
          %v1020 = vadd.f32 %v986, %v987
          %1021 = vadd.xlane.f32.xlu0 %v1020
          %v1022 = vpop.xlane.xlu0 %1021
          %v1023 = vadd.f32 %v988, %v989
          %1024 = vadd.xlane.f32.xlu0 %v1023
          %v1025 = vpop.xlane.xlu0 %1024
          %v1026 = vadd.f32 %v990, %v991
          %1027 = vadd.xlane.f32.xlu0 %v1026
          %v1028 = vpop.xlane.xlu0 %1027
          %v1029 = vadd.f32 %v992, %v993
          %1030 = vadd.xlane.f32.xlu0 %v1029
          %v1031 = vpop.xlane.xlu0 %1030
          %v1032 = vadd.f32 %v994, %v995
          %1033 = vadd.xlane.f32.xlu0 %v1032
          %v1034 = vpop.xlane.xlu0 %1033
          %v1035 = vadd.f32 %v996, %v997
          %1036 = vadd.xlane.f32.xlu0 %v1035
          %v1037 = vpop.xlane.xlu0 %1036
          %v1038 = vadd.f32 %v998, %v999
          %1039 = vadd.xlane.f32.xlu0 %v1038
          %v1040 = vpop.xlane.xlu0 %1039
          %v1041 = vadd.f32 %v1000, %v1001
          %1042 = vadd.xlane.f32.xlu0 %v1041
          %v1043 = vpop.xlane.xlu0 %1042
          %v1044 = vadd.f32 %v1002, %v1003
          %1045 = vadd.xlane.f32.xlu0 %v1044
          %v1046 = vpop.xlane.xlu0 %1045
          %v1047 = vadd.f32 %v1004, %v1005
          %1048 = vadd.xlane.f32.xlu0 %v1047
          %v1049 = vpop.xlane.xlu0 %1048
          %v1050 = vadd.f32 %v1006, %v1007
          %1051 = vadd.xlane.f32.xlu0 %v1050
          %v1052 = vpop.xlane.xlu0 %1051
          %v1053 = vadd.f32 %v1008, %v1009
          %1054 = vadd.xlane.f32.xlu0 %v1053
          %v1055 = vpop.xlane.xlu0 %1054
          %v1056 = vadd.f32 %v1010, %v1011
          %1057 = vadd.xlane.f32.xlu0 %v1056
          %v1058 = vpop.xlane.xlu0 %1057
          %v1059 = vadd.f32 %v1012, %v1013
          %1060 = vadd.xlane.f32.xlu0 %v1059
          %v1061 = vpop.xlane.xlu0 %1060
          %1062 = vmatprep.subr.mxu0 0.0
          %1063 = vmatpush1.msra.mxu0 %v1016
          %1064 = vmatprep.subr.mxu0 0.0
          %1065 = vmatpush1.msra.mxu0 %v1019
          %1066 = vmatprep.subr.mxu0 0.0
          %1067 = vmatpush1.msra.mxu0 %v1022
          %1068 = vmatprep.subr.mxu0 0.0
          %1069 = vmatpush1.msra.mxu0 %v1025
          %1070 = vmatprep.subr.mxu0 0.0
          %1071 = vmatpush1.msra.mxu0 %v1028
          %1072 = vmatprep.subr.mxu0 0.0
          %1073 = vmatpush1.msra.mxu0 %v1031
          %1074 = vmatprep.subr.mxu0 0.0
          %1075 = vmatpush1.msra.mxu0 %v1034
          %1076 = vmatprep.subr.mxu0 0.0
          %1077 = vmatpush1.msra.mxu0 %v1037
          %1078 = vmatprep.subr.mxu0 0.0
          %1079 = vmatpush1.msra.mxu0 %v1040
          %1080 = vmatprep.subr.mxu0 0.0
          %1081 = vmatpush1.msra.mxu0 %v1043
          %1082 = vmatprep.subr.mxu0 0.0
          %1083 = vmatpush1.msra.mxu0 %v1046
          %1084 = vmatprep.subr.mxu0 0.0
          %1085 = vmatpush1.msra.mxu0 %v1049
          %1086 = vmatprep.subr.mxu0 0.0
          %1087 = vmatpush1.msra.mxu0 %v1052
          %1088 = vmatprep.subr.mxu0 0.0
          %1089 = vmatpush1.msra.mxu0 %v1055
          %1090 = vmatprep.subr.mxu0 0.0
          %1091 = vmatpush1.msra.mxu0 %v1058
          %1092 = vmatprep.subr.mxu0 0.0
          %1093 = vmatpush1.msra.mxu0 %v1061
          %1094 = vmatprep.subr.mxu0 0.0
          %1095 = vmatpush1.msra.mxu0 0.0
          %1096 = vmatprep.subr.mxu0 0.0
          %1097 = vmatpush1.msra.mxu0 0.0
          %1098 = vmatprep.subr.mxu0 0.0
          %1099 = vmatpush1.msra.mxu0 0.0
          %1100 = vmatprep.subr.mxu0 0.0
          %1101 = vmatpush1.msra.mxu0 0.0
          %1102 = vmatprep.subr.mxu0 0.0
          %1103 = vmatpush1.msra.mxu0 0.0
          %1104 = vmatprep.subr.mxu0 0.0
          %1105 = vmatpush1.msra.mxu0 0.0
          %1106 = vmatprep.subr.mxu0 0.0
          %1107 = vmatpush1.msra.mxu0 0.0
          %1108 = vmatprep.subr.mxu0 0.0
          %1109 = vmatpush1.msra.mxu0 0.0
          %1110 = vmatprep.subr.mxu0 0.0
          %1111 = vmatpush1.msra.mxu0 0.0
          %1112 = vmatprep.subr.mxu0 0.0
          %1113 = vmatpush1.msra.mxu0 0.0
          %1114 = vmatprep.subr.mxu0 0.0
          %1115 = vmatpush1.msra.mxu0 0.0
          %1116 = vmatprep.subr.mxu0 0.0
          %1117 = vmatpush1.msra.mxu0 0.0
          %1118 = vmatprep.subr.mxu0 0.0
          %1119 = vmatpush1.msra.mxu0 0.0
          %1120 = vmatprep.subr.mxu0 0.0
          %1121 = vmatpush1.msra.mxu0 0.0
          %1122 = vmatprep.subr.mxu0 0.0
          %1123 = vmatpush1.msra.mxu0 0.0
          %1124 = vmatprep.subr.mxu0 0.0
          %1125 = vmatpush1.msra.mxu0 0.0
          %1126 = vmatprep.mubr.f32.mxu0 0.0
          %1127 = vmatmul.mubr.f32.gmra.mrb[0].mxu0 %v587
          %v1128 = vpop.f32.mrb[0].mxu0
          %v1129 = vadd.f32 0.0, %v1128
          %v1130 = vpop.f32.mrb[0].mxu0
          %1131 = vmatprep.mubr.f32.mxu0 0.0
          %1132 = vmatmul.mubr.f32.gmra.mrb[0].mxu0 %v588
          %v1133 = vpop.f32.mrb[0].mxu0
          %v1134 = vadd.f32 0.0, %v1133
          %v1135 = vpop.f32.mrb[0].mxu0
          %1136 = vmatprep.mubr.f32.mxu0 0.0
          %1137 = vmatmul.mubr.f32.gmra.mrb[0].mxu0 %v589
          %v1138 = vpop.f32.mrb[0].mxu0
          %v1139 = vadd.f32 0.0, %v1138
          %v1140 = vpop.f32.mrb[0].mxu0
          %1141 = vmatprep.mubr.f32.mxu0 0.0
          %1142 = vmatmul.mubr.f32.gmra.mrb[0].mxu0 %v590
          %v1143 = vpop.f32.mrb[0].mxu0
          %v1144 = vadd.f32 0.0, %v1143
          %v1145 = vpop.f32.mrb[0].mxu0
          %1146 = vdwg.mxu0
          %1147 = vmatprep.subr.mxu0 0.0
          %1148 = vmatpush1.msra.mxu0 %v1129
          %1149 = vmatprep.subr.mxu0 0.0
          %1150 = vmatpush1.msra.mxu0 %v1134
          %1151 = vmatprep.subr.mxu0 0.0
          %1152 = vmatpush1.msra.mxu0 %v1139
          %1153 = vmatprep.subr.mxu0 0.0
          %1154 = vmatpush1.msra.mxu0 %v1144
          %1155 = vmatprep.subr.mxu0 0.0
          %1156 = vmatpush1.msra.mxu0 0.0
          %1157 = vmatprep.subr.mxu0 0.0
          %1158 = vmatpush1.msra.mxu0 0.0
          %1159 = vmatprep.subr.mxu0 0.0
          %1160 = vmatpush1.msra.mxu0 0.0
          %1161 = vmatprep.subr.mxu0 0.0
          %1162 = vmatpush1.msra.mxu0 0.0
          %1163 = vmatprep.subr.mxu0 0.0
          %1164 = vmatpush1.msra.mxu0 0.0
          %1165 = vmatprep.subr.mxu0 0.0
          %1166 = vmatpush1.msra.mxu0 0.0
          %1167 = vmatprep.subr.mxu0 0.0
          %1168 = vmatpush1.msra.mxu0 0.0
          %1169 = vmatprep.subr.mxu0 0.0
          %1170 = vmatpush1.msra.mxu0 0.0
          %1171 = vmatprep.subr.mxu0 0.0
          %1172 = vmatpush1.msra.mxu0 0.0
          %1173 = vmatprep.subr.mxu0 0.0
          %1174 = vmatpush1.msra.mxu0 0.0
          %1175 = vmatprep.subr.mxu0 0.0
          %1176 = vmatpush1.msra.mxu0 0.0
          %1177 = vmatprep.subr.mxu0 0.0
          %1178 = vmatpush1.msra.mxu0 0.0
          %1179 = vmatprep.subr.mxu0 0.0
          %1180 = vmatpush1.msra.mxu0 0.0
          %1181 = vmatprep.subr.mxu0 0.0
          %1182 = vmatpush1.msra.mxu0 0.0
          %1183 = vmatprep.subr.mxu0 0.0
          %1184 = vmatpush1.msra.mxu0 0.0
          %1185 = vmatprep.subr.mxu0 0.0
          %1186 = vmatpush1.msra.mxu0 0.0
          %1187 = vmatprep.subr.mxu0 0.0
          %1188 = vmatpush1.msra.mxu0 0.0
          %1189 = vmatprep.subr.mxu0 0.0
          %1190 = vmatpush1.msra.mxu0 0.0
          %1191 = vmatprep.subr.mxu0 0.0
          %1192 = vmatpush1.msra.mxu0 0.0
          %1193 = vmatprep.subr.mxu0 0.0
          %1194 = vmatpush1.msra.mxu0 0.0
          %1195 = vmatprep.subr.mxu0 0.0
          %1196 = vmatpush1.msra.mxu0 0.0
          %1197 = vmatprep.subr.mxu0 0.0
          %1198 = vmatpush1.msra.mxu0 0.0
          %1199 = vmatprep.subr.mxu0 0.0
          %1200 = vmatpush1.msra.mxu0 0.0
          %1201 = vmatprep.subr.mxu0 0.0
          %1202 = vmatpush1.msra.mxu0 0.0
          %1203 = vmatprep.subr.mxu0 0.0
          %1204 = vmatpush1.msra.mxu0 0.0
          %1205 = vmatprep.subr.mxu0 0.0
          %1206 = vmatpush1.msra.mxu0 0.0
          %1207 = vmatprep.subr.mxu0 0.0
          %1208 = vmatpush1.msra.mxu0 0.0
          %1209 = vmatprep.subr.mxu0 0.0
          %1210 = vmatpush1.msra.mxu0 0.0
          %1211 = vmatprep.mubr.f32.mxu0 0.0
          %1212 = vmatmul.mubr.f32.gmra.mrb[0].mxu0 %v678
          %v1213 = vpop.f32.mrb[0].mxu0
          %v1214 = vadd.f32 1e-06, %v1213
          %v1215 = vpop.f32.mrb[0].mxu0
          %1216 = vmatprep.mubr.f32.mxu0 0.0
          %1217 = vmatmul.mubr.f32.gmra.mrb[0].mxu0 %v681
          %v1218 = vpop.f32.mrb[0].mxu0
          %v1219 = vadd.f32 1e-06, %v1218
          %v1220 = vpop.f32.mrb[0].mxu0
          %1221 = vmatprep.mubr.f32.mxu0 0.0
          %1222 = vmatmul.mubr.f32.gmra.mrb[0].mxu0 %v684
          %v1223 = vpop.f32.mrb[0].mxu0
          %v1224 = vadd.f32 1e-06, %v1223
          %v1225 = vpop.f32.mrb[0].mxu0
          %1226 = vmatprep.mubr.f32.mxu0 0.0
          %1227 = vmatmul.mubr.f32.gmra.mrb[0].mxu0 %v687
          %v1228 = vpop.f32.mrb[0].mxu0
          %v1229 = vadd.f32 1e-06, %v1228
          %v1230 = vpop.f32.mrb[0].mxu0
          %1231 = vmatprep.mubr.f32.mxu0 0.0
          %1232 = vmatmul.mubr.f32.gmra.mrb[0].mxu0 %v690
          %v1233 = vpop.f32.mrb[0].mxu0
          %v1234 = vadd.f32 1e-06, %v1233
          %v1235 = vpop.f32.mrb[0].mxu0
          %1236 = vmatprep.mubr.f32.mxu0 0.0
          %1237 = vmatmul.mubr.f32.gmra.mrb[0].mxu0 %v693
          %v1238 = vpop.f32.mrb[0].mxu0
          %v1239 = vadd.f32 1e-06, %v1238
          %v1240 = vpop.f32.mrb[0].mxu0
          %1241 = vmatprep.mubr.f32.mxu0 0.0
          %1242 = vmatmul.mubr.f32.gmra.mrb[0].mxu0 %v696
          %v1243 = vpop.f32.mrb[0].mxu0
          %v1244 = vadd.f32 1e-06, %v1243
          %v1245 = vpop.f32.mrb[0].mxu0
          %1246 = vmatprep.mubr.f32.mxu0 0.0
          %1247 = vmatmul.mubr.f32.gmra.mrb[0].mxu0 %v699
          %v1248 = vpop.f32.mrb[0].mxu0
          %v1249 = vadd.f32 1e-06, %v1248
          %v1250 = vpop.f32.mrb[0].mxu0
          %1251 = vmatprep.mubr.f32.mxu0 0.0
          %1252 = vmatmul.mubr.f32.gmra.mrb[0].mxu0 %v702
          %v1253 = vpop.f32.mrb[0].mxu0
          %v1254 = vadd.f32 1e-06, %v1253
          %v1255 = vpop.f32.mrb[0].mxu0
          %1256 = vmatprep.mubr.f32.mxu0 0.0
          %1257 = vmatmul.mubr.f32.gmra.mrb[0].mxu0 %v705
          %v1258 = vpop.f32.mrb[0].mxu0
          %v1259 = vadd.f32 1e-06, %v1258
          %v1260 = vpop.f32.mrb[0].mxu0
          %1261 = vmatprep.mubr.f32.mxu0 0.0
          %1262 = vmatmul.mubr.f32.gmra.mrb[0].mxu0 %v708
          %v1263 = vpop.f32.mrb[0].mxu0
          %v1264 = vadd.f32 1e-06, %v1263
          %v1265 = vpop.f32.mrb[0].mxu0
          %1266 = vmatprep.mubr.f32.mxu0 0.0
          %1267 = vmatmul.mubr.f32.gmra.mrb[0].mxu0 %v711
          %v1268 = vpop.f32.mrb[0].mxu0
          %v1269 = vadd.f32 1e-06, %v1268
          %v1270 = vpop.f32.mrb[0].mxu0
          %1271 = vmatprep.mubr.f32.mxu0 0.0
          %1272 = vmatmul.mubr.f32.gmra.mrb[0].mxu0 %v714
          %v1273 = vpop.f32.mrb[0].mxu0
          %v1274 = vadd.f32 1e-06, %v1273
          %v1275 = vpop.f32.mrb[0].mxu0
          %1276 = vmatprep.mubr.f32.mxu0 0.0
          %1277 = vmatmul.mubr.f32.gmra.mrb[0].mxu0 %v717
          %v1278 = vpop.f32.mrb[0].mxu0
          %v1279 = vadd.f32 1e-06, %v1278
          %v1280 = vpop.f32.mrb[0].mxu0
          %1281 = vmatprep.mubr.f32.mxu0 0.0
          %1282 = vmatmul.mubr.f32.gmra.mrb[0].mxu0 %v720
          %v1283 = vpop.f32.mrb[0].mxu0
          %v1284 = vadd.f32 1e-06, %v1283
          %v1285 = vpop.f32.mrb[0].mxu0
          %1286 = vmatprep.mubr.f32.mxu0 0.0
          %1287 = vmatmul.mubr.f32.gmra.mrb[0].mxu0 %v723
          %v1288 = vpop.f32.mrb[0].mxu0
          %v1289 = vadd.f32 1e-06, %v1288
          %v1290 = vpop.f32.mrb[0].mxu0
          %1291 = vdwg.mxu0
          %v1292 = vrsqrt.pop %v1214
          %v1293 = vrsqrt.pop %v1219
          %v1294 = vrsqrt.pop %v1224
          %v1295 = vrsqrt.pop %v1229
          %v1296 = vrsqrt.pop %v1234
          %v1297 = vrsqrt.pop %v1239
          %v1298 = vrsqrt.pop %v1244
          %v1299 = vrsqrt.pop %v1249
          %v1300 = vrsqrt.pop %v1254
          %v1301 = vrsqrt.pop %v1259
          %v1302 = vrsqrt.pop %v1264
          %v1303 = vrsqrt.pop %v1269
          %v1304 = vrsqrt.pop %v1274
          %v1305 = vrsqrt.pop %v1279
          %v1306 = vrsqrt.pop %v1284
          %v1307 = vrsqrt.pop %v1289
          %v1308 = vld [vmem:[%s2] sm:$0xff]
          %v1309 = vld [vmem:[%s2 + $0x8] sm:$0xff]
          %v1310 = vld [vmem:[%s2 + $0x10] sm:$0xff]
          %v1311 = vld [vmem:[%s2 + $0x18] sm:$0xff]
          %v1312 = vld [vmem:[%s2 + $0x20] sm:$0xff]
          %v1313 = vld [vmem:[%s2 + $0x28] sm:$0xff]
          %v1314 = vld [vmem:[%s2 + $0x30] sm:$0xff]
          %v1315 = vld [vmem:[%s2 + $0x38] sm:$0xff]
          %v1316 = vld [vmem:[%s2 + $0x40] sm:$0xff]
          %v1317 = vld [vmem:[%s2 + $0x48] sm:$0xff]
          %v1318 = vld [vmem:[%s2 + $0x50] sm:$0xff]
          %v1319 = vld [vmem:[%s2 + $0x58] sm:$0xff]
          %v1320 = vld [vmem:[%s2 + $0x60] sm:$0xff]
          %v1321 = vld [vmem:[%s2 + $0x68] sm:$0xff]
          %v1322 = vld [vmem:[%s2 + $0x70] sm:$0xff]
          %v1323 = vld [vmem:[%s2 + $0x78] sm:$0xff]
          %v1324 = vmul.f32 %v1292, %v1308
          %v1325 = vmul.f32 %v1293, %v1309
          %v1326 = vmul.f32 %v1294, %v1310
          %v1327 = vmul.f32 %v1295, %v1311
          %v1328 = vmul.f32 %v1296, %v1312
          %v1329 = vmul.f32 %v1297, %v1313
          %v1330 = vmul.f32 %v1298, %v1314
          %v1331 = vmul.f32 %v1299, %v1315
          %v1332 = vmul.f32 %v1300, %v1316
          %v1333 = vmul.f32 %v1301, %v1317
          %v1334 = vmul.f32 %v1302, %v1318
          %v1335 = vmul.f32 %v1303, %v1319
          %v1336 = vmul.f32 %v1304, %v1320
          %v1337 = vmul.f32 %v1305, %v1321
          %v1338 = vmul.f32 %v1306, %v1322
          %v1339 = vmul.f32 %v1307, %v1323
          %v1340 = vld [vmem:[%s3] sm:$0xff]
          %v1341 = vld [vmem:[%s3 + $0x8] sm:$0xff]
          %v1342 = vld [vmem:[%s3 + $0x10] sm:$0xff]
          %v1343 = vld [vmem:[%s3 + $0x18] sm:$0xff]
          %v1344 = vld [vmem:[%s3 + $0x20] sm:$0xff]
          %v1345 = vld [vmem:[%s3 + $0x28] sm:$0xff]
          %v1346 = vld [vmem:[%s3 + $0x30] sm:$0xff]
          %v1347 = vld [vmem:[%s3 + $0x38] sm:$0xff]
          %v1348 = vld [vmem:[%s3 + $0x40] sm:$0xff]
          %v1349 = vld [vmem:[%s3 + $0x48] sm:$0xff]
          %v1350 = vld [vmem:[%s3 + $0x50] sm:$0xff]
          %v1351 = vld [vmem:[%s3 + $0x58] sm:$0xff]
          %v1352 = vld [vmem:[%s3 + $0x60] sm:$0xff]
          %v1353 = vld [vmem:[%s3 + $0x68] sm:$0xff]
          %v1354 = vld [vmem:[%s3 + $0x70] sm:$0xff]
          %v1355 = vld [vmem:[%s3 + $0x78] sm:$0xff]
          %v1356 = vmul.f32 %v792, %v1324
          %v1357 = vmul.f32 %v797, %v1325
          %v1358 = vmul.f32 %v802, %v1326
          %v1359 = vmul.f32 %v807, %v1327
          %v1360 = vmul.f32 %v812, %v1328
          %v1361 = vmul.f32 %v817, %v1329
          %v1362 = vmul.f32 %v822, %v1330
          %v1363 = vmul.f32 %v827, %v1331
          %v1364 = vmul.f32 %v832, %v1332
          %v1365 = vmul.f32 %v837, %v1333
          %v1366 = vmul.f32 %v842, %v1334
          %v1367 = vmul.f32 %v847, %v1335
          %v1368 = vmul.f32 %v852, %v1336
          %v1369 = vmul.f32 %v857, %v1337
          %v1370 = vmul.f32 %v862, %v1338
          %v1371 = vmul.f32 %v867, %v1339
          %v1372 = vsub.f32 %v1340, %v1356
          %v1373 = vsub.f32 %v1341, %v1357
          %v1374 = vsub.f32 %v1342, %v1358
          %v1375 = vsub.f32 %v1343, %v1359
          %v1376 = vsub.f32 %v1344, %v1360
          %v1377 = vsub.f32 %v1345, %v1361
          %v1378 = vsub.f32 %v1346, %v1362
          %v1379 = vsub.f32 %v1347, %v1363
          %v1380 = vsub.f32 %v1348, %v1364
          %v1381 = vsub.f32 %v1349, %v1365
          %v1382 = vsub.f32 %v1350, %v1366
          %v1383 = vsub.f32 %v1351, %v1367
          %v1384 = vsub.f32 %v1352, %v1368
          %v1385 = vsub.f32 %v1353, %v1369
          %v1386 = vsub.f32 %v1354, %v1370
          %v1387 = vsub.f32 %v1355, %v1371
          %vm1388 = vcmask 7168
          %1389 = vst.msk [vmem:[#allocation4] sm:$0xff] %vm1388, %v1324
          %1390 = vst.msk [vmem:[#allocation4 + $0x8] sm:$0xff] %vm1388, %v1325
          %1391 = vst.msk [vmem:[#allocation4 + $0x10] sm:$0xff] %vm1388, %v1326
          %1392 = vst.msk [vmem:[#allocation4 + $0x18] sm:$0xff] %vm1388, %v1327
          %1393 = vst.msk [vmem:[#allocation4 + $0x20] sm:$0xff] %vm1388, %v1328
          %1394 = vst.msk [vmem:[#allocation4 + $0x28] sm:$0xff] %vm1388, %v1329
          %1395 = vst.msk [vmem:[#allocation4 + $0x30] sm:$0xff] %vm1388, %v1330
          %1396 = vst.msk [vmem:[#allocation4 + $0x38] sm:$0xff] %vm1388, %v1331
          %1397 = vst.msk [vmem:[#allocation4 + $0x40] sm:$0xff] %vm1388, %v1332
          %1398 = vst.msk [vmem:[#allocation4 + $0x48] sm:$0xff] %vm1388, %v1333
          %1399 = vst.msk [vmem:[#allocation4 + $0x50] sm:$0xff] %vm1388, %v1334
          %1400 = vst.msk [vmem:[#allocation4 + $0x58] sm:$0xff] %vm1388, %v1335
          %1401 = vst.msk [vmem:[#allocation4 + $0x60] sm:$0xff] %vm1388, %v1336
          %1402 = vst.msk [vmem:[#allocation4 + $0x68] sm:$0xff] %vm1388, %v1337
          %1403 = vst.msk [vmem:[#allocation4 + $0x70] sm:$0xff] %vm1388, %v1338
          %1404 = vst.msk [vmem:[#allocation4 + $0x78] sm:$0xff] %vm1388, %v1339
          %1405 = vst.msk [vmem:[#allocation5] sm:$0xff] %vm1388, %v1372
          %1406 = vst.msk [vmem:[#allocation5 + $0x8] sm:$0xff] %vm1388, %v1373
          %1407 = vst.msk [vmem:[#allocation5 + $0x10] sm:$0xff] %vm1388, %v1374
          %1408 = vst.msk [vmem:[#allocation5 + $0x18] sm:$0xff] %vm1388, %v1375
          %1409 = vst.msk [vmem:[#allocation5 + $0x20] sm:$0xff] %vm1388, %v1376
          %1410 = vst.msk [vmem:[#allocation5 + $0x28] sm:$0xff] %vm1388, %v1377
          %1411 = vst.msk [vmem:[#allocation5 + $0x30] sm:$0xff] %vm1388, %v1378
          %1412 = vst.msk [vmem:[#allocation5 + $0x38] sm:$0xff] %vm1388, %v1379
          %1413 = vst.msk [vmem:[#allocation5 + $0x40] sm:$0xff] %vm1388, %v1380
          %1414 = vst.msk [vmem:[#allocation5 + $0x48] sm:$0xff] %vm1388, %v1381
          %1415 = vst.msk [vmem:[#allocation5 + $0x50] sm:$0xff] %vm1388, %v1382
          %1416 = vst.msk [vmem:[#allocation5 + $0x58] sm:$0xff] %vm1388, %v1383
          %1417 = vst.msk [vmem:[#allocation5 + $0x60] sm:$0xff] %vm1388, %v1384
          %1418 = vst.msk [vmem:[#allocation5 + $0x68] sm:$0xff] %vm1388, %v1385
          %1419 = vst.msk [vmem:[#allocation5 + $0x70] sm:$0xff] %vm1388, %v1386
          %1420 = vst.msk [vmem:[#allocation5 + $0x78] sm:$0xff] %vm1388, %v1387
          %1422 = vset.pattern.permute.xlu0 0
          %1423 = vperm.xlu0 %1422, %v1324
          %v1424 = vpop.permute.xlu0 %1423
          %1427 = vset.pattern.permute.xlu0 0
          %1428 = vperm.xlu0 %1427, %v1325
          %v1429 = vpop.permute.xlu0 %1428
          %1432 = vset.pattern.permute.xlu0 0
          %1433 = vperm.xlu0 %1432, %v1326
          %v1434 = vpop.permute.xlu0 %1433
          %1437 = vset.pattern.permute.xlu0 0
          %1438 = vperm.xlu0 %1437, %v1327
          %v1439 = vpop.permute.xlu0 %1438
          %1442 = vset.pattern.permute.xlu0 0
          %1443 = vperm.xlu0 %1442, %v1328
          %v1444 = vpop.permute.xlu0 %1443
          %1447 = vset.pattern.permute.xlu0 0
          %1448 = vperm.xlu0 %1447, %v1329
          %v1449 = vpop.permute.xlu0 %1448
          %1452 = vset.pattern.permute.xlu0 0
          %1453 = vperm.xlu0 %1452, %v1330
          %v1454 = vpop.permute.xlu0 %1453
          %1457 = vset.pattern.permute.xlu0 0
          %1458 = vperm.xlu0 %1457, %v1331
          %v1459 = vpop.permute.xlu0 %1458
          %1462 = vset.pattern.permute.xlu0 0
          %1463 = vperm.xlu0 %1462, %v1332
          %v1464 = vpop.permute.xlu0 %1463
          %1467 = vset.pattern.permute.xlu0 0
          %1468 = vperm.xlu0 %1467, %v1333
          %v1469 = vpop.permute.xlu0 %1468
          %1472 = vset.pattern.permute.xlu0 0
          %1473 = vperm.xlu0 %1472, %v1334
          %v1474 = vpop.permute.xlu0 %1473
          %1477 = vset.pattern.permute.xlu0 0
          %1478 = vperm.xlu0 %1477, %v1335
          %v1479 = vpop.permute.xlu0 %1478
          %1482 = vset.pattern.permute.xlu0 0
          %1483 = vperm.xlu0 %1482, %v1336
          %v1484 = vpop.permute.xlu0 %1483
          %1487 = vset.pattern.permute.xlu0 0
          %1488 = vperm.xlu0 %1487, %v1337
          %v1489 = vpop.permute.xlu0 %1488
          %1492 = vset.pattern.permute.xlu0 0
          %1493 = vperm.xlu0 %1492, %v1338
          %v1494 = vpop.permute.xlu0 %1493
          %1497 = vset.pattern.permute.xlu0 0
          %1498 = vperm.xlu0 %1497, %v1339
          %v1499 = vpop.permute.xlu0 %1498
          %v1501 = vmul.f32 %v491, %v1424
          %v1502 = vmul.f32 %v492, %v1424
          %v1503 = vmul.f32 %v493, %v1429
          %v1504 = vmul.f32 %v494, %v1429
          %v1505 = vmul.f32 %v495, %v1434
          %v1506 = vmul.f32 %v496, %v1434
          %v1507 = vmul.f32 %v497, %v1439
          %v1508 = vmul.f32 %v498, %v1439
          %v1509 = vmul.f32 %v499, %v1444
          %v1510 = vmul.f32 %v500, %v1444
          %v1511 = vmul.f32 %v501, %v1449
          %v1512 = vmul.f32 %v502, %v1449
          %v1513 = vmul.f32 %v503, %v1454
          %v1514 = vmul.f32 %v504, %v1454
          %v1515 = vmul.f32 %v505, %v1459
          %v1516 = vmul.f32 %v506, %v1459
          %v1517 = vmul.f32 %v507, %v1464
          %v1518 = vmul.f32 %v508, %v1464
          %v1519 = vmul.f32 %v509, %v1469
          %v1520 = vmul.f32 %v510, %v1469
          %v1521 = vmul.f32 %v511, %v1474
          %v1522 = vmul.f32 %v512, %v1474
          %v1523 = vmul.f32 %v513, %v1479
          %v1524 = vmul.f32 %v514, %v1479
          %v1525 = vmul.f32 %v515, %v1484
          %v1526 = vmul.f32 %v516, %v1484
          %v1527 = vmul.f32 %v517, %v1489
          %v1528 = vmul.f32 %v518, %v1489
          %v1529 = vmul.f32 %v519, %v1494
          %v1530 = vmul.f32 %v520, %v1494
          %v1531 = vmul.f32 %v521, %v1499
          %v1532 = vmul.f32 %v522, %v1499
          %1534 = vset.pattern.permute.xlu0 0
          %1535 = vperm.xlu0 %1534, %v1372
          %v1536 = vpop.permute.xlu0 %1535
          %1539 = vset.pattern.permute.xlu0 0
          %1540 = vperm.xlu0 %1539, %v1373
          %v1541 = vpop.permute.xlu0 %1540
          %1544 = vset.pattern.permute.xlu0 0
          %1545 = vperm.xlu0 %1544, %v1374
          %v1546 = vpop.permute.xlu0 %1545
          %1549 = vset.pattern.permute.xlu0 0
          %1550 = vperm.xlu0 %1549, %v1375
          %v1551 = vpop.permute.xlu0 %1550
          %1554 = vset.pattern.permute.xlu0 0
          %1555 = vperm.xlu0 %1554, %v1376
          %v1556 = vpop.permute.xlu0 %1555
          %1559 = vset.pattern.permute.xlu0 0
          %1560 = vperm.xlu0 %1559, %v1377
          %v1561 = vpop.permute.xlu0 %1560
          %1564 = vset.pattern.permute.xlu0 0
          %1565 = vperm.xlu0 %1564, %v1378
          %v1566 = vpop.permute.xlu0 %1565
          %1569 = vset.pattern.permute.xlu0 0
          %1570 = vperm.xlu0 %1569, %v1379
          %v1571 = vpop.permute.xlu0 %1570
          %1574 = vset.pattern.permute.xlu0 0
          %1575 = vperm.xlu0 %1574, %v1380
          %v1576 = vpop.permute.xlu0 %1575
          %1579 = vset.pattern.permute.xlu0 0
          %1580 = vperm.xlu0 %1579, %v1381
          %v1581 = vpop.permute.xlu0 %1580
          %1584 = vset.pattern.permute.xlu0 0
          %1585 = vperm.xlu0 %1584, %v1382
          %v1586 = vpop.permute.xlu0 %1585
          %1589 = vset.pattern.permute.xlu0 0
          %1590 = vperm.xlu0 %1589, %v1383
          %v1591 = vpop.permute.xlu0 %1590
          %1594 = vset.pattern.permute.xlu0 0
          %1595 = vperm.xlu0 %1594, %v1384
          %v1596 = vpop.permute.xlu0 %1595
          %1599 = vset.pattern.permute.xlu0 0
          %1600 = vperm.xlu0 %1599, %v1385
          %v1601 = vpop.permute.xlu0 %1600
          %1604 = vset.pattern.permute.xlu0 0
          %1605 = vperm.xlu0 %1604, %v1386
          %v1606 = vpop.permute.xlu0 %1605
          %1609 = vset.pattern.permute.xlu0 0
          %1610 = vperm.xlu0 %1609, %v1387
          %v1611 = vpop.permute.xlu0 %1610
          %v1613 = vadd.f32 %v1501, %v1536
          %v1614 = vadd.f32 %v1502, %v1536
          %v1615 = vadd.f32 %v1503, %v1541
          %v1616 = vadd.f32 %v1504, %v1541
          %v1617 = vadd.f32 %v1505, %v1546
          %v1618 = vadd.f32 %v1506, %v1546
          %v1619 = vadd.f32 %v1507, %v1551
          %v1620 = vadd.f32 %v1508, %v1551
          %v1621 = vadd.f32 %v1509, %v1556
          %v1622 = vadd.f32 %v1510, %v1556
          %v1623 = vadd.f32 %v1511, %v1561
          %v1624 = vadd.f32 %v1512, %v1561
          %v1625 = vadd.f32 %v1513, %v1566
          %v1626 = vadd.f32 %v1514, %v1566
          %v1627 = vadd.f32 %v1515, %v1571
          %v1628 = vadd.f32 %v1516, %v1571
          %v1629 = vadd.f32 %v1517, %v1576
          %v1630 = vadd.f32 %v1518, %v1576
          %v1631 = vadd.f32 %v1519, %v1581
          %v1632 = vadd.f32 %v1520, %v1581
          %v1633 = vadd.f32 %v1521, %v1586
          %v1634 = vadd.f32 %v1522, %v1586
          %v1635 = vadd.f32 %v1523, %v1591
          %v1636 = vadd.f32 %v1524, %v1591
          %v1637 = vadd.f32 %v1525, %v1596
          %v1638 = vadd.f32 %v1526, %v1596
          %v1639 = vadd.f32 %v1527, %v1601
          %v1640 = vadd.f32 %v1528, %v1601
          %v1641 = vadd.f32 %v1529, %v1606
          %v1642 = vadd.f32 %v1530, %v1606
          %v1643 = vadd.f32 %v1531, %v1611
          %v1644 = vadd.f32 %v1532, %v1611
          %v1645 = vpack.c.bf16 %v1615, %v1613
          %v1646 = vpack.c.bf16 %v1616, %v1614
          %v1647 = vpack.c.bf16 %v1619, %v1617
          %v1648 = vpack.c.bf16 %v1620, %v1618
          %v1649 = vpack.c.bf16 %v1623, %v1621
          %v1650 = vpack.c.bf16 %v1624, %v1622
          %v1651 = vpack.c.bf16 %v1627, %v1625
          %v1652 = vpack.c.bf16 %v1628, %v1626
          %v1653 = vpack.c.bf16 %v1631, %v1629
          %v1654 = vpack.c.bf16 %v1632, %v1630
          %v1655 = vpack.c.bf16 %v1635, %v1633
          %v1656 = vpack.c.bf16 %v1636, %v1634
          %v1657 = vpack.c.bf16 %v1639, %v1637
          %v1658 = vpack.c.bf16 %v1640, %v1638
          %v1659 = vpack.c.bf16 %v1643, %v1641
          %v1660 = vpack.c.bf16 %v1644, %v1642
          %s1661 = scalar_lea.vmem %s6, 64
          %v1662 = vld [vmem:[%s1661] sm:$0xf]
          %v1663 = vld [vmem:[%s1661 + $0x4] sm:$0xf]
          %v1664 = vld [vmem:[%s1661 + $0x8] sm:$0xf]
          %v1665 = vld [vmem:[%s1661 + $0xc] sm:$0xf]
          %v1666 = vld [vmem:[%s1661 + $0x10] sm:$0xf]
          %v1667 = vld [vmem:[%s1661 + $0x14] sm:$0xf]
          %v1668 = vld [vmem:[%s1661 + $0x18] sm:$0xf]
          %v1669 = vld [vmem:[%s1661 + $0x1c] sm:$0xf]
          %v1670 = vld [vmem:[%s1661 + $0x20] sm:$0xf]
          %v1671 = vld [vmem:[%s1661 + $0x24] sm:$0xf]
          %v1672 = vld [vmem:[%s1661 + $0x28] sm:$0xf]
          %v1673 = vld [vmem:[%s1661 + $0x2c] sm:$0xf]
          %v1674 = vld [vmem:[%s1661 + $0x30] sm:$0xf]
          %v1675 = vld [vmem:[%s1661 + $0x34] sm:$0xf]
          %v1676 = vld [vmem:[%s1661 + $0x38] sm:$0xf]
          %v1677 = vld [vmem:[%s1661 + $0x3c] sm:$0xf]
          %s1678 = scalar_lea.vmem %s7, 128
          %v1679 = vld [vmem:[%s1678] sm:$0xff]
          %v1680 = vld [vmem:[%s1678 + $0x8] sm:$0xff]
          %v1681 = vld [vmem:[%s1678 + $0x10] sm:$0xff]
          %v1682 = vld [vmem:[%s1678 + $0x18] sm:$0xff]
          %v1683 = vld [vmem:[%s1678 + $0x20] sm:$0xff]
          %v1684 = vld [vmem:[%s1678 + $0x28] sm:$0xff]
          %v1685 = vld [vmem:[%s1678 + $0x30] sm:$0xff]
          %v1686 = vld [vmem:[%s1678 + $0x38] sm:$0xff]
          %v1687 = vld [vmem:[%s1678 + $0x40] sm:$0xff]
          %v1688 = vld [vmem:[%s1678 + $0x48] sm:$0xff]
          %v1689 = vld [vmem:[%s1678 + $0x50] sm:$0xff]
          %v1690 = vld [vmem:[%s1678 + $0x58] sm:$0xff]
          %v1691 = vld [vmem:[%s1678 + $0x60] sm:$0xff]
          %v1692 = vld [vmem:[%s1678 + $0x68] sm:$0xff]
          %v1693 = vld [vmem:[%s1678 + $0x70] sm:$0xff]
          %v1694 = vld [vmem:[%s1678 + $0x78] sm:$0xff]
          %1696 = vset.pattern.permute.xlu0 0
          %1697 = vperm.xlu0 %1696, %v1679
          %v1698 = vpop.permute.xlu0 %1697
          %1701 = vset.pattern.permute.xlu0 0
          %1702 = vperm.xlu0 %1701, %v1680
          %v1703 = vpop.permute.xlu0 %1702
          %1706 = vset.pattern.permute.xlu0 0
          %1707 = vperm.xlu0 %1706, %v1681
          %v1708 = vpop.permute.xlu0 %1707
          %1711 = vset.pattern.permute.xlu0 0
          %1712 = vperm.xlu0 %1711, %v1682
          %v1713 = vpop.permute.xlu0 %1712
          %1716 = vset.pattern.permute.xlu0 0
          %1717 = vperm.xlu0 %1716, %v1683
          %v1718 = vpop.permute.xlu0 %1717
          %1721 = vset.pattern.permute.xlu0 0
          %1722 = vperm.xlu0 %1721, %v1684
          %v1723 = vpop.permute.xlu0 %1722
          %1726 = vset.pattern.permute.xlu0 0
          %1727 = vperm.xlu0 %1726, %v1685
          %v1728 = vpop.permute.xlu0 %1727
          %1731 = vset.pattern.permute.xlu0 0
          %1732 = vperm.xlu0 %1731, %v1686
          %v1733 = vpop.permute.xlu0 %1732
          %1736 = vset.pattern.permute.xlu0 0
          %1737 = vperm.xlu0 %1736, %v1687
          %v1738 = vpop.permute.xlu0 %1737
          %1741 = vset.pattern.permute.xlu0 0
          %1742 = vperm.xlu0 %1741, %v1688
          %v1743 = vpop.permute.xlu0 %1742
          %1746 = vset.pattern.permute.xlu0 0
          %1747 = vperm.xlu0 %1746, %v1689
          %v1748 = vpop.permute.xlu0 %1747
          %1751 = vset.pattern.permute.xlu0 0
          %1752 = vperm.xlu0 %1751, %v1690
          %v1753 = vpop.permute.xlu0 %1752
          %1756 = vset.pattern.permute.xlu0 0
          %1757 = vperm.xlu0 %1756, %v1691
          %v1758 = vpop.permute.xlu0 %1757
          %1761 = vset.pattern.permute.xlu0 0
          %1762 = vperm.xlu0 %1761, %v1692
          %v1763 = vpop.permute.xlu0 %1762
          %1766 = vset.pattern.permute.xlu0 0
          %1767 = vperm.xlu0 %1766, %v1693
          %v1768 = vpop.permute.xlu0 %1767
          %1771 = vset.pattern.permute.xlu0 0
          %1772 = vperm.xlu0 %1771, %v1694
          %v1773 = vpop.permute.xlu0 %1772
          %v1791 = vunpack.c.l.b16 %v1662
          %v1792 = vunpack.c.l.b16 %v1663
          %v1793 = vunpack.c.l.b16 %v1664
          %v1794 = vunpack.c.l.b16 %v1665
          %v1795 = vunpack.c.l.b16 %v1666
          %v1796 = vunpack.c.l.b16 %v1667
          %v1797 = vunpack.c.l.b16 %v1668
          %v1798 = vunpack.c.l.b16 %v1669
          %v1799 = vunpack.c.l.b16 %v1670
          %v1800 = vunpack.c.l.b16 %v1671
          %v1801 = vunpack.c.l.b16 %v1672
          %v1802 = vunpack.c.l.b16 %v1673
          %v1803 = vunpack.c.l.b16 %v1674
          %v1804 = vunpack.c.l.b16 %v1675
          %v1805 = vunpack.c.l.b16 %v1676
          %v1806 = vunpack.c.l.b16 %v1677
          %v1807 = vpack.c.b16 %v1792, %v1791
          %v1808 = vpack.c.b16 %v1794, %v1793
          %v1809 = vpack.c.b16 %v1796, %v1795
          %v1810 = vpack.c.b16 %v1798, %v1797
          %v1811 = vpack.c.b16 %v1800, %v1799
          %v1812 = vpack.c.b16 %v1802, %v1801
          %v1813 = vpack.c.b16 %v1804, %v1803
          %v1814 = vpack.c.b16 %v1806, %v1805
          %1823 = vmatprep.subr.bf16.mxu0 %v1646
          %1824 = vmatpush1.bf16.msra.mxu0 %v1645
          %1825 = vmatprep.subr.bf16.mxu0 %v1648
          %1826 = vmatpush1.bf16.msra.mxu0 %v1647
          %1827 = vmatprep.subr.bf16.mxu0 %v1650
          %1828 = vmatpush1.bf16.msra.mxu0 %v1649
          %1829 = vmatprep.subr.bf16.mxu0 %v1652
          %1830 = vmatpush1.bf16.msra.mxu0 %v1651
          %1831 = vmatprep.subr.bf16.mxu0 %v1654
          %1832 = vmatpush1.bf16.msra.mxu0 %v1653
          %1833 = vmatprep.subr.bf16.mxu0 %v1656
          %1834 = vmatpush1.bf16.msra.mxu0 %v1655
          %1835 = vmatprep.subr.bf16.mxu0 %v1658
          %1836 = vmatpush1.bf16.msra.mxu0 %v1657
          %1837 = vmatprep.subr.bf16.mxu0 %v1660
          %1838 = vmatpush1.bf16.msra.mxu0 %v1659
          %1839 = vmatprep.subr.bf16.mxu0 0
          %1840 = vmatpush1.bf16.msra.mxu0 0
          %1841 = vmatprep.subr.bf16.mxu0 0
          %1842 = vmatpush1.bf16.msra.mxu0 0
          %1843 = vmatprep.subr.bf16.mxu0 0
          %1844 = vmatpush1.bf16.msra.mxu0 0
          %1845 = vmatprep.subr.bf16.mxu0 0
          %1846 = vmatpush1.bf16.msra.mxu0 0
          %1847 = vmatprep.subr.bf16.mxu0 0
          %1848 = vmatpush1.bf16.msra.mxu0 0
          %1849 = vmatprep.subr.bf16.mxu0 0
          %1850 = vmatpush1.bf16.msra.mxu0 0
          %1851 = vmatprep.subr.bf16.mxu0 0
          %1852 = vmatpush1.bf16.msra.mxu0 0
          %1853 = vmatprep.subr.bf16.mxu0 0
          %1854 = vmatpush1.bf16.msra.mxu0 0
          %1855 = vmatprep.mubr.bf16.mxu0 0
          %1856 = vmatmul.mubr.bf16.gmra.mrb[0].mxu0 %v1807
          %v1857 = vpop.f32.mrb[0].mxu0
          %v1858 = vadd.f32 %v1698, %v1857
          %v1859 = vpop.f32.mrb[0].mxu0
          %v1860 = vadd.f32 %v1698, %v1859
          %v1861 = vpop.f32.mrb[0].mxu0
          %v1862 = vadd.f32 %v1703, %v1861
          %v1863 = vpop.f32.mrb[0].mxu0
          %v1864 = vadd.f32 %v1703, %v1863
          %1865 = vmatprep.mubr.bf16.mxu0 0
          %1866 = vmatmul.mubr.bf16.gmra.mrb[0].mxu0 %v1808
          %v1867 = vpop.f32.mrb[0].mxu0
          %v1868 = vadd.f32 %v1708, %v1867
          %v1869 = vpop.f32.mrb[0].mxu0
          %v1870 = vadd.f32 %v1708, %v1869
          %v1871 = vpop.f32.mrb[0].mxu0
          %v1872 = vadd.f32 %v1713, %v1871
          %v1873 = vpop.f32.mrb[0].mxu0
          %v1874 = vadd.f32 %v1713, %v1873
          %1875 = vmatprep.mubr.bf16.mxu0 0
          %1876 = vmatmul.mubr.bf16.gmra.mrb[0].mxu0 %v1809
          %v1877 = vpop.f32.mrb[0].mxu0
          %v1878 = vadd.f32 %v1718, %v1877
          %v1879 = vpop.f32.mrb[0].mxu0
          %v1880 = vadd.f32 %v1718, %v1879
          %v1881 = vpop.f32.mrb[0].mxu0
          %v1882 = vadd.f32 %v1723, %v1881
          %v1883 = vpop.f32.mrb[0].mxu0
          %v1884 = vadd.f32 %v1723, %v1883
          %1885 = vmatprep.mubr.bf16.mxu0 0
          %1886 = vmatmul.mubr.bf16.gmra.mrb[0].mxu0 %v1810
          %v1887 = vpop.f32.mrb[0].mxu0
          %v1888 = vadd.f32 %v1728, %v1887
          %v1889 = vpop.f32.mrb[0].mxu0
          %v1890 = vadd.f32 %v1728, %v1889
          %v1891 = vpop.f32.mrb[0].mxu0
          %v1892 = vadd.f32 %v1733, %v1891
          %v1893 = vpop.f32.mrb[0].mxu0
          %v1894 = vadd.f32 %v1733, %v1893
          %1895 = vmatprep.mubr.bf16.mxu0 0
          %1896 = vmatmul.mubr.bf16.gmra.mrb[0].mxu0 %v1811
          %v1897 = vpop.f32.mrb[0].mxu0
          %v1898 = vadd.f32 %v1738, %v1897
          %v1899 = vpop.f32.mrb[0].mxu0
          %v1900 = vadd.f32 %v1738, %v1899
          %v1901 = vpop.f32.mrb[0].mxu0
          %v1902 = vadd.f32 %v1743, %v1901
          %v1903 = vpop.f32.mrb[0].mxu0
          %v1904 = vadd.f32 %v1743, %v1903
          %1905 = vmatprep.mubr.bf16.mxu0 0
          %1906 = vmatmul.mubr.bf16.gmra.mrb[0].mxu0 %v1812
          %v1907 = vpop.f32.mrb[0].mxu0
          %v1908 = vadd.f32 %v1748, %v1907
          %v1909 = vpop.f32.mrb[0].mxu0
          %v1910 = vadd.f32 %v1748, %v1909
          %v1911 = vpop.f32.mrb[0].mxu0
          %v1912 = vadd.f32 %v1753, %v1911
          %v1913 = vpop.f32.mrb[0].mxu0
          %v1914 = vadd.f32 %v1753, %v1913
          %1915 = vmatprep.mubr.bf16.mxu0 0
          %1916 = vmatmul.mubr.bf16.gmra.mrb[0].mxu0 %v1813
          %v1917 = vpop.f32.mrb[0].mxu0
          %v1918 = vadd.f32 %v1758, %v1917
          %v1919 = vpop.f32.mrb[0].mxu0
          %v1920 = vadd.f32 %v1758, %v1919
          %v1921 = vpop.f32.mrb[0].mxu0
          %v1922 = vadd.f32 %v1763, %v1921
          %v1923 = vpop.f32.mrb[0].mxu0
          %v1924 = vadd.f32 %v1763, %v1923
          %1925 = vmatprep.mubr.bf16.mxu0 0
          %1926 = vmatmul.mubr.bf16.gmra.mrb[0].mxu0 %v1814
          %v1927 = vpop.f32.mrb[0].mxu0
          %v1928 = vadd.f32 %v1768, %v1927
          %v1929 = vpop.f32.mrb[0].mxu0
          %v1930 = vadd.f32 %v1768, %v1929
          %v1931 = vpop.f32.mrb[0].mxu0
          %v1932 = vadd.f32 %v1773, %v1931
          %v1933 = vpop.f32.mrb[0].mxu0
          %v1934 = vadd.f32 %v1773, %v1933
          %1935 = vdwg.mxu0
          %v1936 = vpack.c.bf16 %v1862, %v1858
          %v1937 = vpack.c.bf16 %v1864, %v1860
          %v1938 = vpack.c.bf16 %v1872, %v1868
          %v1939 = vpack.c.bf16 %v1874, %v1870
          %v1940 = vpack.c.bf16 %v1882, %v1878
          %v1941 = vpack.c.bf16 %v1884, %v1880
          %v1942 = vpack.c.bf16 %v1892, %v1888
          %v1943 = vpack.c.bf16 %v1894, %v1890
          %v1944 = vpack.c.bf16 %v1902, %v1898
          %v1945 = vpack.c.bf16 %v1904, %v1900
          %v1946 = vpack.c.bf16 %v1912, %v1908
          %v1947 = vpack.c.bf16 %v1914, %v1910
          %v1948 = vpack.c.bf16 %v1922, %v1918
          %v1949 = vpack.c.bf16 %v1924, %v1920
          %v1950 = vpack.c.bf16 %v1932, %v1928
          %v1951 = vpack.c.bf16 %v1934, %v1930
          %1952 = vst [vmem:[#allocation2] sm:$0xff] %v1936
          %1953 = vst [vmem:[#allocation2 + $0x8] sm:$0xff] %v1937
          %1954 = vst [vmem:[#allocation2 + $0x10] sm:$0xff] %v1938
          %1955 = vst [vmem:[#allocation2 + $0x18] sm:$0xff] %v1939
          %1956 = vst [vmem:[#allocation2 + $0x20] sm:$0xff] %v1940
          %1957 = vst [vmem:[#allocation2 + $0x28] sm:$0xff] %v1941
          %1958 = vst [vmem:[#allocation2 + $0x30] sm:$0xff] %v1942
          %1959 = vst [vmem:[#allocation2 + $0x38] sm:$0xff] %v1943
          %1960 = vst [vmem:[#allocation2 + $0x40] sm:$0xff] %v1944
          %1961 = vst [vmem:[#allocation2 + $0x48] sm:$0xff] %v1945
          %1962 = vst [vmem:[#allocation2 + $0x50] sm:$0xff] %v1946
          %1963 = vst [vmem:[#allocation2 + $0x58] sm:$0xff] %v1947
          %1964 = vst [vmem:[#allocation2 + $0x60] sm:$0xff] %v1948
          %1965 = vst [vmem:[#allocation2 + $0x68] sm:$0xff] %v1949
          %1966 = vst [vmem:[#allocation2 + $0x70] sm:$0xff] %v1950
          %1967 = vst [vmem:[#allocation2 + $0x78] sm:$0xff] %v1951
          %s1968 = scalar_lea.vmem %s6, 128
          %v1969 = vld [vmem:[%s1968] sm:$0xf]
          %v1970 = vld [vmem:[%s1968 + $0x4] sm:$0xf]
          %v1971 = vld [vmem:[%s1968 + $0x8] sm:$0xf]
          %v1972 = vld [vmem:[%s1968 + $0xc] sm:$0xf]
          %v1973 = vld [vmem:[%s1968 + $0x10] sm:$0xf]
          %v1974 = vld [vmem:[%s1968 + $0x14] sm:$0xf]
          %v1975 = vld [vmem:[%s1968 + $0x18] sm:$0xf]
          %v1976 = vld [vmem:[%s1968 + $0x1c] sm:$0xf]
          %v1977 = vld [vmem:[%s1968 + $0x20] sm:$0xf]
          %v1978 = vld [vmem:[%s1968 + $0x24] sm:$0xf]
          %v1979 = vld [vmem:[%s1968 + $0x28] sm:$0xf]
          %v1980 = vld [vmem:[%s1968 + $0x2c] sm:$0xf]
          %v1981 = vld [vmem:[%s1968 + $0x30] sm:$0xf]
          %v1982 = vld [vmem:[%s1968 + $0x34] sm:$0xf]
          %v1983 = vld [vmem:[%s1968 + $0x38] sm:$0xf]
          %v1984 = vld [vmem:[%s1968 + $0x3c] sm:$0xf]
          %s1985 = scalar_lea.vmem %s7, 256
          %v1986 = vld [vmem:[%s1985] sm:$0xff]
          %v1987 = vld [vmem:[%s1985 + $0x8] sm:$0xff]
          %v1988 = vld [vmem:[%s1985 + $0x10] sm:$0xff]
          %v1989 = vld [vmem:[%s1985 + $0x18] sm:$0xff]
          %v1990 = vld [vmem:[%s1985 + $0x20] sm:$0xff]
          %v1991 = vld [vmem:[%s1985 + $0x28] sm:$0xff]
          %v1992 = vld [vmem:[%s1985 + $0x30] sm:$0xff]
          %v1993 = vld [vmem:[%s1985 + $0x38] sm:$0xff]
          %v1994 = vld [vmem:[%s1985 + $0x40] sm:$0xff]
          %v1995 = vld [vmem:[%s1985 + $0x48] sm:$0xff]
          %v1996 = vld [vmem:[%s1985 + $0x50] sm:$0xff]
          %v1997 = vld [vmem:[%s1985 + $0x58] sm:$0xff]
          %v1998 = vld [vmem:[%s1985 + $0x60] sm:$0xff]
          %v1999 = vld [vmem:[%s1985 + $0x68] sm:$0xff]
          %v2000 = vld [vmem:[%s1985 + $0x70] sm:$0xff]
          %v2001 = vld [vmem:[%s1985 + $0x78] sm:$0xff]
          %2003 = vset.pattern.permute.xlu0 0
          %2004 = vperm.xlu0 %2003, %v1986
          %v2005 = vpop.permute.xlu0 %2004
          %2008 = vset.pattern.permute.xlu0 0
          %2009 = vperm.xlu0 %2008, %v1987
          %v2010 = vpop.permute.xlu0 %2009
          %2013 = vset.pattern.permute.xlu0 0
          %2014 = vperm.xlu0 %2013, %v1988
          %v2015 = vpop.permute.xlu0 %2014
          %2018 = vset.pattern.permute.xlu0 0
          %2019 = vperm.xlu0 %2018, %v1989
          %v2020 = vpop.permute.xlu0 %2019
          %2023 = vset.pattern.permute.xlu0 0
          %2024 = vperm.xlu0 %2023, %v1990
          %v2025 = vpop.permute.xlu0 %2024
          %2028 = vset.pattern.permute.xlu0 0
          %2029 = vperm.xlu0 %2028, %v1991
          %v2030 = vpop.permute.xlu0 %2029
          %2033 = vset.pattern.permute.xlu0 0
          %2034 = vperm.xlu0 %2033, %v1992
          %v2035 = vpop.permute.xlu0 %2034
          %2038 = vset.pattern.permute.xlu0 0
          %2039 = vperm.xlu0 %2038, %v1993
          %v2040 = vpop.permute.xlu0 %2039
          %2043 = vset.pattern.permute.xlu0 0
          %2044 = vperm.xlu0 %2043, %v1994
          %v2045 = vpop.permute.xlu0 %2044
          %2048 = vset.pattern.permute.xlu0 0
          %2049 = vperm.xlu0 %2048, %v1995
          %v2050 = vpop.permute.xlu0 %2049
          %2053 = vset.pattern.permute.xlu0 0
          %2054 = vperm.xlu0 %2053, %v1996
          %v2055 = vpop.permute.xlu0 %2054
          %2058 = vset.pattern.permute.xlu0 0
          %2059 = vperm.xlu0 %2058, %v1997
          %v2060 = vpop.permute.xlu0 %2059
          %2063 = vset.pattern.permute.xlu0 0
          %2064 = vperm.xlu0 %2063, %v1998
          %v2065 = vpop.permute.xlu0 %2064
          %2068 = vset.pattern.permute.xlu0 0
          %2069 = vperm.xlu0 %2068, %v1999
          %v2070 = vpop.permute.xlu0 %2069
          %2073 = vset.pattern.permute.xlu0 0
          %2074 = vperm.xlu0 %2073, %v2000
          %v2075 = vpop.permute.xlu0 %2074
          %2078 = vset.pattern.permute.xlu0 0
          %2079 = vperm.xlu0 %2078, %v2001
          %v2080 = vpop.permute.xlu0 %2079
          %v2098 = vunpack.c.l.b16 %v1969
          %v2099 = vunpack.c.l.b16 %v1970
          %v2100 = vunpack.c.l.b16 %v1971
          %v2101 = vunpack.c.l.b16 %v1972
          %v2102 = vunpack.c.l.b16 %v1973
          %v2103 = vunpack.c.l.b16 %v1974
          %v2104 = vunpack.c.l.b16 %v1975
          %v2105 = vunpack.c.l.b16 %v1976
          %v2106 = vunpack.c.l.b16 %v1977
          %v2107 = vunpack.c.l.b16 %v1978
          %v2108 = vunpack.c.l.b16 %v1979
          %v2109 = vunpack.c.l.b16 %v1980
          %v2110 = vunpack.c.l.b16 %v1981
          %v2111 = vunpack.c.l.b16 %v1982
          %v2112 = vunpack.c.l.b16 %v1983
          %v2113 = vunpack.c.l.b16 %v1984
          %v2114 = vpack.c.b16 %v2099, %v2098
          %v2115 = vpack.c.b16 %v2101, %v2100
          %v2116 = vpack.c.b16 %v2103, %v2102
          %v2117 = vpack.c.b16 %v2105, %v2104
          %v2118 = vpack.c.b16 %v2107, %v2106
          %v2119 = vpack.c.b16 %v2109, %v2108
          %v2120 = vpack.c.b16 %v2111, %v2110
          %v2121 = vpack.c.b16 %v2113, %v2112
          %2130 = vmatprep.subr.bf16.mxu0 %v1646
          %2131 = vmatpush1.bf16.msra.mxu0 %v1645
          %2132 = vmatprep.subr.bf16.mxu0 %v1648
          %2133 = vmatpush1.bf16.msra.mxu0 %v1647
          %2134 = vmatprep.subr.bf16.mxu0 %v1650
          %2135 = vmatpush1.bf16.msra.mxu0 %v1649
          %2136 = vmatprep.subr.bf16.mxu0 %v1652
          %2137 = vmatpush1.bf16.msra.mxu0 %v1651
          %2138 = vmatprep.subr.bf16.mxu0 %v1654
          %2139 = vmatpush1.bf16.msra.mxu0 %v1653
          %2140 = vmatprep.subr.bf16.mxu0 %v1656
          %2141 = vmatpush1.bf16.msra.mxu0 %v1655
          %2142 = vmatprep.subr.bf16.mxu0 %v1658
          %2143 = vmatpush1.bf16.msra.mxu0 %v1657
          %2144 = vmatprep.subr.bf16.mxu0 %v1660
          %2145 = vmatpush1.bf16.msra.mxu0 %v1659
          %2146 = vmatprep.subr.bf16.mxu0 0
          %2147 = vmatpush1.bf16.msra.mxu0 0
          %2148 = vmatprep.subr.bf16.mxu0 0
          %2149 = vmatpush1.bf16.msra.mxu0 0
          %2150 = vmatprep.subr.bf16.mxu0 0
          %2151 = vmatpush1.bf16.msra.mxu0 0
          %2152 = vmatprep.subr.bf16.mxu0 0
          %2153 = vmatpush1.bf16.msra.mxu0 0
          %2154 = vmatprep.subr.bf16.mxu0 0
          %2155 = vmatpush1.bf16.msra.mxu0 0
          %2156 = vmatprep.subr.bf16.mxu0 0
          %2157 = vmatpush1.bf16.msra.mxu0 0
          %2158 = vmatprep.subr.bf16.mxu0 0
          %2159 = vmatpush1.bf16.msra.mxu0 0
          %2160 = vmatprep.subr.bf16.mxu0 0
          %2161 = vmatpush1.bf16.msra.mxu0 0
          %2162 = vmatprep.mubr.bf16.mxu0 0
          %2163 = vmatmul.mubr.bf16.gmra.mrb[0].mxu0 %v2114
          %v2164 = vpop.f32.mrb[0].mxu0
          %v2165 = vadd.f32 %v2005, %v2164
          %v2166 = vpop.f32.mrb[0].mxu0
          %v2167 = vadd.f32 %v2005, %v2166
          %v2168 = vpop.f32.mrb[0].mxu0
          %v2169 = vadd.f32 %v2010, %v2168
          %v2170 = vpop.f32.mrb[0].mxu0
          %v2171 = vadd.f32 %v2010, %v2170
          %2172 = vmatprep.mubr.bf16.mxu0 0
          %2173 = vmatmul.mubr.bf16.gmra.mrb[0].mxu0 %v2115
          %v2174 = vpop.f32.mrb[0].mxu0
          %v2175 = vadd.f32 %v2015, %v2174
          %v2176 = vpop.f32.mrb[0].mxu0
          %v2177 = vadd.f32 %v2015, %v2176
          %v2178 = vpop.f32.mrb[0].mxu0
          %v2179 = vadd.f32 %v2020, %v2178
          %v2180 = vpop.f32.mrb[0].mxu0
          %v2181 = vadd.f32 %v2020, %v2180
          %2182 = vmatprep.mubr.bf16.mxu0 0
          %2183 = vmatmul.mubr.bf16.gmra.mrb[0].mxu0 %v2116
          %v2184 = vpop.f32.mrb[0].mxu0
          %v2185 = vadd.f32 %v2025, %v2184
          %v2186 = vpop.f32.mrb[0].mxu0
          %v2187 = vadd.f32 %v2025, %v2186
          %v2188 = vpop.f32.mrb[0].mxu0
          %v2189 = vadd.f32 %v2030, %v2188
          %v2190 = vpop.f32.mrb[0].mxu0
          %v2191 = vadd.f32 %v2030, %v2190
          %2192 = vmatprep.mubr.bf16.mxu0 0
          %2193 = vmatmul.mubr.bf16.gmra.mrb[0].mxu0 %v2117
          %v2194 = vpop.f32.mrb[0].mxu0
          %v2195 = vadd.f32 %v2035, %v2194
          %v2196 = vpop.f32.mrb[0].mxu0
          %v2197 = vadd.f32 %v2035, %v2196
          %v2198 = vpop.f32.mrb[0].mxu0
          %v2199 = vadd.f32 %v2040, %v2198
          %v2200 = vpop.f32.mrb[0].mxu0
          %v2201 = vadd.f32 %v2040, %v2200
          %2202 = vmatprep.mubr.bf16.mxu0 0
          %2203 = vmatmul.mubr.bf16.gmra.mrb[0].mxu0 %v2118
          %v2204 = vpop.f32.mrb[0].mxu0
          %v2205 = vadd.f32 %v2045, %v2204
          %v2206 = vpop.f32.mrb[0].mxu0
          %v2207 = vadd.f32 %v2045, %v2206
          %v2208 = vpop.f32.mrb[0].mxu0
          %v2209 = vadd.f32 %v2050, %v2208
          %v2210 = vpop.f32.mrb[0].mxu0
          %v2211 = vadd.f32 %v2050, %v2210
          %2212 = vmatprep.mubr.bf16.mxu0 0
          %2213 = vmatmul.mubr.bf16.gmra.mrb[0].mxu0 %v2119
          %v2214 = vpop.f32.mrb[0].mxu0
          %v2215 = vadd.f32 %v2055, %v2214
          %v2216 = vpop.f32.mrb[0].mxu0
          %v2217 = vadd.f32 %v2055, %v2216
          %v2218 = vpop.f32.mrb[0].mxu0
          %v2219 = vadd.f32 %v2060, %v2218
          %v2220 = vpop.f32.mrb[0].mxu0
          %v2221 = vadd.f32 %v2060, %v2220
          %2222 = vmatprep.mubr.bf16.mxu0 0
          %2223 = vmatmul.mubr.bf16.gmra.mrb[0].mxu0 %v2120
          %v2224 = vpop.f32.mrb[0].mxu0
          %v2225 = vadd.f32 %v2065, %v2224
          %v2226 = vpop.f32.mrb[0].mxu0
          %v2227 = vadd.f32 %v2065, %v2226
          %v2228 = vpop.f32.mrb[0].mxu0
          %v2229 = vadd.f32 %v2070, %v2228
          %v2230 = vpop.f32.mrb[0].mxu0
          %v2231 = vadd.f32 %v2070, %v2230
          %2232 = vmatprep.mubr.bf16.mxu0 0
          %2233 = vmatmul.mubr.bf16.gmra.mrb[0].mxu0 %v2121
          %v2234 = vpop.f32.mrb[0].mxu0
          %v2235 = vadd.f32 %v2075, %v2234
          %v2236 = vpop.f32.mrb[0].mxu0
          %v2237 = vadd.f32 %v2075, %v2236
          %v2238 = vpop.f32.mrb[0].mxu0
          %v2239 = vadd.f32 %v2080, %v2238
          %v2240 = vpop.f32.mrb[0].mxu0
          %v2241 = vadd.f32 %v2080, %v2240
          %2242 = vdwg.mxu0
          %v2243 = vpack.c.bf16 %v2169, %v2165
          %v2244 = vpack.c.bf16 %v2171, %v2167
          %v2245 = vpack.c.bf16 %v2179, %v2175
          %v2246 = vpack.c.bf16 %v2181, %v2177
          %v2247 = vpack.c.bf16 %v2189, %v2185
          %v2248 = vpack.c.bf16 %v2191, %v2187
          %v2249 = vpack.c.bf16 %v2199, %v2195
          %v2250 = vpack.c.bf16 %v2201, %v2197
          %v2251 = vpack.c.bf16 %v2209, %v2205
          %v2252 = vpack.c.bf16 %v2211, %v2207
          %v2253 = vpack.c.bf16 %v2219, %v2215
          %v2254 = vpack.c.bf16 %v2221, %v2217
          %v2255 = vpack.c.bf16 %v2229, %v2225
          %v2256 = vpack.c.bf16 %v2231, %v2227
          %v2257 = vpack.c.bf16 %v2239, %v2235
          %v2258 = vpack.c.bf16 %v2241, %v2237
          %2259 = vst [vmem:[#allocation3] sm:$0xff] %v2243
          %2260 = vst [vmem:[#allocation3 + $0x8] sm:$0xff] %v2244
          %2261 = vst [vmem:[#allocation3 + $0x10] sm:$0xff] %v2245
          %2262 = vst [vmem:[#allocation3 + $0x18] sm:$0xff] %v2246
          %2263 = vst [vmem:[#allocation3 + $0x20] sm:$0xff] %v2247
          %2264 = vst [vmem:[#allocation3 + $0x28] sm:$0xff] %v2248
          %2265 = vst [vmem:[#allocation3 + $0x30] sm:$0xff] %v2249
          %2266 = vst [vmem:[#allocation3 + $0x38] sm:$0xff] %v2250
          %2267 = vst [vmem:[#allocation3 + $0x40] sm:$0xff] %v2251
          %2268 = vst [vmem:[#allocation3 + $0x48] sm:$0xff] %v2252
          %2269 = vst [vmem:[#allocation3 + $0x50] sm:$0xff] %v2253
          %2270 = vst [vmem:[#allocation3 + $0x58] sm:$0xff] %v2254
          %2271 = vst [vmem:[#allocation3 + $0x60] sm:$0xff] %v2255
          %2272 = vst [vmem:[#allocation3 + $0x68] sm:$0xff] %v2256
          %2273 = vst [vmem:[#allocation3 + $0x70] sm:$0xff] %v2257
          %2274 = vst [vmem:[#allocation3 + $0x78] sm:$0xff] %v2258
        $region102: #{_lambda_.1} parent=93 // pred_fallthru
          _
        %v2275 = vld [vmem:[%s442] sm:$0xff]
        %v2276 = vld [vmem:[%s442 + $0x8] sm:$0xff]
        %v2277 = vld [vmem:[%s442 + $0x10] sm:$0xff]
        %v2278 = vld [vmem:[%s442 + $0x18] sm:$0xff]
        %v2279 = vld [vmem:[%s442 + $0x20] sm:$0xff]
        %v2280 = vld [vmem:[%s442 + $0x28] sm:$0xff]
        %v2281 = vld [vmem:[%s442 + $0x30] sm:$0xff]
        %v2282 = vld [vmem:[%s442 + $0x38] sm:$0xff]
        %v2283 = vld [vmem:[%s442 + $0x40] sm:$0xff]
        %v2284 = vld [vmem:[%s442 + $0x48] sm:$0xff]
        %v2285 = vld [vmem:[%s442 + $0x50] sm:$0xff]
        %v2286 = vld [vmem:[%s442 + $0x58] sm:$0xff]
        %v2287 = vld [vmem:[%s442 + $0x60] sm:$0xff]
        %v2288 = vld [vmem:[%s442 + $0x68] sm:$0xff]
        %v2289 = vld [vmem:[%s442 + $0x70] sm:$0xff]
        %v2290 = vld [vmem:[%s442 + $0x78] sm:$0xff]
        %v2291 = vld [vmem:[#allocation4] sm:$0xff]
        %v2292 = vld [vmem:[#allocation4 + $0x8] sm:$0xff]
        %v2293 = vld [vmem:[#allocation4 + $0x10] sm:$0xff]
        %v2294 = vld [vmem:[#allocation4 + $0x18] sm:$0xff]
        %v2295 = vld [vmem:[#allocation4 + $0x20] sm:$0xff]
        %v2296 = vld [vmem:[#allocation4 + $0x28] sm:$0xff]
        %v2297 = vld [vmem:[#allocation4 + $0x30] sm:$0xff]
        %v2298 = vld [vmem:[#allocation4 + $0x38] sm:$0xff]
        %v2299 = vld [vmem:[#allocation4 + $0x40] sm:$0xff]
        %v2300 = vld [vmem:[#allocation4 + $0x48] sm:$0xff]
        %v2301 = vld [vmem:[#allocation4 + $0x50] sm:$0xff]
        %v2302 = vld [vmem:[#allocation4 + $0x58] sm:$0xff]
        %v2303 = vld [vmem:[#allocation4 + $0x60] sm:$0xff]
        %v2304 = vld [vmem:[#allocation4 + $0x68] sm:$0xff]
        %v2305 = vld [vmem:[#allocation4 + $0x70] sm:$0xff]
        %v2306 = vld [vmem:[#allocation4 + $0x78] sm:$0xff]
        %2308 = vset.pattern.permute.xlu0 0
        %2309 = vperm.xlu0 %2308, %v2291
        %v2310 = vpop.permute.xlu0 %2309
        %2313 = vset.pattern.permute.xlu0 0
        %2314 = vperm.xlu0 %2313, %v2292
        %v2315 = vpop.permute.xlu0 %2314
        %2318 = vset.pattern.permute.xlu0 0
        %2319 = vperm.xlu0 %2318, %v2293
        %v2320 = vpop.permute.xlu0 %2319
        %2323 = vset.pattern.permute.xlu0 0
        %2324 = vperm.xlu0 %2323, %v2294
        %v2325 = vpop.permute.xlu0 %2324
        %2328 = vset.pattern.permute.xlu0 0
        %2329 = vperm.xlu0 %2328, %v2295
        %v2330 = vpop.permute.xlu0 %2329
        %2333 = vset.pattern.permute.xlu0 0
        %2334 = vperm.xlu0 %2333, %v2296
        %v2335 = vpop.permute.xlu0 %2334
        %2338 = vset.pattern.permute.xlu0 0
        %2339 = vperm.xlu0 %2338, %v2297
        %v2340 = vpop.permute.xlu0 %2339
        %2343 = vset.pattern.permute.xlu0 0
        %2344 = vperm.xlu0 %2343, %v2298
        %v2345 = vpop.permute.xlu0 %2344
        %2348 = vset.pattern.permute.xlu0 0
        %2349 = vperm.xlu0 %2348, %v2299
        %v2350 = vpop.permute.xlu0 %2349
        %2353 = vset.pattern.permute.xlu0 0
        %2354 = vperm.xlu0 %2353, %v2300
        %v2355 = vpop.permute.xlu0 %2354
        %2358 = vset.pattern.permute.xlu0 0
        %2359 = vperm.xlu0 %2358, %v2301
        %v2360 = vpop.permute.xlu0 %2359
        %2363 = vset.pattern.permute.xlu0 0
        %2364 = vperm.xlu0 %2363, %v2302
        %v2365 = vpop.permute.xlu0 %2364
        %2368 = vset.pattern.permute.xlu0 0
        %2369 = vperm.xlu0 %2368, %v2303
        %v2370 = vpop.permute.xlu0 %2369
        %2373 = vset.pattern.permute.xlu0 0
        %2374 = vperm.xlu0 %2373, %v2304
        %v2375 = vpop.permute.xlu0 %2374
        %2378 = vset.pattern.permute.xlu0 0
        %2379 = vperm.xlu0 %2378, %v2305
        %v2380 = vpop.permute.xlu0 %2379
        %2383 = vset.pattern.permute.xlu0 0
        %2384 = vperm.xlu0 %2383, %v2306
        %v2385 = vpop.permute.xlu0 %2384
        %v2387 = vmul.f32 %v2275, %v2310
        %v2388 = vmul.f32 %v2276, %v2315
        %v2389 = vmul.f32 %v2277, %v2320
        %v2390 = vmul.f32 %v2278, %v2325
        %v2391 = vmul.f32 %v2279, %v2330
        %v2392 = vmul.f32 %v2280, %v2335
        %v2393 = vmul.f32 %v2281, %v2340
        %v2394 = vmul.f32 %v2282, %v2345
        %v2395 = vmul.f32 %v2283, %v2350
        %v2396 = vmul.f32 %v2284, %v2355
        %v2397 = vmul.f32 %v2285, %v2360
        %v2398 = vmul.f32 %v2286, %v2365
        %v2399 = vmul.f32 %v2287, %v2370
        %v2400 = vmul.f32 %v2288, %v2375
        %v2401 = vmul.f32 %v2289, %v2380
        %v2402 = vmul.f32 %v2290, %v2385
        %v2403 = vld [vmem:[#allocation5] sm:$0xff]
        %v2404 = vld [vmem:[#allocation5 + $0x8] sm:$0xff]
        %v2405 = vld [vmem:[#allocation5 + $0x10] sm:$0xff]
        %v2406 = vld [vmem:[#allocation5 + $0x18] sm:$0xff]
        %v2407 = vld [vmem:[#allocation5 + $0x20] sm:$0xff]
        %v2408 = vld [vmem:[#allocation5 + $0x28] sm:$0xff]
        %v2409 = vld [vmem:[#allocation5 + $0x30] sm:$0xff]
        %v2410 = vld [vmem:[#allocation5 + $0x38] sm:$0xff]
        %v2411 = vld [vmem:[#allocation5 + $0x40] sm:$0xff]
        %v2412 = vld [vmem:[#allocation5 + $0x48] sm:$0xff]
        %v2413 = vld [vmem:[#allocation5 + $0x50] sm:$0xff]
        %v2414 = vld [vmem:[#allocation5 + $0x58] sm:$0xff]
        %v2415 = vld [vmem:[#allocation5 + $0x60] sm:$0xff]
        %v2416 = vld [vmem:[#allocation5 + $0x68] sm:$0xff]
        %v2417 = vld [vmem:[#allocation5 + $0x70] sm:$0xff]
        %v2418 = vld [vmem:[#allocation5 + $0x78] sm:$0xff]
        %2420 = vset.pattern.permute.xlu0 0
        %2421 = vperm.xlu0 %2420, %v2403
        %v2422 = vpop.permute.xlu0 %2421
        %2425 = vset.pattern.permute.xlu0 0
        %2426 = vperm.xlu0 %2425, %v2404
        %v2427 = vpop.permute.xlu0 %2426
        %2430 = vset.pattern.permute.xlu0 0
        %2431 = vperm.xlu0 %2430, %v2405
        %v2432 = vpop.permute.xlu0 %2431
        %2435 = vset.pattern.permute.xlu0 0
        %2436 = vperm.xlu0 %2435, %v2406
        %v2437 = vpop.permute.xlu0 %2436
        %2440 = vset.pattern.permute.xlu0 0
        %2441 = vperm.xlu0 %2440, %v2407
        %v2442 = vpop.permute.xlu0 %2441
        %2445 = vset.pattern.permute.xlu0 0
        %2446 = vperm.xlu0 %2445, %v2408
        %v2447 = vpop.permute.xlu0 %2446
        %2450 = vset.pattern.permute.xlu0 0
        %2451 = vperm.xlu0 %2450, %v2409
        %v2452 = vpop.permute.xlu0 %2451
        %2455 = vset.pattern.permute.xlu0 0
        %2456 = vperm.xlu0 %2455, %v2410
        %v2457 = vpop.permute.xlu0 %2456
        %2460 = vset.pattern.permute.xlu0 0
        %2461 = vperm.xlu0 %2460, %v2411
        %v2462 = vpop.permute.xlu0 %2461
        %2465 = vset.pattern.permute.xlu0 0
        %2466 = vperm.xlu0 %2465, %v2412
        %v2467 = vpop.permute.xlu0 %2466
        %2470 = vset.pattern.permute.xlu0 0
        %2471 = vperm.xlu0 %2470, %v2413
        %v2472 = vpop.permute.xlu0 %2471
        %2475 = vset.pattern.permute.xlu0 0
        %2476 = vperm.xlu0 %2475, %v2414
        %v2477 = vpop.permute.xlu0 %2476
        %2480 = vset.pattern.permute.xlu0 0
        %2481 = vperm.xlu0 %2480, %v2415
        %v2482 = vpop.permute.xlu0 %2481
        %2485 = vset.pattern.permute.xlu0 0
        %2486 = vperm.xlu0 %2485, %v2416
        %v2487 = vpop.permute.xlu0 %2486
        %2490 = vset.pattern.permute.xlu0 0
        %2491 = vperm.xlu0 %2490, %v2417
        %v2492 = vpop.permute.xlu0 %2491
        %2495 = vset.pattern.permute.xlu0 0
        %2496 = vperm.xlu0 %2495, %v2418
        %v2497 = vpop.permute.xlu0 %2496
        %v2499 = vadd.f32 %v2387, %v2422
        %v2500 = vadd.f32 %v2388, %v2427
        %v2501 = vadd.f32 %v2389, %v2432
        %v2502 = vadd.f32 %v2390, %v2437
        %v2503 = vadd.f32 %v2391, %v2442
        %v2504 = vadd.f32 %v2392, %v2447
        %v2505 = vadd.f32 %v2393, %v2452
        %v2506 = vadd.f32 %v2394, %v2457
        %v2507 = vadd.f32 %v2395, %v2462
        %v2508 = vadd.f32 %v2396, %v2467
        %v2509 = vadd.f32 %v2397, %v2472
        %v2510 = vadd.f32 %v2398, %v2477
        %v2511 = vadd.f32 %v2399, %v2482
        %v2512 = vadd.f32 %v2400, %v2487
        %v2513 = vadd.f32 %v2401, %v2492
        %v2514 = vadd.f32 %v2402, %v2497
        %v2515 = vpack.c.bf16 %v2500, %v2499
        %v2516 = vpack.c.bf16 %v2502, %v2501
        %v2517 = vpack.c.bf16 %v2504, %v2503
        %v2518 = vpack.c.bf16 %v2506, %v2505
        %v2519 = vpack.c.bf16 %v2508, %v2507
        %v2520 = vpack.c.bf16 %v2510, %v2509
        %v2521 = vpack.c.bf16 %v2512, %v2511
        %v2522 = vpack.c.bf16 %v2514, %v2513
        %v2523 = vld [vmem:[%s6] sm:$0xf]
        %v2524 = vld [vmem:[%s6 + $0x4] sm:$0xf]
        %v2525 = vld [vmem:[%s6 + $0x8] sm:$0xf]
        %v2526 = vld [vmem:[%s6 + $0xc] sm:$0xf]
        %v2527 = vld [vmem:[%s6 + $0x10] sm:$0xf]
        %v2528 = vld [vmem:[%s6 + $0x14] sm:$0xf]
        %v2529 = vld [vmem:[%s6 + $0x18] sm:$0xf]
        %v2530 = vld [vmem:[%s6 + $0x1c] sm:$0xf]
        %v2531 = vld [vmem:[%s6 + $0x20] sm:$0xf]
        %v2532 = vld [vmem:[%s6 + $0x24] sm:$0xf]
        %v2533 = vld [vmem:[%s6 + $0x28] sm:$0xf]
        %v2534 = vld [vmem:[%s6 + $0x2c] sm:$0xf]
        %v2535 = vld [vmem:[%s6 + $0x30] sm:$0xf]
        %v2536 = vld [vmem:[%s6 + $0x34] sm:$0xf]
        %v2537 = vld [vmem:[%s6 + $0x38] sm:$0xf]
        %v2538 = vld [vmem:[%s6 + $0x3c] sm:$0xf]
        %v2539 = vld [vmem:[%s7] sm:$0xff]
        %v2540 = vld [vmem:[%s7 + $0x8] sm:$0xff]
        %v2541 = vld [vmem:[%s7 + $0x10] sm:$0xff]
        %v2542 = vld [vmem:[%s7 + $0x18] sm:$0xff]
        %v2543 = vld [vmem:[%s7 + $0x20] sm:$0xff]
        %v2544 = vld [vmem:[%s7 + $0x28] sm:$0xff]
        %v2545 = vld [vmem:[%s7 + $0x30] sm:$0xff]
        %v2546 = vld [vmem:[%s7 + $0x38] sm:$0xff]
        %v2547 = vld [vmem:[%s7 + $0x40] sm:$0xff]
        %v2548 = vld [vmem:[%s7 + $0x48] sm:$0xff]
        %v2549 = vld [vmem:[%s7 + $0x50] sm:$0xff]
        %v2550 = vld [vmem:[%s7 + $0x58] sm:$0xff]
        %v2551 = vld [vmem:[%s7 + $0x60] sm:$0xff]
        %v2552 = vld [vmem:[%s7 + $0x68] sm:$0xff]
        %v2553 = vld [vmem:[%s7 + $0x70] sm:$0xff]
        %v2554 = vld [vmem:[%s7 + $0x78] sm:$0xff]
        %2556 = vset.pattern.permute.xlu0 0
        %2557 = vperm.xlu0 %2556, %v2539
        %v2558 = vpop.permute.xlu0 %2557
        %2561 = vset.pattern.permute.xlu0 0
        %2562 = vperm.xlu0 %2561, %v2540
        %v2563 = vpop.permute.xlu0 %2562
        %2566 = vset.pattern.permute.xlu0 0
        %2567 = vperm.xlu0 %2566, %v2541
        %v2568 = vpop.permute.xlu0 %2567
        %2571 = vset.pattern.permute.xlu0 0
        %2572 = vperm.xlu0 %2571, %v2542
        %v2573 = vpop.permute.xlu0 %2572
        %2576 = vset.pattern.permute.xlu0 0
        %2577 = vperm.xlu0 %2576, %v2543
        %v2578 = vpop.permute.xlu0 %2577
        %2581 = vset.pattern.permute.xlu0 0
        %2582 = vperm.xlu0 %2581, %v2544
        %v2583 = vpop.permute.xlu0 %2582
        %2586 = vset.pattern.permute.xlu0 0
        %2587 = vperm.xlu0 %2586, %v2545
        %v2588 = vpop.permute.xlu0 %2587
        %2591 = vset.pattern.permute.xlu0 0
        %2592 = vperm.xlu0 %2591, %v2546
        %v2593 = vpop.permute.xlu0 %2592
        %2596 = vset.pattern.permute.xlu0 0
        %2597 = vperm.xlu0 %2596, %v2547
        %v2598 = vpop.permute.xlu0 %2597
        %2601 = vset.pattern.permute.xlu0 0
        %2602 = vperm.xlu0 %2601, %v2548
        %v2603 = vpop.permute.xlu0 %2602
        %2606 = vset.pattern.permute.xlu0 0
        %2607 = vperm.xlu0 %2606, %v2549
        %v2608 = vpop.permute.xlu0 %2607
        %2611 = vset.pattern.permute.xlu0 0
        %2612 = vperm.xlu0 %2611, %v2550
        %v2613 = vpop.permute.xlu0 %2612
        %2616 = vset.pattern.permute.xlu0 0
        %2617 = vperm.xlu0 %2616, %v2551
        %v2618 = vpop.permute.xlu0 %2617
        %2621 = vset.pattern.permute.xlu0 0
        %2622 = vperm.xlu0 %2621, %v2552
        %v2623 = vpop.permute.xlu0 %2622
        %2626 = vset.pattern.permute.xlu0 0
        %2627 = vperm.xlu0 %2626, %v2553
        %v2628 = vpop.permute.xlu0 %2627
        %2631 = vset.pattern.permute.xlu0 0
        %2632 = vperm.xlu0 %2631, %v2554
        %v2633 = vpop.permute.xlu0 %2632
        %v2651 = vunpack.c.l.b16 %v2523
        %v2652 = vunpack.c.l.b16 %v2524
        %v2653 = vunpack.c.l.b16 %v2525
        %v2654 = vunpack.c.l.b16 %v2526
        %v2655 = vunpack.c.l.b16 %v2527
        %v2656 = vunpack.c.l.b16 %v2528
        %v2657 = vunpack.c.l.b16 %v2529
        %v2658 = vunpack.c.l.b16 %v2530
        %v2659 = vunpack.c.l.b16 %v2531
        %v2660 = vunpack.c.l.b16 %v2532
        %v2661 = vunpack.c.l.b16 %v2533
        %v2662 = vunpack.c.l.b16 %v2534
        %v2663 = vunpack.c.l.b16 %v2535
        %v2664 = vunpack.c.l.b16 %v2536
        %v2665 = vunpack.c.l.b16 %v2537
        %v2666 = vunpack.c.l.b16 %v2538
        %v2667 = vpack.c.b16 %v2652, %v2651
        %v2668 = vpack.c.b16 %v2654, %v2653
        %v2669 = vpack.c.b16 %v2656, %v2655
        %v2670 = vpack.c.b16 %v2658, %v2657
        %v2671 = vpack.c.b16 %v2660, %v2659
        %v2672 = vpack.c.b16 %v2662, %v2661
        %v2673 = vpack.c.b16 %v2664, %v2663
        %v2674 = vpack.c.b16 %v2666, %v2665
        %2683 = vmatprep.subr.bf16.mxu0 0
        %2684 = vmatpush1.bf16.msra.mxu0 %v2515
        %2685 = vmatprep.subr.bf16.mxu0 0
        %2686 = vmatpush1.bf16.msra.mxu0 %v2516
        %2687 = vmatprep.subr.bf16.mxu0 0
        %2688 = vmatpush1.bf16.msra.mxu0 %v2517
        %2689 = vmatprep.subr.bf16.mxu0 0
        %2690 = vmatpush1.bf16.msra.mxu0 %v2518
        %2691 = vmatprep.subr.bf16.mxu0 0
        %2692 = vmatpush1.bf16.msra.mxu0 %v2519
        %2693 = vmatprep.subr.bf16.mxu0 0
        %2694 = vmatpush1.bf16.msra.mxu0 %v2520
        %2695 = vmatprep.subr.bf16.mxu0 0
        %2696 = vmatpush1.bf16.msra.mxu0 %v2521
        %2697 = vmatprep.subr.bf16.mxu0 0
        %2698 = vmatpush1.bf16.msra.mxu0 %v2522
        %2699 = vmatprep.subr.bf16.mxu0 0
        %2700 = vmatpush1.bf16.msra.mxu0 0
        %2701 = vmatprep.subr.bf16.mxu0 0
        %2702 = vmatpush1.bf16.msra.mxu0 0
        %2703 = vmatprep.subr.bf16.mxu0 0
        %2704 = vmatpush1.bf16.msra.mxu0 0
        %2705 = vmatprep.subr.bf16.mxu0 0
        %2706 = vmatpush1.bf16.msra.mxu0 0
        %2707 = vmatprep.subr.bf16.mxu0 0
        %2708 = vmatpush1.bf16.msra.mxu0 0
        %2709 = vmatprep.subr.bf16.mxu0 0
        %2710 = vmatpush1.bf16.msra.mxu0 0
        %2711 = vmatprep.subr.bf16.mxu0 0
        %2712 = vmatpush1.bf16.msra.mxu0 0
        %2713 = vmatprep.subr.bf16.mxu0 0
        %2714 = vmatpush1.bf16.msra.mxu0 0
        %2715 = vmatprep.mubr.bf16.mxu0 0
        %2716 = vmatmul.mubr.bf16.gmra.mrb[0].mxu0 %v2667
        %v2717 = vpop.f32.mrb[0].mxu0
        %v2718 = vadd.f32 %v2558, %v2717
        %v2719 = vpop.f32.mrb[0].mxu0
        %v2720 = vpop.f32.mrb[0].mxu0
        %v2721 = vadd.f32 %v2563, %v2720
        %v2722 = vpop.f32.mrb[0].mxu0
        %2723 = vmatprep.mubr.bf16.mxu0 0
        %2724 = vmatmul.mubr.bf16.gmra.mrb[0].mxu0 %v2668
        %v2725 = vpop.f32.mrb[0].mxu0
        %v2726 = vadd.f32 %v2568, %v2725
        %v2727 = vpop.f32.mrb[0].mxu0
        %v2728 = vpop.f32.mrb[0].mxu0
        %v2729 = vadd.f32 %v2573, %v2728
        %v2730 = vpop.f32.mrb[0].mxu0
        %2731 = vmatprep.mubr.bf16.mxu0 0
        %2732 = vmatmul.mubr.bf16.gmra.mrb[0].mxu0 %v2669
        %v2733 = vpop.f32.mrb[0].mxu0
        %v2734 = vadd.f32 %v2578, %v2733
        %v2735 = vpop.f32.mrb[0].mxu0
        %v2736 = vpop.f32.mrb[0].mxu0
        %v2737 = vadd.f32 %v2583, %v2736
        %v2738 = vpop.f32.mrb[0].mxu0
        %2739 = vmatprep.mubr.bf16.mxu0 0
        %2740 = vmatmul.mubr.bf16.gmra.mrb[0].mxu0 %v2670
        %v2741 = vpop.f32.mrb[0].mxu0
        %v2742 = vadd.f32 %v2588, %v2741
        %v2743 = vpop.f32.mrb[0].mxu0
        %v2744 = vpop.f32.mrb[0].mxu0
        %v2745 = vadd.f32 %v2593, %v2744
        %v2746 = vpop.f32.mrb[0].mxu0
        %2747 = vmatprep.mubr.bf16.mxu0 0
        %2748 = vmatmul.mubr.bf16.gmra.mrb[0].mxu0 %v2671
        %v2749 = vpop.f32.mrb[0].mxu0
        %v2750 = vadd.f32 %v2598, %v2749
        %v2751 = vpop.f32.mrb[0].mxu0
        %v2752 = vpop.f32.mrb[0].mxu0
        %v2753 = vadd.f32 %v2603, %v2752
        %v2754 = vpop.f32.mrb[0].mxu0
        %2755 = vmatprep.mubr.bf16.mxu0 0
        %2756 = vmatmul.mubr.bf16.gmra.mrb[0].mxu0 %v2672
        %v2757 = vpop.f32.mrb[0].mxu0
        %v2758 = vadd.f32 %v2608, %v2757
        %v2759 = vpop.f32.mrb[0].mxu0
        %v2760 = vpop.f32.mrb[0].mxu0
        %v2761 = vadd.f32 %v2613, %v2760
        %v2762 = vpop.f32.mrb[0].mxu0
        %2763 = vmatprep.mubr.bf16.mxu0 0
        %2764 = vmatmul.mubr.bf16.gmra.mrb[0].mxu0 %v2673
        %v2765 = vpop.f32.mrb[0].mxu0
        %v2766 = vadd.f32 %v2618, %v2765
        %v2767 = vpop.f32.mrb[0].mxu0
        %v2768 = vpop.f32.mrb[0].mxu0
        %v2769 = vadd.f32 %v2623, %v2768
        %v2770 = vpop.f32.mrb[0].mxu0
        %2771 = vmatprep.mubr.bf16.mxu0 0
        %2772 = vmatmul.mubr.bf16.gmra.mrb[0].mxu0 %v2674
        %v2773 = vpop.f32.mrb[0].mxu0
        %v2774 = vadd.f32 %v2628, %v2773
        %v2775 = vpop.f32.mrb[0].mxu0
        %v2776 = vpop.f32.mrb[0].mxu0
        %v2777 = vadd.f32 %v2633, %v2776
        %v2778 = vpop.f32.mrb[0].mxu0
        %2779 = vdwg.mxu0
        %v2780 = vpack.c.bf16 %v2721, %v2718
        %v2781 = vpack.c.bf16 %v2729, %v2726
        %v2782 = vpack.c.bf16 %v2737, %v2734
        %v2783 = vpack.c.bf16 %v2745, %v2742
        %v2784 = vpack.c.bf16 %v2753, %v2750
        %v2785 = vpack.c.bf16 %v2761, %v2758
        %v2786 = vpack.c.bf16 %v2769, %v2766
        %v2787 = vpack.c.bf16 %v2777, %v2774
        %v2788 = vld [vmem:[#allocation2] sm:$0xff]
        %v2789 = vld [vmem:[#allocation2 + $0x8] sm:$0xff]
        %v2790 = vld [vmem:[#allocation2 + $0x10] sm:$0xff]
        %v2791 = vld [vmem:[#allocation2 + $0x18] sm:$0xff]
        %v2792 = vld [vmem:[#allocation2 + $0x20] sm:$0xff]
        %v2793 = vld [vmem:[#allocation2 + $0x28] sm:$0xff]
        %v2794 = vld [vmem:[#allocation2 + $0x30] sm:$0xff]
        %v2795 = vld [vmem:[#allocation2 + $0x38] sm:$0xff]
        %v2796 = vld [vmem:[#allocation2 + $0x40] sm:$0xff]
        %v2797 = vld [vmem:[#allocation2 + $0x48] sm:$0xff]
        %v2798 = vld [vmem:[#allocation2 + $0x50] sm:$0xff]
        %v2799 = vld [vmem:[#allocation2 + $0x58] sm:$0xff]
        %v2800 = vld [vmem:[#allocation2 + $0x60] sm:$0xff]
        %v2801 = vld [vmem:[#allocation2 + $0x68] sm:$0xff]
        %v2802 = vld [vmem:[#allocation2 + $0x70] sm:$0xff]
        %v2803 = vld [vmem:[#allocation2 + $0x78] sm:$0xff]
        %2804 = vxpose.xlu0.c.b16.start [1/8] %v2788, 128
        %2805 = vxpose.xlu0.c.b16.cont [2/8] %v2790, 128
        %2806 = vxpose.xlu0.c.b16.cont [3/8] %v2792, 128
        %2807 = vxpose.xlu0.c.b16.cont [4/8] %v2794, 128
        %2808 = vxpose.xlu0.c.b16.cont [5/8] %v2796, 128
        %2809 = vxpose.xlu0.c.b16.cont [6/8] %v2798, 128
        %2810 = vxpose.xlu0.c.b16.cont [7/8] %v2800, 128
        %2811 = vxpose.xlu0.c.b16.end [8/8] %v2802, 128
        %v2812 = vpop.trf.xlu0
        %v2813 = vpop.trf.xlu0
        %v2814 = vpop.trf.xlu0
        %v2815 = vpop.trf.xlu0
        %v2816 = vpop.trf.xlu0
        %v2817 = vpop.trf.xlu0
        %v2818 = vpop.trf.xlu0
        %v2819 = vpop.trf.xlu0
        %2820 = vxpose.xlu0.c.b16.start [1/8] %v2789, 128
        %2821 = vxpose.xlu0.c.b16.cont [2/8] %v2791, 128
        %2822 = vxpose.xlu0.c.b16.cont [3/8] %v2793, 128
        %2823 = vxpose.xlu0.c.b16.cont [4/8] %v2795, 128
        %2824 = vxpose.xlu0.c.b16.cont [5/8] %v2797, 128
        %2825 = vxpose.xlu0.c.b16.cont [6/8] %v2799, 128
        %2826 = vxpose.xlu0.c.b16.cont [7/8] %v2801, 128
        %2827 = vxpose.xlu0.c.b16.end [8/8] %v2803, 128
        %v2828 = vpop.trf.xlu0
        %v2829 = vpop.trf.xlu0
        %v2830 = vpop.trf.xlu0
        %v2831 = vpop.trf.xlu0
        %v2832 = vpop.trf.xlu0
        %v2833 = vpop.trf.xlu0
        %v2834 = vpop.trf.xlu0
        %v2835 = vpop.trf.xlu0
        %2836 = vmatprep.subr.bf16.mxu0 0
        %2837 = vmatpush1.bf16.msra.mxu0 %v2780
        %2838 = vmatprep.subr.bf16.mxu0 0
        %2839 = vmatpush1.bf16.msra.mxu0 %v2781
        %2840 = vmatprep.subr.bf16.mxu0 0
        %2841 = vmatpush1.bf16.msra.mxu0 %v2782
        %2842 = vmatprep.subr.bf16.mxu0 0
        %2843 = vmatpush1.bf16.msra.mxu0 %v2783
        %2844 = vmatprep.subr.bf16.mxu0 0
        %2845 = vmatpush1.bf16.msra.mxu0 %v2784
        %2846 = vmatprep.subr.bf16.mxu0 0
        %2847 = vmatpush1.bf16.msra.mxu0 %v2785
        %2848 = vmatprep.subr.bf16.mxu0 0
        %2849 = vmatpush1.bf16.msra.mxu0 %v2786
        %2850 = vmatprep.subr.bf16.mxu0 0
        %2851 = vmatpush1.bf16.msra.mxu0 %v2787
        %2852 = vmatprep.subr.bf16.mxu0 0
        %2853 = vmatpush1.bf16.msra.mxu0 0
        %2854 = vmatprep.subr.bf16.mxu0 0
        %2855 = vmatpush1.bf16.msra.mxu0 0
        %2856 = vmatprep.subr.bf16.mxu0 0
        %2857 = vmatpush1.bf16.msra.mxu0 0
        %2858 = vmatprep.subr.bf16.mxu0 0
        %2859 = vmatpush1.bf16.msra.mxu0 0
        %2860 = vmatprep.subr.bf16.mxu0 0
        %2861 = vmatpush1.bf16.msra.mxu0 0
        %2862 = vmatprep.subr.bf16.mxu0 0
        %2863 = vmatpush1.bf16.msra.mxu0 0
        %2864 = vmatprep.subr.bf16.mxu0 0
        %2865 = vmatpush1.bf16.msra.mxu0 0
        %2866 = vmatprep.subr.bf16.mxu0 0
        %2867 = vmatpush1.bf16.msra.mxu0 0
        %2868 = vmatprep.mubr.bf16.mxu0 0
        %2869 = vmatmul.mubr.bf16.gmra.mrb[0].mxu0 %v2812
        %v2870 = vpop.f32.mrb[0].mxu0
        %v2871 = vadd.f32 0.0, %v2870
        %v2872 = vpop.f32.mrb[0].mxu0
        %v2873 = vpop.f32.mrb[0].mxu0
        %v2874 = vadd.f32 0.0, %v2873
        %v2875 = vpop.f32.mrb[0].mxu0
        %2876 = vmatprep.mubr.bf16.mxu0 0
        %2877 = vmatmul.mubr.bf16.gmra.mrb[0].mxu0 %v2813
        %v2878 = vpop.f32.mrb[0].mxu0
        %v2879 = vadd.f32 0.0, %v2878
        %v2880 = vpop.f32.mrb[0].mxu0
        %v2881 = vpop.f32.mrb[0].mxu0
        %v2882 = vadd.f32 0.0, %v2881
        %v2883 = vpop.f32.mrb[0].mxu0
        %2884 = vmatprep.mubr.bf16.mxu0 0
        %2885 = vmatmul.mubr.bf16.gmra.mrb[0].mxu0 %v2814
        %v2886 = vpop.f32.mrb[0].mxu0
        %v2887 = vadd.f32 0.0, %v2886
        %v2888 = vpop.f32.mrb[0].mxu0
        %v2889 = vpop.f32.mrb[0].mxu0
        %v2890 = vadd.f32 0.0, %v2889
        %v2891 = vpop.f32.mrb[0].mxu0
        %2892 = vmatprep.mubr.bf16.mxu0 0
        %2893 = vmatmul.mubr.bf16.gmra.mrb[0].mxu0 %v2815
        %v2894 = vpop.f32.mrb[0].mxu0
        %v2895 = vadd.f32 0.0, %v2894
        %v2896 = vpop.f32.mrb[0].mxu0
        %v2897 = vpop.f32.mrb[0].mxu0
        %v2898 = vadd.f32 0.0, %v2897
        %v2899 = vpop.f32.mrb[0].mxu0
        %2900 = vmatprep.mubr.bf16.mxu0 0
        %2901 = vmatmul.mubr.bf16.gmra.mrb[0].mxu0 %v2816
        %v2902 = vpop.f32.mrb[0].mxu0
        %v2903 = vadd.f32 0.0, %v2902
        %v2904 = vpop.f32.mrb[0].mxu0
        %v2905 = vpop.f32.mrb[0].mxu0
        %v2906 = vadd.f32 0.0, %v2905
        %v2907 = vpop.f32.mrb[0].mxu0
        %2908 = vmatprep.mubr.bf16.mxu0 0
        %2909 = vmatmul.mubr.bf16.gmra.mrb[0].mxu0 %v2817
        %v2910 = vpop.f32.mrb[0].mxu0
        %v2911 = vadd.f32 0.0, %v2910
        %v2912 = vpop.f32.mrb[0].mxu0
        %v2913 = vpop.f32.mrb[0].mxu0
        %v2914 = vadd.f32 0.0, %v2913
        %v2915 = vpop.f32.mrb[0].mxu0
        %2916 = vmatprep.mubr.bf16.mxu0 0
        %2917 = vmatmul.mubr.bf16.gmra.mrb[0].mxu0 %v2818
        %v2918 = vpop.f32.mrb[0].mxu0
        %v2919 = vadd.f32 0.0, %v2918
        %v2920 = vpop.f32.mrb[0].mxu0
        %v2921 = vpop.f32.mrb[0].mxu0
        %v2922 = vadd.f32 0.0, %v2921
        %v2923 = vpop.f32.mrb[0].mxu0
        %2924 = vmatprep.mubr.bf16.mxu0 0
        %2925 = vmatmul.mubr.bf16.gmra.mrb[0].mxu0 %v2819
        %v2926 = vpop.f32.mrb[0].mxu0
        %v2927 = vadd.f32 0.0, %v2926
        %v2928 = vpop.f32.mrb[0].mxu0
        %v2929 = vpop.f32.mrb[0].mxu0
        %v2930 = vadd.f32 0.0, %v2929
        %v2931 = vpop.f32.mrb[0].mxu0
        %2932 = vmatprep.mubr.bf16.mxu0 0
        %2933 = vmatmul.mubr.bf16.gmra.mrb[0].mxu0 %v2828
        %v2934 = vpop.f32.mrb[0].mxu0
        %v2935 = vadd.f32 0.0, %v2934
        %v2936 = vpop.f32.mrb[0].mxu0
        %v2937 = vpop.f32.mrb[0].mxu0
        %v2938 = vadd.f32 0.0, %v2937
        %v2939 = vpop.f32.mrb[0].mxu0
        %2940 = vmatprep.mubr.bf16.mxu0 0
        %2941 = vmatmul.mubr.bf16.gmra.mrb[0].mxu0 %v2829
        %v2942 = vpop.f32.mrb[0].mxu0
        %v2943 = vadd.f32 0.0, %v2942
        %v2944 = vpop.f32.mrb[0].mxu0
        %v2945 = vpop.f32.mrb[0].mxu0
        %v2946 = vadd.f32 0.0, %v2945
        %v2947 = vpop.f32.mrb[0].mxu0
        %2948 = vmatprep.mubr.bf16.mxu0 0
        %2949 = vmatmul.mubr.bf16.gmra.mrb[0].mxu0 %v2830
        %v2950 = vpop.f32.mrb[0].mxu0
        %v2951 = vadd.f32 0.0, %v2950
        %v2952 = vpop.f32.mrb[0].mxu0
        %v2953 = vpop.f32.mrb[0].mxu0
        %v2954 = vadd.f32 0.0, %v2953
        %v2955 = vpop.f32.mrb[0].mxu0
        %2956 = vmatprep.mubr.bf16.mxu0 0
        %2957 = vmatmul.mubr.bf16.gmra.mrb[0].mxu0 %v2831
        %v2958 = vpop.f32.mrb[0].mxu0
        %v2959 = vadd.f32 0.0, %v2958
        %v2960 = vpop.f32.mrb[0].mxu0
        %v2961 = vpop.f32.mrb[0].mxu0
        %v2962 = vadd.f32 0.0, %v2961
        %v2963 = vpop.f32.mrb[0].mxu0
        %2964 = vmatprep.mubr.bf16.mxu0 0
        %2965 = vmatmul.mubr.bf16.gmra.mrb[0].mxu0 %v2832
        %v2966 = vpop.f32.mrb[0].mxu0
        %v2967 = vadd.f32 0.0, %v2966
        %v2968 = vpop.f32.mrb[0].mxu0
        %v2969 = vpop.f32.mrb[0].mxu0
        %v2970 = vadd.f32 0.0, %v2969
        %v2971 = vpop.f32.mrb[0].mxu0
        %2972 = vmatprep.mubr.bf16.mxu0 0
        %2973 = vmatmul.mubr.bf16.gmra.mrb[0].mxu0 %v2833
        %v2974 = vpop.f32.mrb[0].mxu0
        %v2975 = vadd.f32 0.0, %v2974
        %v2976 = vpop.f32.mrb[0].mxu0
        %v2977 = vpop.f32.mrb[0].mxu0
        %v2978 = vadd.f32 0.0, %v2977
        %v2979 = vpop.f32.mrb[0].mxu0
        %2980 = vmatprep.mubr.bf16.mxu0 0
        %2981 = vmatmul.mubr.bf16.gmra.mrb[0].mxu0 %v2834
        %v2982 = vpop.f32.mrb[0].mxu0
        %v2983 = vadd.f32 0.0, %v2982
        %v2984 = vpop.f32.mrb[0].mxu0
        %v2985 = vpop.f32.mrb[0].mxu0
        %v2986 = vadd.f32 0.0, %v2985
        %v2987 = vpop.f32.mrb[0].mxu0
        %2988 = vmatprep.mubr.bf16.mxu0 0
        %2989 = vmatmul.mubr.bf16.gmra.mrb[0].mxu0 %v2835
        %v2990 = vpop.f32.mrb[0].mxu0
        %v2991 = vadd.f32 0.0, %v2990
        %v2992 = vpop.f32.mrb[0].mxu0
        %v2993 = vpop.f32.mrb[0].mxu0
        %v2994 = vadd.f32 0.0, %v2993
        %v2995 = vpop.f32.mrb[0].mxu0
        %2996 = vdwg.mxu0
        %v2997 = vmax.f32 %v2871, %v2887
        %v2998 = vmax.f32 %v2874, %v2890
        %v2999 = vmax.f32 %v2879, %v2895
        %v3000 = vmax.f32 %v2882, %v2898
        %v3001 = vmax.f32 %v2997, %v2903
        %v3002 = vmax.f32 %v2998, %v2906
        %v3003 = vmax.f32 %v2999, %v2911
        %v3004 = vmax.f32 %v3000, %v2914
        %v3005 = vmax.f32 %v3001, %v2919
        %v3006 = vmax.f32 %v3002, %v2922
        %v3007 = vmax.f32 %v3003, %v2927
        %v3008 = vmax.f32 %v3004, %v2930
        %v3009 = vmax.f32 %v3005, %v2935
        %v3010 = vmax.f32 %v3006, %v2938
        %v3011 = vmax.f32 %v3007, %v2943
        %v3012 = vmax.f32 %v3008, %v2946
        %v3013 = vmax.f32 %v3009, %v2951
        %v3014 = vmax.f32 %v3010, %v2954
        %v3015 = vmax.f32 %v3011, %v2959
        %v3016 = vmax.f32 %v3012, %v2962
        %v3017 = vmax.f32 %v3013, %v2967
        %v3018 = vmax.f32 %v3014, %v2970
        %v3019 = vmax.f32 %v3015, %v2975
        %v3020 = vmax.f32 %v3016, %v2978
        %v3021 = vmax.f32 %v3017, %v2983
        %v3022 = vmax.f32 %v3018, %v2986
        %v3023 = vmax.f32 %v3019, %v2991
        %v3024 = vmax.f32 %v3020, %v2994
        %v3025 = vmax.f32 %v3021, %v3022
        %v3026 = vmax.f32 %v3023, %v3024
        %v3027 = vmax.f32 %v3025, %v3026
        %v3028 = vrot.slane %v3027, 4
        %v3029 = vmax.f32 %v3027, %v3028
        %v3030 = vrot.slane %v3029, 2
        %v3031 = vmax.f32 %v3029, %v3030
        %v3032 = vrot.slane %v3031, 1
        %v3033 = vmax.f32 %v3031, %v3032
        %v3034 = vsub.f32 %v2871, %v3033
        %v3035 = vsub.f32 %v2874, %v3033
        %v3036 = vsub.f32 %v2879, %v3033
        %v3037 = vsub.f32 %v2882, %v3033
        %v3038 = vsub.f32 %v2887, %v3033
        %v3039 = vsub.f32 %v2890, %v3033
        %v3040 = vsub.f32 %v2895, %v3033
        %v3041 = vsub.f32 %v2898, %v3033
        %v3042 = vsub.f32 %v2903, %v3033
        %v3043 = vsub.f32 %v2906, %v3033
        %v3044 = vsub.f32 %v2911, %v3033
        %v3045 = vsub.f32 %v2914, %v3033
        %v3046 = vsub.f32 %v2919, %v3033
        %v3047 = vsub.f32 %v2922, %v3033
        %v3048 = vsub.f32 %v2927, %v3033
        %v3049 = vsub.f32 %v2930, %v3033
        %v3050 = vsub.f32 %v2935, %v3033
        %v3051 = vsub.f32 %v2938, %v3033
        %v3052 = vsub.f32 %v2943, %v3033
        %v3053 = vsub.f32 %v2946, %v3033
        %v3054 = vsub.f32 %v2951, %v3033
        %v3055 = vsub.f32 %v2954, %v3033
        %v3056 = vsub.f32 %v2959, %v3033
        %v3057 = vsub.f32 %v2962, %v3033
        %v3058 = vsub.f32 %v2967, %v3033
        %v3059 = vsub.f32 %v2970, %v3033
        %v3060 = vsub.f32 %v2975, %v3033
        %v3061 = vsub.f32 %v2978, %v3033
        %v3062 = vsub.f32 %v2983, %v3033
        %v3063 = vsub.f32 %v2986, %v3033
        %v3064 = vsub.f32 %v2991, %v3033
        %v3065 = vsub.f32 %v2994, %v3033
        %v3066 = vmul.f32 %v3034, 1.442695
        %v3067 = vpow.pop %v3066
        %v3068 = vmul.f32 %v3035, 1.442695
        %v3069 = vpow.pop %v3068
        %v3070 = vmul.f32 %v3036, 1.442695
        %v3071 = vpow.pop %v3070
        %v3072 = vmul.f32 %v3037, 1.442695
        %v3073 = vpow.pop %v3072
        %v3074 = vmul.f32 %v3038, 1.442695
        %v3075 = vpow.pop %v3074
        %v3076 = vmul.f32 %v3039, 1.442695
        %v3077 = vpow.pop %v3076
        %v3078 = vmul.f32 %v3040, 1.442695
        %v3079 = vpow.pop %v3078
        %v3080 = vmul.f32 %v3041, 1.442695
        %v3081 = vpow.pop %v3080
        %v3082 = vmul.f32 %v3042, 1.442695
        %v3083 = vpow.pop %v3082
        %v3084 = vmul.f32 %v3043, 1.442695
        %v3085 = vpow.pop %v3084
        %v3086 = vmul.f32 %v3044, 1.442695
        %v3087 = vpow.pop %v3086
        %v3088 = vmul.f32 %v3045, 1.442695
        %v3089 = vpow.pop %v3088
        %v3090 = vmul.f32 %v3046, 1.442695
        %v3091 = vpow.pop %v3090
        %v3092 = vmul.f32 %v3047, 1.442695
        %v3093 = vpow.pop %v3092
        %v3094 = vmul.f32 %v3048, 1.442695
        %v3095 = vpow.pop %v3094
        %v3096 = vmul.f32 %v3049, 1.442695
        %v3097 = vpow.pop %v3096
        %v3098 = vmul.f32 %v3050, 1.442695
        %v3099 = vpow.pop %v3098
        %v3100 = vmul.f32 %v3051, 1.442695
        %v3101 = vpow.pop %v3100
        %v3102 = vmul.f32 %v3052, 1.442695
        %v3103 = vpow.pop %v3102
        %v3104 = vmul.f32 %v3053, 1.442695
        %v3105 = vpow.pop %v3104
        %v3106 = vmul.f32 %v3054, 1.442695
        %v3107 = vpow.pop %v3106
        %v3108 = vmul.f32 %v3055, 1.442695
        %v3109 = vpow.pop %v3108
        %v3110 = vmul.f32 %v3056, 1.442695
        %v3111 = vpow.pop %v3110
        %v3112 = vmul.f32 %v3057, 1.442695
        %v3113 = vpow.pop %v3112
        %v3114 = vmul.f32 %v3058, 1.442695
        %v3115 = vpow.pop %v3114
        %v3116 = vmul.f32 %v3059, 1.442695
        %v3117 = vpow.pop %v3116
        %v3118 = vmul.f32 %v3060, 1.442695
        %v3119 = vpow.pop %v3118
        %v3120 = vmul.f32 %v3061, 1.442695
        %v3121 = vpow.pop %v3120
        %v3122 = vmul.f32 %v3062, 1.442695
        %v3123 = vpow.pop %v3122
        %v3124 = vmul.f32 %v3063, 1.442695
        %v3125 = vpow.pop %v3124
        %v3126 = vmul.f32 %v3064, 1.442695
        %v3127 = vpow.pop %v3126
        %v3128 = vmul.f32 %v3065, 1.442695
        %v3129 = vpow.pop %v3128
        %v3130 = vadd.f32 %v3067, %v3069
        %v3131 = vadd.f32 %v3130, %v3071
        %v3132 = vadd.f32 %v3131, %v3073
        %v3133 = vadd.f32 %v3132, %v3075
        %v3134 = vadd.f32 %v3133, %v3077
        %v3135 = vadd.f32 %v3134, %v3079
        %v3136 = vadd.f32 %v3135, %v3081
        %v3137 = vadd.f32 %v3136, %v3083
        %v3138 = vadd.f32 %v3137, %v3085
        %v3139 = vadd.f32 %v3138, %v3087
        %v3140 = vadd.f32 %v3139, %v3089
        %v3141 = vadd.f32 %v3140, %v3091
        %v3142 = vadd.f32 %v3141, %v3093
        %v3143 = vadd.f32 %v3142, %v3095
        %v3144 = vadd.f32 %v3143, %v3097
        %v3145 = vadd.f32 %v3144, %v3099
        %v3146 = vadd.f32 %v3145, %v3101
        %v3147 = vadd.f32 %v3146, %v3103
        %v3148 = vadd.f32 %v3147, %v3105
        %v3149 = vadd.f32 %v3148, %v3107
        %v3150 = vadd.f32 %v3149, %v3109
        %v3151 = vadd.f32 %v3150, %v3111
        %v3152 = vadd.f32 %v3151, %v3113
        %v3153 = vadd.f32 %v3152, %v3115
        %v3154 = vadd.f32 %v3153, %v3117
        %v3155 = vadd.f32 %v3154, %v3119
        %v3156 = vadd.f32 %v3155, %v3121
        %v3157 = vadd.f32 %v3156, %v3123
        %v3158 = vadd.f32 %v3157, %v3125
        %v3159 = vadd.f32 %v3158, %v3127
        %v3160 = vadd.f32 %v3159, %v3129
        %v3161 = vrot.slane %v3160, 4
        %v3162 = vadd.f32 %v3160, %v3161
        %v3163 = vrot.slane %v3162, 2
        %v3164 = vadd.f32 %v3162, %v3163
        %v3165 = vrot.slane %v3164, 1
        %v3166 = vadd.f32 %v3164, %v3165
        %v3167 = vld [vmem:[#allocation3] sm:$0xff]
        %v3168 = vld [vmem:[#allocation3 + $0x8] sm:$0xff]
        %v3169 = vld [vmem:[#allocation3 + $0x10] sm:$0xff]
        %v3170 = vld [vmem:[#allocation3 + $0x18] sm:$0xff]
        %v3171 = vld [vmem:[#allocation3 + $0x20] sm:$0xff]
        %v3172 = vld [vmem:[#allocation3 + $0x28] sm:$0xff]
        %v3173 = vld [vmem:[#allocation3 + $0x30] sm:$0xff]
        %v3174 = vld [vmem:[#allocation3 + $0x38] sm:$0xff]
        %v3175 = vld [vmem:[#allocation3 + $0x40] sm:$0xff]
        %v3176 = vld [vmem:[#allocation3 + $0x48] sm:$0xff]
        %v3177 = vld [vmem:[#allocation3 + $0x50] sm:$0xff]
        %v3178 = vld [vmem:[#allocation3 + $0x58] sm:$0xff]
        %v3179 = vld [vmem:[#allocation3 + $0x60] sm:$0xff]
        %v3180 = vld [vmem:[#allocation3 + $0x68] sm:$0xff]
        %v3181 = vld [vmem:[#allocation3 + $0x70] sm:$0xff]
        %v3182 = vld [vmem:[#allocation3 + $0x78] sm:$0xff]
        %v3183 = vpack.c.bf16 %v3069, %v3067
        %v3184 = vpack.c.bf16 %v3073, %v3071
        %v3185 = vpack.c.bf16 %v3077, %v3075
        %v3186 = vpack.c.bf16 %v3081, %v3079
        %v3187 = vpack.c.bf16 %v3085, %v3083
        %v3188 = vpack.c.bf16 %v3089, %v3087
        %v3189 = vpack.c.bf16 %v3093, %v3091
        %v3190 = vpack.c.bf16 %v3097, %v3095
        %v3191 = vpack.c.bf16 %v3101, %v3099
        %v3192 = vpack.c.bf16 %v3105, %v3103
        %v3193 = vpack.c.bf16 %v3109, %v3107
        %v3194 = vpack.c.bf16 %v3113, %v3111
        %v3195 = vpack.c.bf16 %v3117, %v3115
        %v3196 = vpack.c.bf16 %v3121, %v3119
        %v3197 = vpack.c.bf16 %v3125, %v3123
        %v3198 = vpack.c.bf16 %v3129, %v3127
        %3199 = vmatprep.subr.bf16.mxu0 0
        %3200 = vmatpush1.bf16.msra.mxu0 %v3183
        %3201 = vmatprep.subr.bf16.mxu0 0
        %3202 = vmatpush1.bf16.msra.mxu0 %v3184
        %3203 = vmatprep.subr.bf16.mxu0 0
        %3204 = vmatpush1.bf16.msra.mxu0 %v3185
        %3205 = vmatprep.subr.bf16.mxu0 0
        %3206 = vmatpush1.bf16.msra.mxu0 %v3186
        %3207 = vmatprep.subr.bf16.mxu0 0
        %3208 = vmatpush1.bf16.msra.mxu0 %v3187
        %3209 = vmatprep.subr.bf16.mxu0 0
        %3210 = vmatpush1.bf16.msra.mxu0 %v3188
        %3211 = vmatprep.subr.bf16.mxu0 0
        %3212 = vmatpush1.bf16.msra.mxu0 %v3189
        %3213 = vmatprep.subr.bf16.mxu0 0
        %3214 = vmatpush1.bf16.msra.mxu0 %v3190
        %3215 = vmatprep.subr.bf16.mxu0 0
        %3216 = vmatpush1.bf16.msra.mxu0 %v3191
        %3217 = vmatprep.subr.bf16.mxu0 0
        %3218 = vmatpush1.bf16.msra.mxu0 %v3192
        %3219 = vmatprep.subr.bf16.mxu0 0
        %3220 = vmatpush1.bf16.msra.mxu0 %v3193
        %3221 = vmatprep.subr.bf16.mxu0 0
        %3222 = vmatpush1.bf16.msra.mxu0 %v3194
        %3223 = vmatprep.subr.bf16.mxu0 0
        %3224 = vmatpush1.bf16.msra.mxu0 %v3195
        %3225 = vmatprep.subr.bf16.mxu0 0
        %3226 = vmatpush1.bf16.msra.mxu0 %v3196
        %3227 = vmatprep.subr.bf16.mxu0 0
        %3228 = vmatpush1.bf16.msra.mxu0 %v3197
        %3229 = vmatprep.subr.bf16.mxu0 0
        %3230 = vmatpush1.bf16.msra.mxu0 %v3198
        %3231 = vmatprep.mubr.bf16.mxu0 %v3168
        %3232 = vmatmul.mubr.bf16.gmra.mrb[0].mxu0 %v3167
        %v3233 = vpop.f32.mrb[0].mxu0
        %v3234 = vadd.f32 0.0, %v3233
        %v3235 = vpop.f32.mrb[0].mxu0
        %v3236 = vpop.f32.mrb[0].mxu0
        %v3237 = vadd.f32 0.0, %v3236
        %v3238 = vpop.f32.mrb[0].mxu0
        %3239 = vmatprep.mubr.bf16.mxu0 %v3170
        %3240 = vmatmul.mubr.bf16.gmra.mrb[0].mxu0 %v3169
        %v3241 = vpop.f32.mrb[0].mxu0
        %v3242 = vadd.f32 0.0, %v3241
        %v3243 = vpop.f32.mrb[0].mxu0
        %v3244 = vpop.f32.mrb[0].mxu0
        %v3245 = vadd.f32 0.0, %v3244
        %v3246 = vpop.f32.mrb[0].mxu0
        %3247 = vmatprep.mubr.bf16.mxu0 %v3172
        %3248 = vmatmul.mubr.bf16.gmra.mrb[0].mxu0 %v3171
        %v3249 = vpop.f32.mrb[0].mxu0
        %v3250 = vadd.f32 0.0, %v3249
        %v3251 = vpop.f32.mrb[0].mxu0
        %v3252 = vpop.f32.mrb[0].mxu0
        %v3253 = vadd.f32 0.0, %v3252
        %v3254 = vpop.f32.mrb[0].mxu0
        %3255 = vmatprep.mubr.bf16.mxu0 %v3174
        %3256 = vmatmul.mubr.bf16.gmra.mrb[0].mxu0 %v3173
        %v3257 = vpop.f32.mrb[0].mxu0
        %v3258 = vadd.f32 0.0, %v3257
        %v3259 = vpop.f32.mrb[0].mxu0
        %v3260 = vpop.f32.mrb[0].mxu0
        %v3261 = vadd.f32 0.0, %v3260
        %v3262 = vpop.f32.mrb[0].mxu0
        %3263 = vmatprep.mubr.bf16.mxu0 %v3176
        %3264 = vmatmul.mubr.bf16.gmra.mrb[0].mxu0 %v3175
        %v3265 = vpop.f32.mrb[0].mxu0
        %v3266 = vadd.f32 0.0, %v3265
        %v3267 = vpop.f32.mrb[0].mxu0
        %v3268 = vpop.f32.mrb[0].mxu0
        %v3269 = vadd.f32 0.0, %v3268
        %v3270 = vpop.f32.mrb[0].mxu0
        %3271 = vmatprep.mubr.bf16.mxu0 %v3178
        %3272 = vmatmul.mubr.bf16.gmra.mrb[0].mxu0 %v3177
        %v3273 = vpop.f32.mrb[0].mxu0
        %v3274 = vadd.f32 0.0, %v3273
        %v3275 = vpop.f32.mrb[0].mxu0
        %v3276 = vpop.f32.mrb[0].mxu0
        %v3277 = vadd.f32 0.0, %v3276
        %v3278 = vpop.f32.mrb[0].mxu0
        %3279 = vmatprep.mubr.bf16.mxu0 %v3180
        %3280 = vmatmul.mubr.bf16.gmra.mrb[0].mxu0 %v3179
        %v3281 = vpop.f32.mrb[0].mxu0
        %v3282 = vadd.f32 0.0, %v3281
        %v3283 = vpop.f32.mrb[0].mxu0
        %v3284 = vpop.f32.mrb[0].mxu0
        %v3285 = vadd.f32 0.0, %v3284
        %v3286 = vpop.f32.mrb[0].mxu0
        %3287 = vmatprep.mubr.bf16.mxu0 %v3182
        %3288 = vmatmul.mubr.bf16.gmra.mrb[0].mxu0 %v3181
        %v3289 = vpop.f32.mrb[0].mxu0
        %v3290 = vadd.f32 0.0, %v3289
        %v3291 = vpop.f32.mrb[0].mxu0
        %v3292 = vpop.f32.mrb[0].mxu0
        %v3293 = vadd.f32 0.0, %v3292
        %v3294 = vpop.f32.mrb[0].mxu0
        %3295 = vdwg.mxu0
        %v3296 = vrcp.pop %v3166
        %v3297 = vmul.f32 %v3234, %v3296
        %v3298 = vmul.f32 %v3237, %v3296
        %v3299 = vmul.f32 %v3242, %v3296
        %v3300 = vmul.f32 %v3245, %v3296
        %v3301 = vmul.f32 %v3250, %v3296
        %v3302 = vmul.f32 %v3253, %v3296
        %v3303 = vmul.f32 %v3258, %v3296
        %v3304 = vmul.f32 %v3261, %v3296
        %v3305 = vmul.f32 %v3266, %v3296
        %v3306 = vmul.f32 %v3269, %v3296
        %v3307 = vmul.f32 %v3274, %v3296
        %v3308 = vmul.f32 %v3277, %v3296
        %v3309 = vmul.f32 %v3282, %v3296
        %v3310 = vmul.f32 %v3285, %v3296
        %v3311 = vmul.f32 %v3290, %v3296
        %v3312 = vmul.f32 %v3293, %v3296
        %v3313 = vld [vmem:[%s8] sm:$0xf]
        %v3314 = vld [vmem:[%s8 + $0x4] sm:$0xf]
        %v3315 = vld [vmem:[%s8 + $0x8] sm:$0xf]
        %v3316 = vld [vmem:[%s8 + $0xc] sm:$0xf]
        %v3317 = vld [vmem:[%s8 + $0x10] sm:$0xf]
        %v3318 = vld [vmem:[%s8 + $0x14] sm:$0xf]
        %v3319 = vld [vmem:[%s8 + $0x18] sm:$0xf]
        %v3320 = vld [vmem:[%s8 + $0x1c] sm:$0xf]
        %v3321 = vld [vmem:[%s8 + $0x20] sm:$0xf]
        %v3322 = vld [vmem:[%s8 + $0x24] sm:$0xf]
        %v3323 = vld [vmem:[%s8 + $0x28] sm:$0xf]
        %v3324 = vld [vmem:[%s8 + $0x2c] sm:$0xf]
        %v3325 = vld [vmem:[%s8 + $0x30] sm:$0xf]
        %v3326 = vld [vmem:[%s8 + $0x34] sm:$0xf]
        %v3327 = vld [vmem:[%s8 + $0x38] sm:$0xf]
        %v3328 = vld [vmem:[%s8 + $0x3c] sm:$0xf]
        %v3329 = vpack.c.bf16 %v3298, %v3297
        %v3330 = vpack.c.bf16 %v3300, %v3299
        %v3331 = vpack.c.bf16 %v3302, %v3301
        %v3332 = vpack.c.bf16 %v3304, %v3303
        %v3333 = vpack.c.bf16 %v3306, %v3305
        %v3334 = vpack.c.bf16 %v3308, %v3307
        %v3335 = vpack.c.bf16 %v3310, %v3309
        %v3336 = vpack.c.bf16 %v3312, %v3311
        %v3337 = vld [vmem:[%s9] sm:$0xff]
        %v3338 = vld [vmem:[%s9 + $0x8] sm:$0xff]
        %v3339 = vld [vmem:[%s9 + $0x10] sm:$0xff]
        %v3340 = vld [vmem:[%s9 + $0x18] sm:$0xff]
        %v3341 = vld [vmem:[%s9 + $0x20] sm:$0xff]
        %v3342 = vld [vmem:[%s9 + $0x28] sm:$0xff]
        %v3343 = vld [vmem:[%s9 + $0x30] sm:$0xff]
        %v3344 = vld [vmem:[%s9 + $0x38] sm:$0xff]
        %v3345 = vld [vmem:[%s9 + $0x40] sm:$0xff]
        %v3346 = vld [vmem:[%s9 + $0x48] sm:$0xff]
        %v3347 = vld [vmem:[%s9 + $0x50] sm:$0xff]
        %v3348 = vld [vmem:[%s9 + $0x58] sm:$0xff]
        %v3349 = vld [vmem:[%s9 + $0x60] sm:$0xff]
        %v3350 = vld [vmem:[%s9 + $0x68] sm:$0xff]
        %v3351 = vld [vmem:[%s9 + $0x70] sm:$0xff]
        %v3352 = vld [vmem:[%s9 + $0x78] sm:$0xff]
        %3354 = vset.pattern.permute.xlu0 0
        %3355 = vperm.xlu0 %3354, %v3337
        %v3356 = vpop.permute.xlu0 %3355
        %3359 = vset.pattern.permute.xlu0 0
        %3360 = vperm.xlu0 %3359, %v3338
        %v3361 = vpop.permute.xlu0 %3360
        %3364 = vset.pattern.permute.xlu0 0
        %3365 = vperm.xlu0 %3364, %v3339
        %v3366 = vpop.permute.xlu0 %3365
        %3369 = vset.pattern.permute.xlu0 0
        %3370 = vperm.xlu0 %3369, %v3340
        %v3371 = vpop.permute.xlu0 %3370
        %3374 = vset.pattern.permute.xlu0 0
        %3375 = vperm.xlu0 %3374, %v3341
        %v3376 = vpop.permute.xlu0 %3375
        %3379 = vset.pattern.permute.xlu0 0
        %3380 = vperm.xlu0 %3379, %v3342
        %v3381 = vpop.permute.xlu0 %3380
        %3384 = vset.pattern.permute.xlu0 0
        %3385 = vperm.xlu0 %3384, %v3343
        %v3386 = vpop.permute.xlu0 %3385
        %3389 = vset.pattern.permute.xlu0 0
        %3390 = vperm.xlu0 %3389, %v3344
        %v3391 = vpop.permute.xlu0 %3390
        %3394 = vset.pattern.permute.xlu0 0
        %3395 = vperm.xlu0 %3394, %v3345
        %v3396 = vpop.permute.xlu0 %3395
        %3399 = vset.pattern.permute.xlu0 0
        %3400 = vperm.xlu0 %3399, %v3346
        %v3401 = vpop.permute.xlu0 %3400
        %3404 = vset.pattern.permute.xlu0 0
        %3405 = vperm.xlu0 %3404, %v3347
        %v3406 = vpop.permute.xlu0 %3405
        %3409 = vset.pattern.permute.xlu0 0
        %3410 = vperm.xlu0 %3409, %v3348
        %v3411 = vpop.permute.xlu0 %3410
        %3414 = vset.pattern.permute.xlu0 0
        %3415 = vperm.xlu0 %3414, %v3349
        %v3416 = vpop.permute.xlu0 %3415
        %3419 = vset.pattern.permute.xlu0 0
        %3420 = vperm.xlu0 %3419, %v3350
        %v3421 = vpop.permute.xlu0 %3420
        %3424 = vset.pattern.permute.xlu0 0
        %3425 = vperm.xlu0 %3424, %v3351
        %v3426 = vpop.permute.xlu0 %3425
        %3429 = vset.pattern.permute.xlu0 0
        %3430 = vperm.xlu0 %3429, %v3352
        %v3431 = vpop.permute.xlu0 %3430
        %v3449 = vunpack.c.l.b16 %v3313
        %v3450 = vunpack.c.l.b16 %v3314
        %v3451 = vunpack.c.l.b16 %v3315
        %v3452 = vunpack.c.l.b16 %v3316
        %v3453 = vunpack.c.l.b16 %v3317
        %v3454 = vunpack.c.l.b16 %v3318
        %v3455 = vunpack.c.l.b16 %v3319
        %v3456 = vunpack.c.l.b16 %v3320
        %v3457 = vunpack.c.l.b16 %v3321
        %v3458 = vunpack.c.l.b16 %v3322
        %v3459 = vunpack.c.l.b16 %v3323
        %v3460 = vunpack.c.l.b16 %v3324
        %v3461 = vunpack.c.l.b16 %v3325
        %v3462 = vunpack.c.l.b16 %v3326
        %v3463 = vunpack.c.l.b16 %v3327
        %v3464 = vunpack.c.l.b16 %v3328
        %v3465 = vpack.c.b16 %v3450, %v3449
        %v3466 = vpack.c.b16 %v3452, %v3451
        %v3467 = vpack.c.b16 %v3454, %v3453
        %v3468 = vpack.c.b16 %v3456, %v3455
        %v3469 = vpack.c.b16 %v3458, %v3457
        %v3470 = vpack.c.b16 %v3460, %v3459
        %v3471 = vpack.c.b16 %v3462, %v3461
        %v3472 = vpack.c.b16 %v3464, %v3463
        %3481 = vmatprep.subr.bf16.mxu0 0
        %3482 = vmatpush1.bf16.msra.mxu0 %v3329
        %3483 = vmatprep.subr.bf16.mxu0 0
        %3484 = vmatpush1.bf16.msra.mxu0 %v3330
        %3485 = vmatprep.subr.bf16.mxu0 0
        %3486 = vmatpush1.bf16.msra.mxu0 %v3331
        %3487 = vmatprep.subr.bf16.mxu0 0
        %3488 = vmatpush1.bf16.msra.mxu0 %v3332
        %3489 = vmatprep.subr.bf16.mxu0 0
        %3490 = vmatpush1.bf16.msra.mxu0 %v3333
        %3491 = vmatprep.subr.bf16.mxu0 0
        %3492 = vmatpush1.bf16.msra.mxu0 %v3334
        %3493 = vmatprep.subr.bf16.mxu0 0
        %3494 = vmatpush1.bf16.msra.mxu0 %v3335
        %3495 = vmatprep.subr.bf16.mxu0 0
        %3496 = vmatpush1.bf16.msra.mxu0 %v3336
        %3497 = vmatprep.subr.bf16.mxu0 0
        %3498 = vmatpush1.bf16.msra.mxu0 0
        %3499 = vmatprep.subr.bf16.mxu0 0
        %3500 = vmatpush1.bf16.msra.mxu0 0
        %3501 = vmatprep.subr.bf16.mxu0 0
        %3502 = vmatpush1.bf16.msra.mxu0 0
        %3503 = vmatprep.subr.bf16.mxu0 0
        %3504 = vmatpush1.bf16.msra.mxu0 0
        %3505 = vmatprep.subr.bf16.mxu0 0
        %3506 = vmatpush1.bf16.msra.mxu0 0
        %3507 = vmatprep.subr.bf16.mxu0 0
        %3508 = vmatpush1.bf16.msra.mxu0 0
        %3509 = vmatprep.subr.bf16.mxu0 0
        %3510 = vmatpush1.bf16.msra.mxu0 0
        %3511 = vmatprep.subr.bf16.mxu0 0
        %3512 = vmatpush1.bf16.msra.mxu0 0
        %3513 = vmatprep.mubr.bf16.mxu0 0
        %3514 = vmatmul.mubr.bf16.gmra.mrb[0].mxu0 %v3465
        %v3515 = vpop.f32.mrb[0].mxu0
        %v3516 = vadd.f32 %v3356, %v3515
        %v3517 = vpop.f32.mrb[0].mxu0
        %v3518 = vpop.f32.mrb[0].mxu0
        %v3519 = vadd.f32 %v3361, %v3518
        %v3520 = vpop.f32.mrb[0].mxu0
        %3521 = vmatprep.mubr.bf16.mxu0 0
        %3522 = vmatmul.mubr.bf16.gmra.mrb[0].mxu0 %v3466
        %v3523 = vpop.f32.mrb[0].mxu0
        %v3524 = vadd.f32 %v3366, %v3523
        %v3525 = vpop.f32.mrb[0].mxu0
        %v3526 = vpop.f32.mrb[0].mxu0
        %v3527 = vadd.f32 %v3371, %v3526
        %v3528 = vpop.f32.mrb[0].mxu0
        %3529 = vmatprep.mubr.bf16.mxu0 0
        %3530 = vmatmul.mubr.bf16.gmra.mrb[0].mxu0 %v3467
        %v3531 = vpop.f32.mrb[0].mxu0
        %v3532 = vadd.f32 %v3376, %v3531
        %v3533 = vpop.f32.mrb[0].mxu0
        %v3534 = vpop.f32.mrb[0].mxu0
        %v3535 = vadd.f32 %v3381, %v3534
        %v3536 = vpop.f32.mrb[0].mxu0
        %3537 = vmatprep.mubr.bf16.mxu0 0
        %3538 = vmatmul.mubr.bf16.gmra.mrb[0].mxu0 %v3468
        %v3539 = vpop.f32.mrb[0].mxu0
        %v3540 = vadd.f32 %v3386, %v3539
        %v3541 = vpop.f32.mrb[0].mxu0
        %v3542 = vpop.f32.mrb[0].mxu0
        %v3543 = vadd.f32 %v3391, %v3542
        %v3544 = vpop.f32.mrb[0].mxu0
        %3545 = vmatprep.mubr.bf16.mxu0 0
        %3546 = vmatmul.mubr.bf16.gmra.mrb[0].mxu0 %v3469
        %v3547 = vpop.f32.mrb[0].mxu0
        %v3548 = vadd.f32 %v3396, %v3547
        %v3549 = vpop.f32.mrb[0].mxu0
        %v3550 = vpop.f32.mrb[0].mxu0
        %v3551 = vadd.f32 %v3401, %v3550
        %v3552 = vpop.f32.mrb[0].mxu0
        %3553 = vmatprep.mubr.bf16.mxu0 0
        %3554 = vmatmul.mubr.bf16.gmra.mrb[0].mxu0 %v3470
        %v3555 = vpop.f32.mrb[0].mxu0
        %v3556 = vadd.f32 %v3406, %v3555
        %v3557 = vpop.f32.mrb[0].mxu0
        %v3558 = vpop.f32.mrb[0].mxu0
        %v3559 = vadd.f32 %v3411, %v3558
        %v3560 = vpop.f32.mrb[0].mxu0
        %3561 = vmatprep.mubr.bf16.mxu0 0
        %3562 = vmatmul.mubr.bf16.gmra.mrb[0].mxu0 %v3471
        %v3563 = vpop.f32.mrb[0].mxu0
        %v3564 = vadd.f32 %v3416, %v3563
        %v3565 = vpop.f32.mrb[0].mxu0
        %v3566 = vpop.f32.mrb[0].mxu0
        %v3567 = vadd.f32 %v3421, %v3566
        %v3568 = vpop.f32.mrb[0].mxu0
        %3569 = vmatprep.mubr.bf16.mxu0 0
        %3570 = vmatmul.mubr.bf16.gmra.mrb[0].mxu0 %v3472
        %v3571 = vpop.f32.mrb[0].mxu0
        %v3572 = vadd.f32 %v3426, %v3571
        %v3573 = vpop.f32.mrb[0].mxu0
        %v3574 = vpop.f32.mrb[0].mxu0
        %v3575 = vadd.f32 %v3431, %v3574
        %v3576 = vpop.f32.mrb[0].mxu0
        %3577 = vdwg.mxu0
        %v3578 = vadd.f32 %v2275, %v3516
        %v3579 = vadd.f32 %v2276, %v3519
        %v3580 = vadd.f32 %v2277, %v3524
        %v3581 = vadd.f32 %v2278, %v3527
        %v3582 = vadd.f32 %v2279, %v3532
        %v3583 = vadd.f32 %v2280, %v3535
        %v3584 = vadd.f32 %v2281, %v3540
        %v3585 = vadd.f32 %v2282, %v3543
        %v3586 = vadd.f32 %v2283, %v3548
        %v3587 = vadd.f32 %v2284, %v3551
        %v3588 = vadd.f32 %v2285, %v3556
        %v3589 = vadd.f32 %v2286, %v3559
        %v3590 = vadd.f32 %v2287, %v3564
        %v3591 = vadd.f32 %v2288, %v3567
        %v3592 = vadd.f32 %v2289, %v3572
        %v3593 = vadd.f32 %v2290, %v3575
        %3594 = vst [vmem:[%s480] sm:$0xff] %v3578
        %3595 = vst [vmem:[%s480 + $0x8] sm:$0xff] %v3579
        %3596 = vst [vmem:[%s480 + $0x10] sm:$0xff] %v3580
        %3597 = vst [vmem:[%s480 + $0x18] sm:$0xff] %v3581
        %3598 = vst [vmem:[%s480 + $0x20] sm:$0xff] %v3582
        %3599 = vst [vmem:[%s480 + $0x28] sm:$0xff] %v3583
        %3600 = vst [vmem:[%s480 + $0x30] sm:$0xff] %v3584
        %3601 = vst [vmem:[%s480 + $0x38] sm:$0xff] %v3585
        %3602 = vst [vmem:[%s480 + $0x40] sm:$0xff] %v3586
        %3603 = vst [vmem:[%s480 + $0x48] sm:$0xff] %v3587
        %3604 = vst [vmem:[%s480 + $0x50] sm:$0xff] %v3588
        %3605 = vst [vmem:[%s480 + $0x58] sm:$0xff] %v3589
        %3606 = vst [vmem:[%s480 + $0x60] sm:$0xff] %v3590
        %3607 = vst [vmem:[%s480 + $0x68] sm:$0xff] %v3591
        %3608 = vst [vmem:[%s480 + $0x70] sm:$0xff] %v3592
        %3609 = vst [vmem:[%s480 + $0x78] sm:$0xff] %v3593
        %s3610 = sand.u32 %s265, 1
        %s3611 = sand.u32 %s265, 1
        %s3612 = smul.addr %s3611, 128
        %s3613 = scalar_lea.vmem [#allocation7], %s3612
        // Predicated region
        $region103: #{_lambda_.1} parent=93 // pred_check
          %p3614 = pneg %p275
        $region104: #{_lambda_.1} parent=93 // pred_check_branch
          %3616 = sbr.rel (%p3614) target = $region106
        $region105: #{_lambda_.1} parent=93 // pred_region
          %s3617 = smul.addr %s25, 32
          %s3618 = sadd.s32 %s26, %s3617
          %s3619 = smul.addr %s3618, 8
          %s3620 = scalar_lea.vmem %s10, %s3619
          // Predicated region
          $region107: #{_lambda_.1} parent=105 // pred_check
            _
          $region108: #{_lambda_.1} parent=105 // pred_check_branch
            %3622 = sbr.rel (0) target = $region110
          $region109: #{_lambda_.1} parent=105 // pred_region
            // Predicated region
            $region111: #{_lambda_.1} parent=109 // pred_check
              _
            $region112: #{_lambda_.1} parent=109 // pred_check_branch
              %3624 = sbr.rel (0) target = $region114
            $region113: #{_lambda_.1} parent=109 // pred_region
              // Predicated region
              $region126: #{_lambda_.1} parent=113 // pred_check
                _
              $region127: #{_lambda_.1} parent=113 // pred_check_branch
                %3669 = sbr.rel (0) target = $region129
              $region128: #{_lambda_.1} parent=113 // pred_region
                loop: start=0, step=1, limit=1
                $region130: #{_lambda_.1} parent=128 // loop_pre_header
                  _
                $region131: #{_lambda_.1} parent=128 // loop_header
                  %s3671 = sphi 0, %s3675
                  %p3672 = scmp.ge.s32.totalorder %s3671, 1
                  %s3676 = sphi %s3613, %s3613
                  %s3677 = sphi %s3620, %s3620
                $region132: #{_lambda_.1} parent=128 // loop_header_branch
                  %3674 = sbr.rel (%p3672) target = $region136
                $region133: #{_lambda_.1} parent=128 // loop_body
                  %v3678 = vld [vmem:[%s3676] sm:$0xff]
                  %3679 = vst [vmem:[%s3677] sm:$0xff] %v3678
                  %v3680 = vld [vmem:[%s3676 + $0x8] sm:$0xff]
                  %3681 = vst [vmem:[%s3677 + $0x10] sm:$0xff] %v3680
                  %v3682 = vld [vmem:[%s3676 + $0x10] sm:$0xff]
                  %3683 = vst [vmem:[%s3677 + $0x20] sm:$0xff] %v3682
                  %v3684 = vld [vmem:[%s3676 + $0x18] sm:$0xff]
                  %3685 = vst [vmem:[%s3677 + $0x30] sm:$0xff] %v3684
                  %v3686 = vld [vmem:[%s3676 + $0x20] sm:$0xff]
                  %3687 = vst [vmem:[%s3677 + $0x40] sm:$0xff] %v3686
                  %v3688 = vld [vmem:[%s3676 + $0x28] sm:$0xff]
                  %3689 = vst [vmem:[%s3677 + $0x50] sm:$0xff] %v3688
                  %v3690 = vld [vmem:[%s3676 + $0x30] sm:$0xff]
                  %3691 = vst [vmem:[%s3677 + $0x60] sm:$0xff] %v3690
                  %v3692 = vld [vmem:[%s3676 + $0x38] sm:$0xff]
                  %3693 = vst [vmem:[%s3677 + $0x70] sm:$0xff] %v3692
                  %v3694 = vld [vmem:[%s3676 + $0x40] sm:$0xff]
                  %3695 = vst [vmem:[%s3677 + $0x80] sm:$0xff] %v3694
                  %v3696 = vld [vmem:[%s3676 + $0x48] sm:$0xff]
                  %3697 = vst [vmem:[%s3677 + $0x90] sm:$0xff] %v3696
                  %v3698 = vld [vmem:[%s3676 + $0x50] sm:$0xff]
                  %3699 = vst [vmem:[%s3677 + $0xa0] sm:$0xff] %v3698
                  %v3700 = vld [vmem:[%s3676 + $0x58] sm:$0xff]
                  %3701 = vst [vmem:[%s3677 + $0xb0] sm:$0xff] %v3700
                  %v3702 = vld [vmem:[%s3676 + $0x60] sm:$0xff]
                  %3703 = vst [vmem:[%s3677 + $0xc0] sm:$0xff] %v3702
                  %v3704 = vld [vmem:[%s3676 + $0x68] sm:$0xff]
                  %3705 = vst [vmem:[%s3677 + $0xd0] sm:$0xff] %v3704
                  %v3706 = vld [vmem:[%s3676 + $0x70] sm:$0xff]
                  %3707 = vst [vmem:[%s3677 + $0xe0] sm:$0xff] %v3706
                  %v3708 = vld [vmem:[%s3676 + $0x78] sm:$0xff]
                  %3709 = vst [vmem:[%s3677 + $0xf0] sm:$0xff] %v3708
                $region134: #{_lambda_.1} parent=128 // loop_footer
                  %s3675 = sadd.s32 1, %s3671
                $region135: #{_lambda_.1} parent=128 // loop_footer_branch
                  %3670 = sbr.rel target = $region131
                $region136: #{_lambda_.1} parent=128 // loop_exit
                  _
              $region129: #{_lambda_.1} parent=113 // pred_fallthru
                _
              // Predicated region
              $region137: #{_lambda_.1} parent=113 // pred_check
                _
              $region138: #{_lambda_.1} parent=113 // pred_check_branch
                %3711 = sbr.rel target = $region140
              $region139: #{_lambda_.1} parent=113 // pred_region
                _
              $region140: #{_lambda_.1} parent=113 // pred_fallthru
                _
            $region114: #{_lambda_.1} parent=109 // pred_fallthru
              _
            // Predicated region
            $region115: #{_lambda_.1} parent=109 // pred_check
              _
            $region116: #{_lambda_.1} parent=109 // pred_check_branch
              %3626 = sbr.rel target = $region118
            $region117: #{_lambda_.1} parent=109 // pred_region
              loop: start=0, step=1, limit=1
              $region119: #{_lambda_.1} parent=117 // loop_pre_header
                _
              $region120: #{_lambda_.1} parent=117 // loop_header
                %s3629 = sphi 0, %s3633
                %p3630 = scmp.ge.s32.totalorder %s3629, 1
                %s3634 = sphi %s3613, %s3613
                %s3635 = sphi %s3620, %s3620
              $region121: #{_lambda_.1} parent=117 // loop_header_branch
                %3632 = sbr.rel (%p3630) target = $region125
              $region122: #{_lambda_.1} parent=117 // loop_body
                %v3636 = vld [vmem:[%s3634] sm:$0xff]
                %3637 = vst [vmem:[%s3635] sm:$0xff] %v3636
                %v3638 = vld [vmem:[%s3634 + $0x8] sm:$0xff]
                %3639 = vst [vmem:[%s3635 + $0x10] sm:$0xff] %v3638
                %v3640 = vld [vmem:[%s3634 + $0x10] sm:$0xff]
                %3641 = vst [vmem:[%s3635 + $0x20] sm:$0xff] %v3640
                %v3642 = vld [vmem:[%s3634 + $0x18] sm:$0xff]
                %3643 = vst [vmem:[%s3635 + $0x30] sm:$0xff] %v3642
                %v3644 = vld [vmem:[%s3634 + $0x20] sm:$0xff]
                %3645 = vst [vmem:[%s3635 + $0x40] sm:$0xff] %v3644
                %v3646 = vld [vmem:[%s3634 + $0x28] sm:$0xff]
                %3647 = vst [vmem:[%s3635 + $0x50] sm:$0xff] %v3646
                %v3648 = vld [vmem:[%s3634 + $0x30] sm:$0xff]
                %3649 = vst [vmem:[%s3635 + $0x60] sm:$0xff] %v3648
                %v3650 = vld [vmem:[%s3634 + $0x38] sm:$0xff]
                %3651 = vst [vmem:[%s3635 + $0x70] sm:$0xff] %v3650
                %v3652 = vld [vmem:[%s3634 + $0x40] sm:$0xff]
                %3653 = vst [vmem:[%s3635 + $0x80] sm:$0xff] %v3652
                %v3654 = vld [vmem:[%s3634 + $0x48] sm:$0xff]
                %3655 = vst [vmem:[%s3635 + $0x90] sm:$0xff] %v3654
                %v3656 = vld [vmem:[%s3634 + $0x50] sm:$0xff]
                %3657 = vst [vmem:[%s3635 + $0xa0] sm:$0xff] %v3656
                %v3658 = vld [vmem:[%s3634 + $0x58] sm:$0xff]
                %3659 = vst [vmem:[%s3635 + $0xb0] sm:$0xff] %v3658
                %v3660 = vld [vmem:[%s3634 + $0x60] sm:$0xff]
                %3661 = vst [vmem:[%s3635 + $0xc0] sm:$0xff] %v3660
                %v3662 = vld [vmem:[%s3634 + $0x68] sm:$0xff]
                %3663 = vst [vmem:[%s3635 + $0xd0] sm:$0xff] %v3662
                %v3664 = vld [vmem:[%s3634 + $0x70] sm:$0xff]
                %3665 = vst [vmem:[%s3635 + $0xe0] sm:$0xff] %v3664
                %v3666 = vld [vmem:[%s3634 + $0x78] sm:$0xff]
                %3667 = vst [vmem:[%s3635 + $0xf0] sm:$0xff] %v3666
              $region123: #{_lambda_.1} parent=117 // loop_footer
                %s3633 = sadd.s32 1, %s3629
              $region124: #{_lambda_.1} parent=117 // loop_footer_branch
                %3628 = sbr.rel target = $region120
              $region125: #{_lambda_.1} parent=117 // loop_exit
                _
            $region118: #{_lambda_.1} parent=109 // pred_fallthru
              _
          $region110: #{_lambda_.1} parent=105 // pred_fallthru
            _
          %3712 = vnop
        $region106: #{_lambda_.1} parent=93 // pred_fallthru
          _
      $region94: #{_lambda_.1} parent=5 // pred_fallthru
        _
      %p3713 = scmp.le.s32.totalorder 2, %s16
      // Predicated region
      $region141: #{_lambda_.1} parent=5 // pred_check
        %p3714 = pneg %p3713
      $region142: #{_lambda_.1} parent=5 // pred_check_branch
        %3716 = sbr.rel (%p3714) target = $region144
      $region143: #{_lambda_.1} parent=5 // pred_region
        %s3717 = ssub.s32 %s16, 2
        // Predicated region
        $region145: #{_lambda_.1} parent=143 // pred_check
          %p3718 = pneg %p281
        $region146: #{_lambda_.1} parent=143 // pred_check_branch
          %3720 = sbr.rel (%p3718) target = $region148
        $region147: #{_lambda_.1} parent=143 // pred_region
          %s3721 = sand.u32 %s266, 1
          %s3722 = sand.u32 %s266, 1
          %s3723 = smul.addr %s3722, 128
          %s3724 = scalar_lea.vmem [#allocation7], %s3723
        $region148: #{_lambda_.1} parent=143 // pred_fallthru
          _
      $region144: #{_lambda_.1} parent=5 // pred_fallthru
        _
    $region6: #{_lambda_.1} parent=1 // loop_footer
      %s20 = sadd.s32 1, %s16
    $region7: #{_lambda_.1} parent=1 // loop_footer_branch
      %15 = sbr.rel target = $region3
    $region8: #{_lambda_.1} parent=1 // loop_exit
      _

</llo_original>
